<compile_context>
chip_gen: v7x
topology: tpu7x:2x2x1
jax: 0.10.0
libtpu: 0.0.40
codegen_flags: <defaults>
</compile_context>

<pallas_src>
from functools import partial

import jax
import jax.numpy as jnp
from jax import lax
from jax.experimental import pallas as pl
from jax.experimental.pallas import tpu as pltpu


def _round_up(x, m):
    return ((x + m - 1) // m) * m


def _cdiv(a, b):
    return -(-a // b)


def _vmem_capacity_bytes():
    try:
        return int(pltpu.get_tpu_info().vmem_capacity_bytes)
    except Exception:
        return 64 << 20  # conservative default (v7x per-TC VMEM)


def _pick_tile(n, b):
    """Pixel-row tile height (sublane axis), multiple of 8, sized from VMEM."""
    b_lanes = _round_up(b, 128)           # lane padding inside VMEM
    cap = _vmem_capacity_bytes()
    budget = cap // 4                     # keep live buffers <= ~1/4 of VMEM
    # Projection kernel is the hungriest: double-buffered (tn, b) input + output
    # tiles => 4 * tn * b_lanes * 4 bytes live.
    tn = budget // (16 * b_lanes)
    tn = max(256, min(int(tn), 8192))
    tn = min(tn, _round_up(n, 8))
    tn = max(8, (tn // 8) * 8)
    return tn, cap


# ---------------------------------------------------------------------------
# Kernel 1 (fused statistics): per-band min, max, sum and raw Gram G = y.T @ y
# in ONE pass over the image.  Grid = (cores, tiles-per-core); the core axis is
# 'parallel' (v7x sharding), the tile axis is the reduction.  Accumulators live
# in the resident output blocks; padded-tail masking only on the last tile.
# ---------------------------------------------------------------------------
def _stats_kernel(y_ref, min_ref, max_ref, sum_ref, gram_ref, *,
                  nt, rem, oob_possible):
    c = pl.program_id(0)
    j = pl.program_id(1)
    nt_pc = pl.num_programs(1)
    t = c * nt_pc + j                      # global tile index

    @pl.when(j == 0)
    def _():
        min_ref[...] = jnp.full_like(min_ref, jnp.inf)
        max_ref[...] = jnp.full_like(max_ref, -jnp.inf)
        sum_ref[...] = jnp.zeros_like(sum_ref)
        gram_ref[...] = jnp.zeros_like(gram_ref)

    def _accum(y_val, y_min_src, y_max_src):
        min_ref[...] = jnp.minimum(min_ref[...],
                                   jnp.min(y_min_src, axis=0, keepdims=True))
        max_ref[...] = jnp.maximum(max_ref[...],
                                   jnp.max(y_max_src, axis=0, keepdims=True))
        sum_ref[...] = sum_ref[...] + jnp.sum(y_val, axis=0, keepdims=True)
        gram_ref[...] = gram_ref[...] + lax.dot_general(
            y_val, y_val, (((0,), (0,)), ((), ())),
            preferred_element_type=jnp.float32)

    if rem == 0:                           # trace-time: no ragged tail
        if oob_possible:
            @pl.when(t < nt)
            def _():
                y = y_ref[...]
                _accum(y, y, y)
        else:
            y = y_ref[...]
            _accum(y, y, y)
    else:
        @pl.when(t < nt - 1)               # full tiles: no masking at all
        def _():
            y = y_ref[...]
            _accum(y, y, y)

        @pl.when(t == nt - 1)              # last tile: mask the ragged rows only
        def _():
            y = y_ref[...]
            row = lax.broadcasted_iota(jnp.int32, y.shape, 0)
            valid = row < rem
            _accum(jnp.where(valid, y, 0.0),
                   jnp.where(valid, y, jnp.inf),
                   jnp.where(valid, y, -jnp.inf))


def band_stats(y, n, tn, nc, vmem_limit):
    _, b = y.shape
    nt = _cdiv(n, tn)
    nt_pc = _cdiv(nt, nc)
    rem = n % tn
    oob_possible = (nc * nt_pc != nt)

    def y_map(c, j):
        # Clamp out-of-range tiles (odd split) to a valid block; their
        # contribution is skipped inside the kernel.
        return (jnp.minimum(c * nt_pc + j, nt - 1), 0)

    small_spec = pl.BlockSpec((None, 1, b), lambda c, j: (c, 0, 0))
    gram_spec = pl.BlockSpec((None, b, b), lambda c, j: (c, 0, 0))

    mins, maxs, sums, gram = pl.pallas_call(
        partial(_stats_kernel, nt=nt, rem=rem, oob_possible=oob_possible),
        out_shape=(jax.ShapeDtypeStruct((nc, 1, b), jnp.float32),
                   jax.ShapeDtypeStruct((nc, 1, b), jnp.float32),
                   jax.ShapeDtypeStruct((nc, 1, b), jnp.float32),
                   jax.ShapeDtypeStruct((nc, b, b), jnp.float32)),
        grid_spec=pltpu.PrefetchScalarGridSpec(
            num_scalar_prefetch=0,
            grid=(nc, nt_pc),
            in_specs=[pl.BlockSpec((tn, b), y_map)],
            out_specs=[small_spec, small_spec, small_spec, gram_spec],
        ),
        compiler_params=pltpu.CompilerParams(
            dimension_semantics=("parallel", "arbitrary"),
            vmem_limit_bytes=vmem_limit),
    )(y)

    mins = jnp.min(mins, axis=0).reshape(b)
    maxs = jnp.max(maxs, axis=0).reshape(b)
    sums = jnp.sum(sums, axis=0).reshape(b)
    gram = jnp.sum(gram, axis=0)
    return mins, maxs, sums, gram


# ---------------------------------------------------------------------------
# Kernel 2: fused normalize -> projection -> denormalize collapsed into a single
# affine map rec = y @ M + c.  One read + one write of the image; pixel axis is
# 'parallel' so v7x can shard it across both TensorCores.
# ---------------------------------------------------------------------------
def _project_kernel(m_ref, c_ref, y_ref, o_ref):
    o_ref[...] = jnp.dot(y_ref[...], m_ref[...],
                         preferred_element_type=jnp.float32) + c_ref[...]


def project_affine(M, cvec, y, tn, vmem_limit):
    n, b = y.shape
    nt = _cdiv(n, tn)
    return pl.pallas_call(
        _project_kernel,
        out_shape=jax.ShapeDtypeStruct((n, b), jnp.float32),
        grid_spec=pltpu.PrefetchScalarGridSpec(
            num_scalar_prefetch=0,
            grid=(nt,),
            in_specs=[pl.BlockSpec((b, b), lambda j: (0, 0)),
                      pl.BlockSpec((1, b), lambda j: (0, 0)),
                      pl.BlockSpec((tn, b), lambda j: (j, 0))],
            out_specs=pl.BlockSpec((tn, b), lambda j: (j, 0)),
        ),
        compiler_params=pltpu.CompilerParams(
            dimension_semantics=("parallel",),
            vmem_limit_bytes=vmem_limit),
    )(M, cvec, y)


# ---------------------------------------------------------------------------
# Small (b, b) linear algebra: additive-noise multiple regression + HySime
# subspace, rewritten so that only the normalized correlation RR is required —
# no B@y / w@w.T / x@x.T passes over the image.
# ---------------------------------------------------------------------------
def _noise_and_subspace(RR, n_pixels, k_subspace):
    b = RR.shape[0]
    eye = jnp.eye(b, dtype=jnp.float32)

    # TODO(synk): reference does this step in float64; TPU uses float32 with a
    # Cholesky solve instead of an explicit inverse for stability.
    small = 1e-6
    c_and_lower = jax.scipy.linalg.cho_factor(RR + small * eye)
    RRi = jax.scipy.linalg.cho_solve(c_and_lower, eye)

    def beta_row(i):
        XX = RRi - jnp.outer(RRi[:, i], RRi[i, :]) / RRi[i, i]
        RRa = RR[:, i].at[i].set(0.0)
        beta = XX @ RRa
        return beta.at[i].set(0.0)

    B = jax.vmap(beta_row)(jnp.arange(b))          # per-band regression coefs

    # w = (I - B) y  and  x = B y  never materialize; only their Grams matter.
    IB = eye - B
    r_w = jnp.diag(jnp.diag(IB @ RR @ IB.T) / n_pixels)   # noise covariance (diag)
    Rx = (B @ RR @ B.T) / n_pixels                         # signal correlation
    Ry = RR / n_pixels

    _, evecs = jnp.linalg.eigh(Rx)                 # ascending eigenvalues
    E = evecs[:, ::-1]                             # descending (mimic SVD U order)
    Rn = r_w + (jnp.trace(Rx) / b / 1e5) * eye
    Py = jnp.diag(E.T @ Ry @ E)
    Pn = jnp.diag(E.T @ Rn @ E)
    cost_f = -Py + 2.0 * Pn
    ind_asc = jnp.argsort(cost_f)
    # TODO(synk): reference keeps only kf = sum(cost_f < 0) columns (data-dependent
    # width); we take all cost-sorted columns and slice — identical when kf >= k.
    e = E[:, ind_asc][:, :k_subspace]              # (b, k)
    return e, r_w


# ---------------------------------------------------------------------------
# FastHyDe.forward  (noise_type='additive', iid=True)
# ---------------------------------------------------------------------------
def fast_hyde_forward(img, k_subspace=10, normalize=True):
    rows, cols, b = img.shape
    n = rows * cols

    # Pixel-major layout: a free reshape of the [rows, cols, bands] tensor.
    y = img.reshape(n, b).astype(jnp.float32)      # (n, b)

    tn, vmem_cap = _pick_tile(n, b)
    vmem_limit = int(vmem_cap // 2)
    nt = _cdiv(n, tn)
    nc = 2 if nt >= 2 else 1                       # split the reduction for v7x's 2 TCs

    # One fused pass over the image: min / max / sums / raw Gram.
    mins, maxs, sums, gram = band_stats(y, n, tn, nc, vmem_limit)

    if normalize:
        mn = mins
        rng = maxs - mins
    else:
        mn = jnp.zeros((b,), jnp.float32)
        rng = jnp.ones((b,), jnp.float32)
    inv = 1.0 / jnp.where(rng > 0.0, rng, 1.0)     # guard constant bands (no NaN)

    # Normalized band correlation, formed algebraically from the raw statistics:
    # RR_ij = inv_i inv_j (G_ij - mn_i S_j - mn_j S_i + N mn_i mn_j)
    RR = (gram - jnp.outer(mn, sums) - jnp.outer(sums, mn)
          + float(n) * jnp.outer(mn, mn)) * jnp.outer(inv, inv)

    e, _r_w = _noise_and_subspace(RR, float(n), k_subspace)

    # TODO(synk): bm3d.bm3d per-eigen-image filtering is an external CPU library with
    # no Pallas/JAX equivalent; it is a pass-through here, so e @ (e.T @ y_norm)
    # collapses to P = e e^T and normalize -> project -> denormalize folds into a
    # single affine map rec = y @ M + c applied by one Pallas GEMM pass.
    P = e @ e.T                                    # (b, b)
    M = (inv[:, None] * P) * rng[None, :]          # diag(inv) P diag(rng)
    cvec = (mn - mn @ M).reshape(1, b)

    y_rec = project_affine(M, cvec, y, tn, vmem_limit)   # (n, b)
    return y_rec.reshape(rows, cols, b)


if __name__ == "__main__":
    key = jax.random.PRNGKey(0)
    rows, cols, bands = 16, 16, 8
    img = jax.random.uniform(key, (rows, cols, bands), dtype=jnp.float32)

    fwd = jax.jit(partial(fast_hyde_forward, k_subspace=4, normalize=True))
    out = fwd(img)
    jax.block_until_ready(out)

    assert out.shape == (rows, cols, bands)
    assert out.dtype == jnp.float32
    assert bool(jnp.all(jnp.isfinite(out)))
    print("KERNEL_OK")
</pallas_src>

<mosaic_0001>
module attributes {stable_mosaic.version = 11 : i64} {
  func.func @_stats_kernel(%arg0: i32, %arg1: i32, %arg2: memref<256x8xf32, #tpu.memory_space<vmem>>, %arg3: memref<1x1x8xf32, #tpu.memory_space<vmem>>, %arg4: memref<1x1x8xf32, #tpu.memory_space<vmem>>, %arg5: memref<1x1x8xf32, #tpu.memory_space<vmem>>, %arg6: memref<1x8x8xf32, #tpu.memory_space<vmem>>) attributes {dimension_semantics = [#tpu.dimension_semantics<parallel>, #tpu.dimension_semantics<arbitrary>], iteration_bounds = array<i64: 1, 1>, scalar_prefetch = 0 : i64, scratch_operands = 0 : i64, tpu.core_type = #tpu.core_type<tc>, window_params = [{transform_indices = @transform_0, window_bounds = array<i64: 256, 8>}, {transform_indices = @transform_1, window_bounds = array<i64: 1, 1, 8>}, {transform_indices = @transform_2, window_bounds = array<i64: 1, 1, 8>}, {transform_indices = @transform_3, window_bounds = array<i64: 1, 1, 8>}, {transform_indices = @transform_4, window_bounds = array<i64: 1, 8, 8>}]} {
    %c0_i32 = arith.constant 0 : i32
    %0 = arith.cmpi eq, %arg1, %c0_i32 : i32
    %1 = arith.extui %0 : i1 to i32
    %c0_i32_0 = arith.constant 0 : i32
    %2 = arith.cmpi ne, %1, %c0_i32_0 : i32
    scf.if %2 {
      %cst_29 = arith.constant 0x7F800000 : f32
      %35 = vector.broadcast %cst_29 : f32 to vector<1x8xf32>
      %c0_30 = arith.constant 0 : index
      %c0_31 = arith.constant 0 : index
      %c0_32 = arith.constant 0 : index
      %36 = vector.load %arg3[%c0_30, %c0_31, %c0_32] : memref<1x1x8xf32, #tpu.memory_space<vmem>>, vector<1x1x8xf32>
      %37 = vector.shape_cast %36 : vector<1x1x8xf32> to vector<1x8xf32>
      %38 = vector.shape_cast %35 : vector<1x8xf32> to vector<1x1x8xf32>
      tpu.vector_store %arg3[%c0_30, %c0_31, %c0_32], %38 {strides = array<i32>} : memref<1x1x8xf32, #tpu.memory_space<vmem>>, vector<1x1x8xf32>,
      %cst_33 = arith.constant 0xFF800000 : f32
      %39 = vector.broadcast %cst_33 : f32 to vector<1x8xf32>
      %c0_34 = arith.constant 0 : index
      %c0_35 = arith.constant 0 : index
      %c0_36 = arith.constant 0 : index
      %40 = vector.load %arg4[%c0_34, %c0_35, %c0_36] : memref<1x1x8xf32, #tpu.memory_space<vmem>>, vector<1x1x8xf32>
      %41 = vector.shape_cast %40 : vector<1x1x8xf32> to vector<1x8xf32>
      %42 = vector.shape_cast %39 : vector<1x8xf32> to vector<1x1x8xf32>
      tpu.vector_store %arg4[%c0_34, %c0_35, %c0_36], %42 {strides = array<i32>} : memref<1x1x8xf32, #tpu.memory_space<vmem>>, vector<1x1x8xf32>,
      %cst_37 = arith.constant 0.000000e+00 : f32
      %43 = vector.broadcast %cst_37 : f32 to vector<1x8xf32>
      %c0_38 = arith.constant 0 : index
      %c0_39 = arith.constant 0 : index
      %c0_40 = arith.constant 0 : index
      %44 = vector.load %arg5[%c0_38, %c0_39, %c0_40] : memref<1x1x8xf32, #tpu.memory_space<vmem>>, vector<1x1x8xf32>
      %45 = vector.shape_cast %44 : vector<1x1x8xf32> to vector<1x8xf32>
      %46 = vector.shape_cast %43 : vector<1x8xf32> to vector<1x1x8xf32>
      tpu.vector_store %arg5[%c0_38, %c0_39, %c0_40], %46 {strides = array<i32>} : memref<1x1x8xf32, #tpu.memory_space<vmem>>, vector<1x1x8xf32>,
      %cst_41 = arith.constant 0.000000e+00 : f32
      %47 = vector.broadcast %cst_41 : f32 to vector<8x8xf32>
      %c0_42 = arith.constant 0 : index
      %c0_43 = arith.constant 0 : index
      %c0_44 = arith.constant 0 : index
      %48 = vector.load %arg6[%c0_42, %c0_43, %c0_44] : memref<1x8x8xf32, #tpu.memory_space<vmem>>, vector<1x8x8xf32>
      %49 = vector.shape_cast %48 : vector<1x8x8xf32> to vector<8x8xf32>
      %50 = vector.shape_cast %47 : vector<8x8xf32> to vector<1x8x8xf32>
      tpu.vector_store %arg6[%c0_42, %c0_43, %c0_44], %50 {strides = array<i32>} : memref<1x8x8xf32, #tpu.memory_space<vmem>>, vector<1x8x8xf32>,
    } else {
    }
    %c0 = arith.constant 0 : index
    %c0_1 = arith.constant 0 : index
    %3 = vector.load %arg2[%c0, %c0_1] : memref<256x8xf32, #tpu.memory_space<vmem>>, vector<256x8xf32>
    %c0_2 = arith.constant 0 : index
    %c0_3 = arith.constant 0 : index
    %c0_4 = arith.constant 0 : index
    %4 = vector.load %arg3[%c0_2, %c0_3, %c0_4] : memref<1x1x8xf32, #tpu.memory_space<vmem>>, vector<1x1x8xf32>
    %5 = vector.shape_cast %4 : vector<1x1x8xf32> to vector<1x8xf32>
    %cst = arith.constant dense<0x7F800000> : vector<8xf32>
    %6 = vector.multi_reduction <minimumf>, %3, %cst [0] : vector<256x8xf32> to vector<8xf32>
    %7 = vector.shape_cast %6 : vector<8xf32> to vector<1x8xf32>
    %8 = arith.minimumf %5, %7 : vector<1x8xf32>
    %c0_5 = arith.constant 0 : index
    %c0_6 = arith.constant 0 : index
    %c0_7 = arith.constant 0 : index
    %9 = vector.load %arg3[%c0_5, %c0_6, %c0_7] : memref<1x1x8xf32, #tpu.memory_space<vmem>>, vector<1x1x8xf32>
    %10 = vector.shape_cast %9 : vector<1x1x8xf32> to vector<1x8xf32>
    %11 = vector.shape_cast %8 : vector<1x8xf32> to vector<1x1x8xf32>
    tpu.vector_store %arg3[%c0_5, %c0_6, %c0_7], %11 {strides = array<i32>} : memref<1x1x8xf32, #tpu.memory_space<vmem>>, vector<1x1x8xf32>,
    %c0_8 = arith.constant 0 : index
    %c0_9 = arith.constant 0 : index
    %c0_10 = arith.constant 0 : index
    %12 = vector.load %arg4[%c0_8, %c0_9, %c0_10] : memref<1x1x8xf32, #tpu.memory_space<vmem>>, vector<1x1x8xf32>
    %13 = vector.shape_cast %12 : vector<1x1x8xf32> to vector<1x8xf32>
    %cst_11 = arith.constant dense<0xFF800000> : vector<8xf32>
    %14 = vector.multi_reduction <maximumf>, %3, %cst_11 [0] : vector<256x8xf32> to vector<8xf32>
    %15 = vector.shape_cast %14 : vector<8xf32> to vector<1x8xf32>
    %16 = arith.maximumf %13, %15 : vector<1x8xf32>
    %c0_12 = arith.constant 0 : index
    %c0_13 = arith.constant 0 : index
    %c0_14 = arith.constant 0 : index
    %17 = vector.load %arg4[%c0_12, %c0_13, %c0_14] : memref<1x1x8xf32, #tpu.memory_space<vmem>>, vector<1x1x8xf32>
    %18 = vector.shape_cast %17 : vector<1x1x8xf32> to vector<1x8xf32>
    %19 = vector.shape_cast %16 : vector<1x8xf32> to vector<1x1x8xf32>
    tpu.vector_store %arg4[%c0_12, %c0_13, %c0_14], %19 {strides = array<i32>} : memref<1x1x8xf32, #tpu.memory_space<vmem>>, vector<1x1x8xf32>,
    %c0_15 = arith.constant 0 : index
    %c0_16 = arith.constant 0 : index
    %c0_17 = arith.constant 0 : index
    %20 = vector.load %arg5[%c0_15, %c0_16, %c0_17] : memref<1x1x8xf32, #tpu.memory_space<vmem>>, vector<1x1x8xf32>
    %21 = vector.shape_cast %20 : vector<1x1x8xf32> to vector<1x8xf32>
    %cst_18 = arith.constant dense<0.000000e+00> : vector<8xf32>
    %22 = vector.multi_reduction <add>, %3, %cst_18 [0] : vector<256x8xf32> to vector<8xf32>
    %23 = vector.shape_cast %22 : vector<8xf32> to vector<1x8xf32>
    %24 = arith.addf %21, %23 : vector<1x8xf32>
    %c0_19 = arith.constant 0 : index
    %c0_20 = arith.constant 0 : index
    %c0_21 = arith.constant 0 : index
    %25 = vector.load %arg5[%c0_19, %c0_20, %c0_21] : memref<1x1x8xf32, #tpu.memory_space<vmem>>, vector<1x1x8xf32>
    %26 = vector.shape_cast %25 : vector<1x1x8xf32> to vector<1x8xf32>
    %27 = vector.shape_cast %24 : vector<1x8xf32> to vector<1x1x8xf32>
    tpu.vector_store %arg5[%c0_19, %c0_20, %c0_21], %27 {strides = array<i32>} : memref<1x1x8xf32, #tpu.memory_space<vmem>>, vector<1x1x8xf32>,
    %c0_22 = arith.constant 0 : index
    %c0_23 = arith.constant 0 : index
    %c0_24 = arith.constant 0 : index
    %28 = vector.load %arg6[%c0_22, %c0_23, %c0_24] : memref<1x8x8xf32, #tpu.memory_space<vmem>>, vector<1x8x8xf32>
    %29 = vector.shape_cast %28 : vector<1x8x8xf32> to vector<8x8xf32>
    %cst_25 = arith.constant dense<0.000000e+00> : vector<8x8xf32>
    %30 = tpu.matmul %3, %3, %cst_25 {dimension_numbers = #tpu.dot_dimension_numbers<[0], [0], [1], [1], [0, 1, 1, 1], [], []>} : vector<256x8xf32>, vector<256x8xf32>, vector<8x8xf32> -> vector<8x8xf32>
    %31 = arith.addf %29, %30 : vector<8x8xf32>
    %c0_26 = arith.constant 0 : index
    %c0_27 = arith.constant 0 : index
    %c0_28 = arith.constant 0 : index
    %32 = vector.load %arg6[%c0_26, %c0_27, %c0_28] : memref<1x8x8xf32, #tpu.memory_space<vmem>>, vector<1x8x8xf32>
    %33 = vector.shape_cast %32 : vector<1x8x8xf32> to vector<8x8xf32>
    %34 = vector.shape_cast %31 : vector<8x8xf32> to vector<1x8x8xf32>
    tpu.vector_store %arg6[%c0_26, %c0_27, %c0_28], %34 {strides = array<i32>} : memref<1x8x8xf32, #tpu.memory_space<vmem>>, vector<1x8x8xf32>,
    return
  }
  func.func @transform_0(%arg0: i32, %arg1: i32) -> (i32, i32) {
    %c1_i32 = arith.constant 1 : i32
    %0 = arith.muli %arg0, %c1_i32 : i32
    %1 = arith.addi %0, %arg1 : i32
    %c0_i32 = arith.constant 0 : i32
    %2 = arith.minsi %1, %c0_i32 : i32
    %c0_i32_0 = arith.constant 0 : i32
    %c0_i32_1 = arith.constant 0 : i32
    return %2, %c0_i32_0 : i32, i32
  }
  func.func @transform_1(%arg0: i32, %arg1: i32) -> (i32, i32, i32) {
    %c0_i32 = arith.constant 0 : i32
    %c0_i32_0 = arith.constant 0 : i32
    %c0_i32_1 = arith.constant 0 : i32
    return %arg0, %c0_i32, %c0_i32_0 : i32, i32, i32
  }
  func.func @transform_2(%arg0: i32, %arg1: i32) -> (i32, i32, i32) {
    %c0_i32 = arith.constant 0 : i32
    %c0_i32_0 = arith.constant 0 : i32
    %c0_i32_1 = arith.constant 0 : i32
    return %arg0, %c0_i32, %c0_i32_0 : i32, i32, i32
  }
  func.func @transform_3(%arg0: i32, %arg1: i32) -> (i32, i32, i32) {
    %c0_i32 = arith.constant 0 : i32
    %c0_i32_0 = arith.constant 0 : i32
    %c0_i32_1 = arith.constant 0 : i32
    return %arg0, %c0_i32, %c0_i32_0 : i32, i32, i32
  }
  func.func @transform_4(%arg0: i32, %arg1: i32) -> (i32, i32, i32) {
    %c0_i32 = arith.constant 0 : i32
    %c0_i32_0 = arith.constant 0 : i32
    %c0_i32_1 = arith.constant 0 : i32
    return %arg0, %c0_i32, %c0_i32_0 : i32, i32, i32
  }
}

module attributes {stable_mosaic.version = 11 : i64} {
  func.func @_project_kernel(%arg0: i32, %arg1: memref<8x8xf32, #tpu.memory_space<vmem>>, %arg2: memref<1x8xf32, #tpu.memory_space<vmem>>, %arg3: memref<256x8xf32, #tpu.memory_space<vmem>>, %arg4: memref<256x8xf32, #tpu.memory_space<vmem>>) attributes {dimension_semantics = [#tpu.dimension_semantics<parallel>], iteration_bounds = array<i64: 1>, scalar_prefetch = 0 : i64, scratch_operands = 0 : i64, tpu.core_type = #tpu.core_type<tc>, window_params = [{pipeline_mode = #tpu.pipeline_mode<synchronous>, transform_indices = @transform_0, window_bounds = array<i64: 8, 8>}, {pipeline_mode = #tpu.pipeline_mode<synchronous>, transform_indices = @transform_1, window_bounds = array<i64: 1, 8>}, {transform_indices = @transform_2, window_bounds = array<i64: 256, 8>}, {transform_indices = @transform_3, window_bounds = array<i64: 256, 8>}]} {
    %c0 = arith.constant 0 : index
    %c0_0 = arith.constant 0 : index
    %0 = vector.load %arg3[%c0, %c0_0] : memref<256x8xf32, #tpu.memory_space<vmem>>, vector<256x8xf32>
    %c0_1 = arith.constant 0 : index
    %c0_2 = arith.constant 0 : index
    %1 = vector.load %arg1[%c0_1, %c0_2] : memref<8x8xf32, #tpu.memory_space<vmem>>, vector<8x8xf32>
    %cst = arith.constant dense<0.000000e+00> : vector<256x8xf32>
    %2 = tpu.matmul %0, %1, %cst {dimension_numbers = #tpu.dot_dimension_numbers<[1], [0], [0], [1], [0, 0, 1, 1], [], []>} : vector<256x8xf32>, vector<8x8xf32>, vector<256x8xf32> -> vector<256x8xf32>
    %c0_3 = arith.constant 0 : index
    %c0_4 = arith.constant 0 : index
    %3 = vector.load %arg2[%c0_3, %c0_4] : memref<1x8xf32, #tpu.memory_space<vmem>>, vector<1x8xf32>
    %4 = vector.broadcast %3 : vector<1x8xf32> to vector<256x8xf32>
    %5 = arith.addf %2, %4 : vector<256x8xf32>
    %c0_5 = arith.constant 0 : index
    %c0_6 = arith.constant 0 : index
    %6 = vector.load %arg4[%c0_5, %c0_6] : memref<256x8xf32, #tpu.memory_space<vmem>>, vector<256x8xf32>
    tpu.vector_store %arg4[%c0_5, %c0_6], %5 {strides = array<i32>} : memref<256x8xf32, #tpu.memory_space<vmem>>, vector<256x8xf32>,
    return
  }
  func.func @transform_0(%arg0: i32) -> (i32, i32) {
    %c0_i32 = arith.constant 0 : i32
    %c0_i32_0 = arith.constant 0 : i32
    %c0_i32_1 = arith.constant 0 : i32
    return %c0_i32, %c0_i32_0 : i32, i32
  }
  func.func @transform_1(%arg0: i32) -> (i32, i32) {
    %c0_i32 = arith.constant 0 : i32
    %c0_i32_0 = arith.constant 0 : i32
    %c0_i32_1 = arith.constant 0 : i32
    return %c0_i32, %c0_i32_0 : i32, i32
  }
  func.func @transform_2(%arg0: i32) -> (i32, i32) {
    %c0_i32 = arith.constant 0 : i32
    %c0_i32_0 = arith.constant 0 : i32
    return %arg0, %c0_i32 : i32, i32
  }
  func.func @transform_3(%arg0: i32) -> (i32, i32) {
    %c0_i32 = arith.constant 0 : i32
    %c0_i32_0 = arith.constant 0 : i32
    return %arg0, %c0_i32 : i32, i32
  }
}

</mosaic_0001>

<llo_original>
// kernel: custom-call.8
$region0: #{custom-call.8}
  %s0 = inlined_call_operand.vmem [shape: f32[8,8], index: 0, kind: input, shape index: {}]
  %s1 = inlined_call_operand.vmem [shape: f32[8,8], index: 1, kind: output, shape index: {}]
  $region1: #{custom-call.8} parent=0
    #allocation0 [shape = 'u8[4096]{0}', space=vmem, size = 0x1000, scoped, tag = 'operand span for operand 0']
    #allocation1 [shape = 'u8[4096]{0}', space=vmem, size = 0x1000, scoped, tag = 'operand span for operand 1']
    // Predicated region
    $region2: #{custom-call.8} parent=1 // pred_check
      _
    $region3: #{custom-call.8} parent=1 // pred_check_branch
      %3 = sbr.rel (0) target = $region5
    $region4: #{custom-call.8} parent=1 // pred_region
      // Predicated region
      $region6: #{custom-call.8} parent=4 // pred_check
        _
      $region7: #{custom-call.8} parent=4 // pred_check_branch
        %5 = sbr.rel (0) target = $region9
      $region8: #{custom-call.8} parent=4 // pred_region
        // Predicated region
        $region21: #{custom-call.8} parent=8 // pred_check
          _
        $region22: #{custom-call.8} parent=8 // pred_check_branch
          %20 = sbr.rel (0) target = $region24
        $region23: #{custom-call.8} parent=8 // pred_region
          loop: start=0, step=1, limit=1
          $region25: #{custom-call.8} parent=23 // loop_pre_header
            _
          $region26: #{custom-call.8} parent=23 // loop_header
            %s22 = sphi 0, %s26
            %p23 = scmp.ge.s32.totalorder %s22, 1
            %s27 = sphi %s0, %s0
            %s28 = sphi [#allocation0], [#allocation0]
          $region27: #{custom-call.8} parent=23 // loop_header_branch
            %25 = sbr.rel (%p23) target = $region31
          $region28: #{custom-call.8} parent=23 // loop_body
            %v29 = vld [vmem:[%s27] sm:$0xff]
            %30 = vst [vmem:[%s28] sm:$0xff] %v29
          $region29: #{custom-call.8} parent=23 // loop_footer
            %s26 = sadd.s32 1, %s22
          $region30: #{custom-call.8} parent=23 // loop_footer_branch
            %21 = sbr.rel target = $region26
          $region31: #{custom-call.8} parent=23 // loop_exit
            _
        $region24: #{custom-call.8} parent=8 // pred_fallthru
          _
        // Predicated region
        $region32: #{custom-call.8} parent=8 // pred_check
          _
        $region33: #{custom-call.8} parent=8 // pred_check_branch
          %32 = sbr.rel target = $region35
        $region34: #{custom-call.8} parent=8 // pred_region
          _
        $region35: #{custom-call.8} parent=8 // pred_fallthru
          _
      $region9: #{custom-call.8} parent=4 // pred_fallthru
        _
      // Predicated region
      $region10: #{custom-call.8} parent=4 // pred_check
        _
      $region11: #{custom-call.8} parent=4 // pred_check_branch
        %7 = sbr.rel target = $region13
      $region12: #{custom-call.8} parent=4 // pred_region
        loop: start=0, step=1, limit=1
        $region14: #{custom-call.8} parent=12 // loop_pre_header
          _
        $region15: #{custom-call.8} parent=12 // loop_header
          %s10 = sphi 0, %s14
          %p11 = scmp.ge.s32.totalorder %s10, 1
          %s15 = sphi %s0, %s0
          %s16 = sphi [#allocation0], [#allocation0]
        $region16: #{custom-call.8} parent=12 // loop_header_branch
          %13 = sbr.rel (%p11) target = $region20
        $region17: #{custom-call.8} parent=12 // loop_body
          %v17 = vld [vmem:[%s15] sm:$0xff]
          %18 = vst [vmem:[%s16] sm:$0xff] %v17
        $region18: #{custom-call.8} parent=12 // loop_footer
          %s14 = sadd.s32 1, %s10
        $region19: #{custom-call.8} parent=12 // loop_footer_branch
          %9 = sbr.rel target = $region15
        $region20: #{custom-call.8} parent=12 // loop_exit
          _
      $region13: #{custom-call.8} parent=4 // pred_fallthru
        _
    $region5: #{custom-call.8} parent=1 // pred_fallthru
      _
    %33 = vnop
    %34 = vst [vmem:[#allocation1] sm:$0xff] 0.0
    %vm35 = vcmask 7168
    %v36 = vld [vmem:[#allocation1] ss:$0 sm:$0xff]
    %v37 = vld [vmem:[#allocation0] ss:$0 sm:$0xff]
    %v38 = vmul.f32 %v36, %v36
    %39 = vadd.xlane.f32.xlu0 %v38
    %v40 = vpop.xlane.xlu0 %39
    %v41 = vsub.f32 %v37, %v40
    %v42 = vrsqrt.pop %v41
    %v43 = vld [vmem:[#allocation0] sm:$0xff]
    %v44 = vld [vmem:[#allocation1] sm:$0xff]
    %v45 = vmul.f32 %v44, %v36
    %46 = vadd.xlane.f32.xlu0 %v45
    %v47 = vpop.xlane.xlu0 %46
    %v48 = vsub.f32 %v43, %v47
    %v49 = vmul.f32 %v48, %v42
    %v50 = vsel %vm35, %v49, 0.0
    %v51 = vadd.f32 %v44, %v50
    %52 = vst [vmem:[#allocation1] sm:$0xff] %v51
    %vm53 = vcmask 15368
    %s54 = scalar_lea.vmem [#allocation1], 1
    %v55 = vld [vmem:[%s54] ss:$0 sm:$0xff]
    %s56 = scalar_lea.vmem [#allocation0], 1
    %v57 = vld [vmem:[%s56] ss:$0 sm:$0xff]
    %v58 = vmul.f32 %v55, %v55
    %59 = vadd.xlane.f32.xlu0 %v58
    %v60 = vpop.xlane.xlu0 %59
    %v61 = vsub.f32 %v57, %v60
    %v62 = vrsqrt.pop %v61
    %v63 = vld [vmem:[#allocation0] sm:$0xff]
    %v64 = vld [vmem:[#allocation1] sm:$0xff]
    %v65 = vmul.f32 %v64, %v55
    %66 = vadd.xlane.f32.xlu0 %v65
    %v67 = vpop.xlane.xlu0 %66
    %v68 = vsub.f32 %v63, %v67
    %v69 = vmul.f32 %v68, %v62
    %vm70 = vcmask 1047553
    %vm71 = vmand %vm53, %vm70
    %v72 = vsel %vm71, %v69, 0.0
    %v73 = vadd.f32 %v64, %v72
    %74 = vst [vmem:[#allocation1] sm:$0xff] %v73
    %vm75 = vcmask 23568
    %s76 = scalar_lea.vmem [#allocation1], 2
    %v77 = vld [vmem:[%s76] ss:$0 sm:$0xff]
    %s78 = scalar_lea.vmem [#allocation0], 2
    %v79 = vld [vmem:[%s78] ss:$0 sm:$0xff]
    %v80 = vmul.f32 %v77, %v77
    %81 = vadd.xlane.f32.xlu0 %v80
    %v82 = vpop.xlane.xlu0 %81
    %v83 = vsub.f32 %v79, %v82
    %v84 = vrsqrt.pop %v83
    %v85 = vld [vmem:[#allocation0] sm:$0xff]
    %v86 = vld [vmem:[#allocation1] sm:$0xff]
    %v87 = vmul.f32 %v86, %v77
    %88 = vadd.xlane.f32.xlu0 %v87
    %v89 = vpop.xlane.xlu0 %88
    %v90 = vsub.f32 %v85, %v89
    %v91 = vmul.f32 %v90, %v84
    %vm92 = vcmask 1047554
    %vm93 = vmand %vm75, %vm92
    %v94 = vsel %vm93, %v91, 0.0
    %v95 = vadd.f32 %v86, %v94
    %96 = vst [vmem:[#allocation1] sm:$0xff] %v95
    %vm97 = vcmask 31768
    %s98 = scalar_lea.vmem [#allocation1], 3
    %v99 = vld [vmem:[%s98] ss:$0 sm:$0xff]
    %s100 = scalar_lea.vmem [#allocation0], 3
    %v101 = vld [vmem:[%s100] ss:$0 sm:$0xff]
    %v102 = vmul.f32 %v99, %v99
    %103 = vadd.xlane.f32.xlu0 %v102
    %v104 = vpop.xlane.xlu0 %103
    %v105 = vsub.f32 %v101, %v104
    %v106 = vrsqrt.pop %v105
    %v107 = vld [vmem:[#allocation0] sm:$0xff]
    %v108 = vld [vmem:[#allocation1] sm:$0xff]
    %v109 = vmul.f32 %v108, %v99
    %110 = vadd.xlane.f32.xlu0 %v109
    %v111 = vpop.xlane.xlu0 %110
    %v112 = vsub.f32 %v107, %v111
    %v113 = vmul.f32 %v112, %v106
    %vm114 = vcmask 1047555
    %vm115 = vmand %vm97, %vm114
    %v116 = vsel %vm115, %v113, 0.0
    %v117 = vadd.f32 %v108, %v116
    %118 = vst [vmem:[#allocation1] sm:$0xff] %v117
    %vm119 = vcmask 39968
    %s120 = scalar_lea.vmem [#allocation1], 4
    %v121 = vld [vmem:[%s120] ss:$0 sm:$0xff]
    %s122 = scalar_lea.vmem [#allocation0], 4
    %v123 = vld [vmem:[%s122] ss:$0 sm:$0xff]
    %v124 = vmul.f32 %v121, %v121
    %125 = vadd.xlane.f32.xlu0 %v124
    %v126 = vpop.xlane.xlu0 %125
    %v127 = vsub.f32 %v123, %v126
    %v128 = vrsqrt.pop %v127
    %v129 = vld [vmem:[#allocation0] sm:$0xff]
    %v130 = vld [vmem:[#allocation1] sm:$0xff]
    %v131 = vmul.f32 %v130, %v121
    %132 = vadd.xlane.f32.xlu0 %v131
    %v133 = vpop.xlane.xlu0 %132
    %v134 = vsub.f32 %v129, %v133
    %v135 = vmul.f32 %v134, %v128
    %vm136 = vcmask 1047556
    %vm137 = vmand %vm119, %vm136
    %v138 = vsel %vm137, %v135, 0.0
    %v139 = vadd.f32 %v130, %v138
    %140 = vst [vmem:[#allocation1] sm:$0xff] %v139
    %vm141 = vcmask 48168
    %s142 = scalar_lea.vmem [#allocation1], 5
    %v143 = vld [vmem:[%s142] ss:$0 sm:$0xff]
    %s144 = scalar_lea.vmem [#allocation0], 5
    %v145 = vld [vmem:[%s144] ss:$0 sm:$0xff]
    %v146 = vmul.f32 %v143, %v143
    %147 = vadd.xlane.f32.xlu0 %v146
    %v148 = vpop.xlane.xlu0 %147
    %v149 = vsub.f32 %v145, %v148
    %v150 = vrsqrt.pop %v149
    %v151 = vld [vmem:[#allocation0] sm:$0xff]
    %v152 = vld [vmem:[#allocation1] sm:$0xff]
    %v153 = vmul.f32 %v152, %v143
    %154 = vadd.xlane.f32.xlu0 %v153
    %v155 = vpop.xlane.xlu0 %154
    %v156 = vsub.f32 %v151, %v155
    %v157 = vmul.f32 %v156, %v150
    %vm158 = vcmask 1047557
    %vm159 = vmand %vm141, %vm158
    %v160 = vsel %vm159, %v157, 0.0
    %v161 = vadd.f32 %v152, %v160
    %162 = vst [vmem:[#allocation1] sm:$0xff] %v161
    %vm163 = vcmask 56368
    %s164 = scalar_lea.vmem [#allocation1], 6
    %v165 = vld [vmem:[%s164] ss:$0 sm:$0xff]
    %s166 = scalar_lea.vmem [#allocation0], 6
    %v167 = vld [vmem:[%s166] ss:$0 sm:$0xff]
    %v168 = vmul.f32 %v165, %v165
    %169 = vadd.xlane.f32.xlu0 %v168
    %v170 = vpop.xlane.xlu0 %169
    %v171 = vsub.f32 %v167, %v170
    %v172 = vrsqrt.pop %v171
    %v173 = vld [vmem:[#allocation0] sm:$0xff]
    %v174 = vld [vmem:[#allocation1] sm:$0xff]
    %v175 = vmul.f32 %v174, %v165
    %176 = vadd.xlane.f32.xlu0 %v175
    %v177 = vpop.xlane.xlu0 %176
    %v178 = vsub.f32 %v173, %v177
    %v179 = vmul.f32 %v178, %v172
    %vm180 = vcmask 1047558
    %vm181 = vmand %vm163, %vm180
    %v182 = vsel %vm181, %v179, 0.0
    %v183 = vadd.f32 %v174, %v182
    %184 = vst [vmem:[#allocation1] sm:$0xff] %v183
    %vm185 = vcmask 64568
    %s186 = scalar_lea.vmem [#allocation1], 7
    %v187 = vld [vmem:[%s186] ss:$0 sm:$0xff]
    %s188 = scalar_lea.vmem [#allocation0], 7
    %v189 = vld [vmem:[%s188] ss:$0 sm:$0xff]
    %v190 = vmul.f32 %v187, %v187
    %191 = vadd.xlane.f32.xlu0 %v190
    %v192 = vpop.xlane.xlu0 %191
    %v193 = vsub.f32 %v189, %v192
    %v194 = vrsqrt.pop %v193
    %v195 = vld [vmem:[#allocation0] sm:$0xff]
    %v196 = vld [vmem:[#allocation1] sm:$0xff]
    %v197 = vmul.f32 %v196, %v187
    %198 = vadd.xlane.f32.xlu0 %v197
    %v199 = vpop.xlane.xlu0 %198
    %v200 = vsub.f32 %v195, %v199
    %v201 = vmul.f32 %v200, %v194
    %vm202 = vcmask 1047559
    %vm203 = vmand %vm185, %vm202
    %v204 = vsel %vm203, %v201, 0.0
    %v205 = vadd.f32 %v196, %v204
    %206 = vst [vmem:[#allocation1] sm:$0xff] %v205
    // Predicated region
    $region36: #{custom-call.8} parent=1 // pred_check
      _
    $region37: #{custom-call.8} parent=1 // pred_check_branch
      %208 = sbr.rel (0) target = $region39
    $region38: #{custom-call.8} parent=1 // pred_region
      // Predicated region
      $region40: #{custom-call.8} parent=38 // pred_check
        _
      $region41: #{custom-call.8} parent=38 // pred_check_branch
        %210 = sbr.rel (0) target = $region43
      $region42: #{custom-call.8} parent=38 // pred_region
        // Predicated region
        $region55: #{custom-call.8} parent=42 // pred_check
          _
        $region56: #{custom-call.8} parent=42 // pred_check_branch
          %225 = sbr.rel (0) target = $region58
        $region57: #{custom-call.8} parent=42 // pred_region
          loop: start=0, step=1, limit=1
          $region59: #{custom-call.8} parent=57 // loop_pre_header
            _
          $region60: #{custom-call.8} parent=57 // loop_header
            %s227 = sphi 0, %s231
            %p228 = scmp.ge.s32.totalorder %s227, 1
            %s232 = sphi [#allocation1], [#allocation1]
            %s233 = sphi %s1, %s1
          $region61: #{custom-call.8} parent=57 // loop_header_branch
            %230 = sbr.rel (%p228) target = $region65
          $region62: #{custom-call.8} parent=57 // loop_body
            %v234 = vld [vmem:[%s232] sm:$0xff]
            %235 = vst [vmem:[%s233] sm:$0xff] %v234
          $region63: #{custom-call.8} parent=57 // loop_footer
            %s231 = sadd.s32 1, %s227
          $region64: #{custom-call.8} parent=57 // loop_footer_branch
            %226 = sbr.rel target = $region60
          $region65: #{custom-call.8} parent=57 // loop_exit
            _
        $region58: #{custom-call.8} parent=42 // pred_fallthru
          _
        // Predicated region
        $region66: #{custom-call.8} parent=42 // pred_check
          _
        $region67: #{custom-call.8} parent=42 // pred_check_branch
          %237 = sbr.rel target = $region69
        $region68: #{custom-call.8} parent=42 // pred_region
          _
        $region69: #{custom-call.8} parent=42 // pred_fallthru
          _
      $region43: #{custom-call.8} parent=38 // pred_fallthru
        _
      // Predicated region
      $region44: #{custom-call.8} parent=38 // pred_check
        _
      $region45: #{custom-call.8} parent=38 // pred_check_branch
        %212 = sbr.rel target = $region47
      $region46: #{custom-call.8} parent=38 // pred_region
        loop: start=0, step=1, limit=1
        $region48: #{custom-call.8} parent=46 // loop_pre_header
          _
        $region49: #{custom-call.8} parent=46 // loop_header
          %s215 = sphi 0, %s219
          %p216 = scmp.ge.s32.totalorder %s215, 1
          %s220 = sphi [#allocation1], [#allocation1]
          %s221 = sphi %s1, %s1
        $region50: #{custom-call.8} parent=46 // loop_header_branch
          %218 = sbr.rel (%p216) target = $region54
        $region51: #{custom-call.8} parent=46 // loop_body
          %v222 = vld [vmem:[%s220] sm:$0xff]
          %223 = vst [vmem:[%s221] sm:$0xff] %v222
        $region52: #{custom-call.8} parent=46 // loop_footer
          %s219 = sadd.s32 1, %s215
        $region53: #{custom-call.8} parent=46 // loop_footer_branch
          %214 = sbr.rel target = $region49
        $region54: #{custom-call.8} parent=46 // loop_exit
          _
      $region47: #{custom-call.8} parent=38 // pred_fallthru
        _
    $region39: #{custom-call.8} parent=1 // pred_fallthru
      _
    %238 = vnop

// kernel: custom-call.9
$region0: #{custom-call.9}
  %s0 = inlined_call_operand.vmem [shape: f32[1,8,8], index: 0, kind: input, shape index: {}]
  %s1 = inlined_call_operand.vmem [shape: f32[1,8,8], index: 1, kind: output, shape index: {}]
  $region1: #{custom-call.9} parent=0
    #allocation0 [shape = 'u8[4096]{0}', space=vmem, size = 0x1000, scoped, tag = 'operand span for operand 0']
    #allocation1 [shape = 'u8[4096]{0}', space=vmem, size = 0x1000, scoped, tag = 'operand span for operand 1']
    #allocation2 [shape = 'f32[8,8]{1,0}', space=vmem, size = 0x1000, scoped, tag = 'rescaled input a']
    // Predicated region
    $region2: #{custom-call.9} parent=1 // pred_check
      _
    $region3: #{custom-call.9} parent=1 // pred_check_branch
      %3 = sbr.rel (0) target = $region5
    $region4: #{custom-call.9} parent=1 // pred_region
      // Predicated region
      $region6: #{custom-call.9} parent=4 // pred_check
        _
      $region7: #{custom-call.9} parent=4 // pred_check_branch
        %5 = sbr.rel (0) target = $region9
      $region8: #{custom-call.9} parent=4 // pred_region
        // Predicated region
        $region21: #{custom-call.9} parent=8 // pred_check
          _
        $region22: #{custom-call.9} parent=8 // pred_check_branch
          %20 = sbr.rel (0) target = $region24
        $region23: #{custom-call.9} parent=8 // pred_region
          loop: start=0, step=1, limit=1
          $region25: #{custom-call.9} parent=23 // loop_pre_header
            _
          $region26: #{custom-call.9} parent=23 // loop_header
            %s22 = sphi 0, %s26
            %p23 = scmp.ge.s32.totalorder %s22, 1
            %s27 = sphi %s0, %s0
            %s28 = sphi [#allocation0], [#allocation0]
          $region27: #{custom-call.9} parent=23 // loop_header_branch
            %25 = sbr.rel (%p23) target = $region31
          $region28: #{custom-call.9} parent=23 // loop_body
            %v29 = vld [vmem:[%s27] sm:$0xff]
            %30 = vst [vmem:[%s28] sm:$0xff] %v29
          $region29: #{custom-call.9} parent=23 // loop_footer
            %s26 = sadd.s32 1, %s22
          $region30: #{custom-call.9} parent=23 // loop_footer_branch
            %21 = sbr.rel target = $region26
          $region31: #{custom-call.9} parent=23 // loop_exit
            _
        $region24: #{custom-call.9} parent=8 // pred_fallthru
          _
        // Predicated region
        $region32: #{custom-call.9} parent=8 // pred_check
          _
        $region33: #{custom-call.9} parent=8 // pred_check_branch
          %32 = sbr.rel target = $region35
        $region34: #{custom-call.9} parent=8 // pred_region
          _
        $region35: #{custom-call.9} parent=8 // pred_fallthru
          _
      $region9: #{custom-call.9} parent=4 // pred_fallthru
        _
      // Predicated region
      $region10: #{custom-call.9} parent=4 // pred_check
        _
      $region11: #{custom-call.9} parent=4 // pred_check_branch
        %7 = sbr.rel target = $region13
      $region12: #{custom-call.9} parent=4 // pred_region
        loop: start=0, step=1, limit=1
        $region14: #{custom-call.9} parent=12 // loop_pre_header
          _
        $region15: #{custom-call.9} parent=12 // loop_header
          %s10 = sphi 0, %s14
          %p11 = scmp.ge.s32.totalorder %s10, 1
          %s15 = sphi %s0, %s0
          %s16 = sphi [#allocation0], [#allocation0]
        $region16: #{custom-call.9} parent=12 // loop_header_branch
          %13 = sbr.rel (%p11) target = $region20
        $region17: #{custom-call.9} parent=12 // loop_body
          %v17 = vld [vmem:[%s15] sm:$0xff]
          %18 = vst [vmem:[%s16] sm:$0xff] %v17
        $region18: #{custom-call.9} parent=12 // loop_footer
          %s14 = sadd.s32 1, %s10
        $region19: #{custom-call.9} parent=12 // loop_footer_branch
          %9 = sbr.rel target = $region15
        $region20: #{custom-call.9} parent=12 // loop_exit
          _
      $region13: #{custom-call.9} parent=4 // pred_fallthru
        _
    $region5: #{custom-call.9} parent=1 // pred_fallthru
      _
    %33 = vnop
    %v34 = vlaneseq
    %v35 = vand.u32 %v34, 127
    %vm36 = vcmp.lt.s32.totalorder %v35, 8
    %v37 = vlaneseq
    %v38 = vshrl.u32 %v37, 7
    %vm40 = vcmp.eq.s32.totalorder %v38, %v35
    %v41 = vld [vmem:[#allocation0] sm:$0xff]
    %v42 = vsel %vm40, %v41, 0.0
    %43 = vadd.xlane.f32.xlu0 %v42
    %v44 = vpop.xlane.xlu0 %43
    %vm45 = vcmp.le.s32.totalorder %v38, %v35
    %vm46 = vmand %vm45, %vm36
    %v47 = vsel %vm46, %v41, 0.0
    %v48 = vrcp.pop %v44
    %v49 = vmul.f32 %v47, %v48
    %50 = vst [vmem:[#allocation2] sm:$0xff] %v49
    %v51 = vlaneseq
    %v52 = vand.u32 %v51, 127
    %v53 = vlaneseq
    %v54 = vshrl.u32 %v53, 7
    %vm56 = vcmp.eq.s32.totalorder %v52, %v54
    %v57 = vlaneseq
    %v58 = vand.u32 %v57, 127
    %vm59 = vcmp.eq.s32.totalorder %v58, 7
    %v60 = vsel %vm59, 1.0, -1.0
    %v61 = vsel %vm56, %v60, 0.0
    %s62 = scalar_lea.vmem [#allocation2], 6
    %v63 = vld [vmem:[%s62] ss:$0 sm:$0xff]
    %v64 = vxor.u32 %v63, 2147483648
    %v65 = vlaneseq
    %v66 = vand.u32 %v65, 127
    %vm67 = vcmp.eq.s32.totalorder %v66, 6
    %v68 = vmul.f32 %v64, %v61
    %69 = vadd.xlane.f32.xlu0 %v68
    %v70 = vpop.xlane.xlu0 %69
    %v71 = vsel %vm67, %v70, %v61
    %s72 = scalar_lea.vmem [#allocation2], 5
    %v73 = vld [vmem:[%s72] ss:$0 sm:$0xff]
    %v74 = vxor.u32 %v73, 2147483648
    %v75 = vlaneseq
    %v76 = vand.u32 %v75, 127
    %vm77 = vcmp.eq.s32.totalorder %v76, 5
    %v78 = vmul.f32 %v74, %v71
    %79 = vadd.xlane.f32.xlu0 %v78
    %v80 = vpop.xlane.xlu0 %79
    %v81 = vsel %vm77, %v80, %v71
    %s82 = scalar_lea.vmem [#allocation2], 4
    %v83 = vld [vmem:[%s82] ss:$0 sm:$0xff]
    %v84 = vxor.u32 %v83, 2147483648
    %v85 = vlaneseq
    %v86 = vand.u32 %v85, 127
    %vm87 = vcmp.eq.s32.totalorder %v86, 4
    %v88 = vmul.f32 %v84, %v81
    %89 = vadd.xlane.f32.xlu0 %v88
    %v90 = vpop.xlane.xlu0 %89
    %v91 = vsel %vm87, %v90, %v81
    %s92 = scalar_lea.vmem [#allocation2], 3
    %v93 = vld [vmem:[%s92] ss:$0 sm:$0xff]
    %v94 = vxor.u32 %v93, 2147483648
    %v95 = vlaneseq
    %v96 = vand.u32 %v95, 127
    %vm97 = vcmp.eq.s32.totalorder %v96, 3
    %v98 = vmul.f32 %v94, %v91
    %99 = vadd.xlane.f32.xlu0 %v98
    %v100 = vpop.xlane.xlu0 %99
    %v101 = vsel %vm97, %v100, %v91
    %s102 = scalar_lea.vmem [#allocation2], 2
    %v103 = vld [vmem:[%s102] ss:$0 sm:$0xff]
    %v104 = vxor.u32 %v103, 2147483648
    %v105 = vlaneseq
    %v106 = vand.u32 %v105, 127
    %vm107 = vcmp.eq.s32.totalorder %v106, 2
    %v108 = vmul.f32 %v104, %v101
    %109 = vadd.xlane.f32.xlu0 %v108
    %v110 = vpop.xlane.xlu0 %109
    %v111 = vsel %vm107, %v110, %v101
    %s112 = scalar_lea.vmem [#allocation2], 1
    %v113 = vld [vmem:[%s112] ss:$0 sm:$0xff]
    %v114 = vxor.u32 %v113, 2147483648
    %v115 = vlaneseq
    %v116 = vand.u32 %v115, 127
    %vm117 = vcmp.eq.s32.totalorder %v116, 1
    %v118 = vmul.f32 %v114, %v111
    %119 = vadd.xlane.f32.xlu0 %v118
    %v120 = vpop.xlane.xlu0 %119
    %v121 = vsel %vm117, %v120, %v111
    %v122 = vld [vmem:[#allocation2] ss:$0 sm:$0xff]
    %v123 = vxor.u32 %v122, 2147483648
    %v124 = vlaneseq
    %v125 = vand.u32 %v124, 127
    %vm126 = vcmp.eq.s32.totalorder %v125, 0
    %v127 = vmul.f32 %v123, %v121
    %128 = vadd.xlane.f32.xlu0 %v127
    %v129 = vpop.xlane.xlu0 %128
    %v130 = vsel %vm126, %v129, %v121
    %v131 = vrcp.pop %v44
    %v132 = vmul.f32 %v130, %v131
    %vm133 = vweird.f32 %v44
    %v134 = vsel %vm133, %v130, %v132
    %135 = vst [vmem:[#allocation1] sm:$0xff] %v134
    // Predicated region
    $region36: #{custom-call.9} parent=1 // pred_check
      _
    $region37: #{custom-call.9} parent=1 // pred_check_branch
      %137 = sbr.rel (0) target = $region39
    $region38: #{custom-call.9} parent=1 // pred_region
      // Predicated region
      $region40: #{custom-call.9} parent=38 // pred_check
        _
      $region41: #{custom-call.9} parent=38 // pred_check_branch
        %139 = sbr.rel (0) target = $region43
      $region42: #{custom-call.9} parent=38 // pred_region
        // Predicated region
        $region55: #{custom-call.9} parent=42 // pred_check
          _
        $region56: #{custom-call.9} parent=42 // pred_check_branch
          %154 = sbr.rel (0) target = $region58
        $region57: #{custom-call.9} parent=42 // pred_region
          loop: start=0, step=1, limit=1
          $region59: #{custom-call.9} parent=57 // loop_pre_header
            _
          $region60: #{custom-call.9} parent=57 // loop_header
            %s156 = sphi 0, %s160
            %p157 = scmp.ge.s32.totalorder %s156, 1
            %s161 = sphi [#allocation1], [#allocation1]
            %s162 = sphi %s1, %s1
          $region61: #{custom-call.9} parent=57 // loop_header_branch
            %159 = sbr.rel (%p157) target = $region65
          $region62: #{custom-call.9} parent=57 // loop_body
            %v163 = vld [vmem:[%s161] sm:$0xff]
            %164 = vst [vmem:[%s162] sm:$0xff] %v163
          $region63: #{custom-call.9} parent=57 // loop_footer
            %s160 = sadd.s32 1, %s156
          $region64: #{custom-call.9} parent=57 // loop_footer_branch
            %155 = sbr.rel target = $region60
          $region65: #{custom-call.9} parent=57 // loop_exit
            _
        $region58: #{custom-call.9} parent=42 // pred_fallthru
          _
        // Predicated region
        $region66: #{custom-call.9} parent=42 // pred_check
          _
        $region67: #{custom-call.9} parent=42 // pred_check_branch
          %166 = sbr.rel target = $region69
        $region68: #{custom-call.9} parent=42 // pred_region
          _
        $region69: #{custom-call.9} parent=42 // pred_fallthru
          _
      $region43: #{custom-call.9} parent=38 // pred_fallthru
        _
      // Predicated region
      $region44: #{custom-call.9} parent=38 // pred_check
        _
      $region45: #{custom-call.9} parent=38 // pred_check_branch
        %141 = sbr.rel target = $region47
      $region46: #{custom-call.9} parent=38 // pred_region
        loop: start=0, step=1, limit=1
        $region48: #{custom-call.9} parent=46 // loop_pre_header
          _
        $region49: #{custom-call.9} parent=46 // loop_header
          %s144 = sphi 0, %s148
          %p145 = scmp.ge.s32.totalorder %s144, 1
          %s149 = sphi [#allocation1], [#allocation1]
          %s150 = sphi %s1, %s1
        $region50: #{custom-call.9} parent=46 // loop_header_branch
          %147 = sbr.rel (%p145) target = $region54
        $region51: #{custom-call.9} parent=46 // loop_body
          %v151 = vld [vmem:[%s149] sm:$0xff]
          %152 = vst [vmem:[%s150] sm:$0xff] %v151
        $region52: #{custom-call.9} parent=46 // loop_footer
          %s148 = sadd.s32 1, %s144
        $region53: #{custom-call.9} parent=46 // loop_footer_branch
          %143 = sbr.rel target = $region49
        $region54: #{custom-call.9} parent=46 // loop_exit
          _
      $region47: #{custom-call.9} parent=38 // pred_fallthru
        _
    $region39: #{custom-call.9} parent=1 // pred_fallthru
      _
    %167 = vnop

// kernel: custom-call.11
$region0: #{custom-call.11}
  %s0 = inlined_call_operand.vmem [shape: f32[4,4], index: 0, kind: input, shape index: {}]
  %s1 = inlined_call_operand.vmem [shape: f32[4,4], index: 1, kind: input, shape index: {}]
  %s2 = inlined_call_operand.vmem [shape: f32[4,4], index: 2, kind: input, shape index: {}]
  %s3 = inlined_call_operand.vmem [shape: f32[4,4], index: 3, kind: input, shape index: {}]
  %s4 = inlined_call_operand.vmem [shape: f32[4], index: 4, kind: output, shape index: {0}]
  %s5 = inlined_call_operand.vmem [shape: f32[4], index: 5, kind: output, shape index: {1}]
  %s6 = inlined_call_operand.vmem [shape: f32[4,4], index: 6, kind: output, shape index: {2}]
  %s7 = inlined_call_operand.vmem [shape: f32[4,4], index: 7, kind: output, shape index: {3}]
  %s8 = inlined_call_operand.vmem [shape: f32[4,4], index: 8, kind: output, shape index: {4}]
  %s9 = inlined_call_operand.vmem [shape: f32[4,4], index: 9, kind: output, shape index: {5}]
  %10 = xla_tuple %s4, %s5, %s6, %s7, %s8, %s9
  $region1: #{custom-call.11} parent=0
    #allocation0 [shape = 'u8[4096]{0}', space=vmem, size = 0x1000, scoped, tag = 'operand span for operand 0']
    #allocation1 [shape = 'u8[2048]{0}', space=vmem, size = 0x800, scoped, tag = 'packed  for operand 0']
    #allocation2 [shape = 'u8[4096]{0}', space=vmem, size = 0x1000, scoped, tag = 'operand span for operand 1']
    #allocation3 [shape = 'u8[2048]{0}', space=vmem, size = 0x800, scoped, tag = 'packed  for operand 1']
    #allocation4 [shape = 'u8[4096]{0}', space=vmem, size = 0x1000, scoped, tag = 'operand span for operand 2']
    #allocation5 [shape = 'u8[2048]{0}', space=vmem, size = 0x800, scoped, tag = 'packed  for operand 2']
    #allocation6 [shape = 'u8[4096]{0}', space=vmem, size = 0x1000, scoped, tag = 'operand span for operand 3']
    #allocation7 [shape = 'u8[2048]{0}', space=vmem, size = 0x800, scoped, tag = 'packed  for operand 3']
    #allocation8 [shape = 'u8[4096]{0}', space=vmem, size = 0x1000, scoped, tag = 'operand span for operand 4']
    #allocation9 [shape = 'u8[512]{0}', space=vmem, size = 0x400, scoped, tag = 'packed  for operand 4']
    #allocation10 [shape = 'u8[4096]{0}', space=vmem, size = 0x1000, scoped, tag = 'operand span for operand 5']
    #allocation11 [shape = 'u8[512]{0}', space=vmem, size = 0x400, scoped, tag = 'packed  for operand 5']
    #allocation12 [shape = 'u8[4096]{0}', space=vmem, size = 0x1000, scoped, tag = 'operand span for operand 6']
    #allocation13 [shape = 'u8[2048]{0}', space=vmem, size = 0x800, scoped, tag = 'packed  for operand 6']
    #allocation14 [shape = 'u8[4096]{0}', space=vmem, size = 0x1000, scoped, tag = 'operand span for operand 7']
    #allocation15 [shape = 'u8[2048]{0}', space=vmem, size = 0x800, scoped, tag = 'packed  for operand 7']
    #allocation16 [shape = 'u8[4096]{0}', space=vmem, size = 0x1000, scoped, tag = 'operand span for operand 8']
    #allocation17 [shape = 'u8[2048]{0}', space=vmem, size = 0x800, scoped, tag = 'packed  for operand 8']
    #allocation18 [shape = 'u8[4096]{0}', space=vmem, size = 0x1000, scoped, tag = 'operand span for operand 9']
    #allocation19 [shape = 'u8[2048]{0}', space=vmem, size = 0x800, scoped, tag = 'packed  for operand 9']
    #allocation20 [shape = 'f32[4,4]{1,0}', space=vmem, size = 0x1000, scoped, tag = 'a top-left matrix']
    #allocation21 [shape = 'f32[4,4]{1,0}', space=vmem, size = 0x1000, scoped, tag = 'a top-right matrix']
    #allocation22 [shape = 'f32[4,4]{1,0}', space=vmem, size = 0x1000, scoped, tag = 'a bottom-left matrix']
    #allocation23 [shape = 'f32[4,4]{1,0}', space=vmem, size = 0x1000, scoped, tag = 'a bottom-right matrix']
    %p12 = scmp.gt.s32.totalorder 4, 0
    // Predicated region
    $region2: #{custom-call.11} parent=1 // pred_check
      %p13 = pneg %p12
    $region3: #{custom-call.11} parent=1 // pred_check_branch
      %15 = sbr.rel (%p13) target = $region5
    $region4: #{custom-call.11} parent=1 // pred_region
      %s16 = sshra.s32 4, 3
      %p17 = scmp.gt.s32.totalorder %s16, 0
      // Predicated region
      $region6: #{custom-call.11} parent=4 // pred_check
        %p18 = pneg %p17
      $region7: #{custom-call.11} parent=4 // pred_check_branch
        %20 = sbr.rel (%p18) target = $region9
      $region8: #{custom-call.11} parent=4 // pred_region
        %s21 = ssub.s32 %s16, 1
        %s22 = smul.u32 %s21, 128
        %s23 = sshra.s32 %s22, 4
        %s24 = scalar_lea.vmem %s0, %s23
        %v25 = vld [vmem:[%s0] sm:$0xff]
        // While loop
        $region10: #{custom-call.11} parent=8 // loop_pre_header
          _
        $region11: #{custom-call.11} parent=8 // loop_header
          %s26 = sphi %s0, %s48
          %s27 = sphi [#allocation1], %s49
          %v28 = vphi %v25, %v50
          %s29 = ssub.s32 %s24, 64
          %p30 = scmp.gt.s32.totalorder %s26, %s29
        $region12: #{custom-call.11} parent=8 // loop_header_branch
          %32 = sbr.rel (%p30) target = $region16
        $region13: #{custom-call.11} parent=8 // loop_body
          %33 = vst [vmem:[%s27] sm:$0xff] %v28
          %v34 = vld [vmem:[%s26 + $0x8] sm:$0xff]
          %35 = vst [vmem:[%s27 + $0x8] sm:$0xff] %v34
          %v36 = vld [vmem:[%s26 + $0x10] sm:$0xff]
          %37 = vst [vmem:[%s27 + $0x10] sm:$0xff] %v36
          %v38 = vld [vmem:[%s26 + $0x18] sm:$0xff]
          %39 = vst [vmem:[%s27 + $0x18] sm:$0xff] %v38
          %v40 = vld [vmem:[%s26 + $0x20] sm:$0xff]
          %41 = vst [vmem:[%s27 + $0x20] sm:$0xff] %v40
          %v42 = vld [vmem:[%s26 + $0x28] sm:$0xff]
          %43 = vst [vmem:[%s27 + $0x28] sm:$0xff] %v42
          %v44 = vld [vmem:[%s26 + $0x30] sm:$0xff]
          %45 = vst [vmem:[%s27 + $0x30] sm:$0xff] %v44
          %v46 = vld [vmem:[%s26 + $0x38] sm:$0xff]
          %47 = vst [vmem:[%s27 + $0x38] sm:$0xff] %v46
        $region14: #{custom-call.11} parent=8 // loop_footer
          %s48 = scalar_lea.vmem %s26, 64
          %s49 = scalar_lea.vmem %s27, 64
          %v50 = vld [vmem:[%s26 + $0x40] sm:$0xff]
        $region15: #{custom-call.11} parent=8 // loop_footer_branch
          %51 = sbr.rel target = $region11
        $region16: #{custom-call.11} parent=8 // loop_exit
          _
        // While loop
        $region17: #{custom-call.11} parent=8 // loop_pre_header
          _
        $region18: #{custom-call.11} parent=8 // loop_header
          %s52 = sphi %s26, %s60
          %s53 = sphi %s27, %s61
          %v54 = vphi %v28, %v54
          %p55 = scmp.gt.s32.totalorder %s52, %s24
        $region19: #{custom-call.11} parent=8 // loop_header_branch
          %57 = sbr.rel (%p55) target = $region23
        $region20: #{custom-call.11} parent=8 // loop_body
          %v58 = vld [vmem:[%s52] sm:$0xff]
          %59 = vst [vmem:[%s53] sm:$0xff] %v58
        $region21: #{custom-call.11} parent=8 // loop_footer
          %s60 = scalar_lea.vmem %s52, 8
          %s61 = scalar_lea.vmem %s53, 8
        $region22: #{custom-call.11} parent=8 // loop_footer_branch
          %62 = sbr.rel target = $region18
        $region23: #{custom-call.11} parent=8 // loop_exit
          _
      $region9: #{custom-call.11} parent=4 // pred_fallthru
        _
      %s63 = sand.u32 4, 7
      %s64 = sshllo.u32 0, %s63
      %s65 = smul.u32 %s16, 128
      %s66 = sshra.s32 %s65, 4
      %s67 = scalar_lea.vmem [#allocation1], %s66
      %s68 = smul.u32 %s16, 128
      %s69 = sshra.s32 %s68, 4
      %s70 = scalar_lea.vmem %s0, %s69
      %v71 = vld [vmem:[%s70] sm:%s64]
      %72 = vst [vmem:[%s67] sm:%s64] %v71
    $region5: #{custom-call.11} parent=1 // pred_fallthru
      _
    %p74 = scmp.gt.s32.totalorder 4, 0
    // Predicated region
    $region24: #{custom-call.11} parent=1 // pred_check
      %p75 = pneg %p74
    $region25: #{custom-call.11} parent=1 // pred_check_branch
      %77 = sbr.rel (%p75) target = $region27
    $region26: #{custom-call.11} parent=1 // pred_region
      %s78 = sshra.s32 4, 3
      %p79 = scmp.gt.s32.totalorder %s78, 0
      // Predicated region
      $region28: #{custom-call.11} parent=26 // pred_check
        %p80 = pneg %p79
      $region29: #{custom-call.11} parent=26 // pred_check_branch
        %82 = sbr.rel (%p80) target = $region31
      $region30: #{custom-call.11} parent=26 // pred_region
        %s83 = ssub.s32 %s78, 1
        %s84 = smul.u32 %s83, 128
        %s85 = sshra.s32 %s84, 4
        %s86 = scalar_lea.vmem %s1, %s85
        %v87 = vld [vmem:[%s1] sm:$0xff]
        // While loop
        $region32: #{custom-call.11} parent=30 // loop_pre_header
          _
        $region33: #{custom-call.11} parent=30 // loop_header
          %s88 = sphi %s1, %s110
          %s89 = sphi [#allocation3], %s111
          %v90 = vphi %v87, %v112
          %s91 = ssub.s32 %s86, 64
          %p92 = scmp.gt.s32.totalorder %s88, %s91
        $region34: #{custom-call.11} parent=30 // loop_header_branch
          %94 = sbr.rel (%p92) target = $region38
        $region35: #{custom-call.11} parent=30 // loop_body
          %95 = vst [vmem:[%s89] sm:$0xff] %v90
          %v96 = vld [vmem:[%s88 + $0x8] sm:$0xff]
          %97 = vst [vmem:[%s89 + $0x8] sm:$0xff] %v96
          %v98 = vld [vmem:[%s88 + $0x10] sm:$0xff]
          %99 = vst [vmem:[%s89 + $0x10] sm:$0xff] %v98
          %v100 = vld [vmem:[%s88 + $0x18] sm:$0xff]
          %101 = vst [vmem:[%s89 + $0x18] sm:$0xff] %v100
          %v102 = vld [vmem:[%s88 + $0x20] sm:$0xff]
          %103 = vst [vmem:[%s89 + $0x20] sm:$0xff] %v102
          %v104 = vld [vmem:[%s88 + $0x28] sm:$0xff]
          %105 = vst [vmem:[%s89 + $0x28] sm:$0xff] %v104
          %v106 = vld [vmem:[%s88 + $0x30] sm:$0xff]
          %107 = vst [vmem:[%s89 + $0x30] sm:$0xff] %v106
          %v108 = vld [vmem:[%s88 + $0x38] sm:$0xff]
          %109 = vst [vmem:[%s89 + $0x38] sm:$0xff] %v108
        $region36: #{custom-call.11} parent=30 // loop_footer
          %s110 = scalar_lea.vmem %s88, 64
          %s111 = scalar_lea.vmem %s89, 64
          %v112 = vld [vmem:[%s88 + $0x40] sm:$0xff]
        $region37: #{custom-call.11} parent=30 // loop_footer_branch
          %113 = sbr.rel target = $region33
        $region38: #{custom-call.11} parent=30 // loop_exit
          _
        // While loop
        $region39: #{custom-call.11} parent=30 // loop_pre_header
          _
        $region40: #{custom-call.11} parent=30 // loop_header
          %s114 = sphi %s88, %s122
          %s115 = sphi %s89, %s123
          %v116 = vphi %v90, %v116
          %p117 = scmp.gt.s32.totalorder %s114, %s86
        $region41: #{custom-call.11} parent=30 // loop_header_branch
          %119 = sbr.rel (%p117) target = $region45
        $region42: #{custom-call.11} parent=30 // loop_body
          %v120 = vld [vmem:[%s114] sm:$0xff]
          %121 = vst [vmem:[%s115] sm:$0xff] %v120
        $region43: #{custom-call.11} parent=30 // loop_footer
          %s122 = scalar_lea.vmem %s114, 8
          %s123 = scalar_lea.vmem %s115, 8
        $region44: #{custom-call.11} parent=30 // loop_footer_branch
          %124 = sbr.rel target = $region40
        $region45: #{custom-call.11} parent=30 // loop_exit
          _
      $region31: #{custom-call.11} parent=26 // pred_fallthru
        _
      %s125 = sand.u32 4, 7
      %s126 = sshllo.u32 0, %s125
      %s127 = smul.u32 %s78, 128
      %s128 = sshra.s32 %s127, 4
      %s129 = scalar_lea.vmem [#allocation3], %s128
      %s130 = smul.u32 %s78, 128
      %s131 = sshra.s32 %s130, 4
      %s132 = scalar_lea.vmem %s1, %s131
      %v133 = vld [vmem:[%s132] sm:%s126]
      %134 = vst [vmem:[%s129] sm:%s126] %v133
    $region27: #{custom-call.11} parent=1 // pred_fallthru
      _
    %p136 = scmp.gt.s32.totalorder 4, 0
    // Predicated region
    $region46: #{custom-call.11} parent=1 // pred_check
      %p137 = pneg %p136
    $region47: #{custom-call.11} parent=1 // pred_check_branch
      %139 = sbr.rel (%p137) target = $region49
    $region48: #{custom-call.11} parent=1 // pred_region
      %s140 = sshra.s32 4, 3
      %p141 = scmp.gt.s32.totalorder %s140, 0
      // Predicated region
      $region50: #{custom-call.11} parent=48 // pred_check
        %p142 = pneg %p141
      $region51: #{custom-call.11} parent=48 // pred_check_branch
        %144 = sbr.rel (%p142) target = $region53
      $region52: #{custom-call.11} parent=48 // pred_region
        %s145 = ssub.s32 %s140, 1
        %s146 = smul.u32 %s145, 128
        %s147 = sshra.s32 %s146, 4
        %s148 = scalar_lea.vmem %s2, %s147
        %v149 = vld [vmem:[%s2] sm:$0xff]
        // While loop
        $region54: #{custom-call.11} parent=52 // loop_pre_header
          _
        $region55: #{custom-call.11} parent=52 // loop_header
          %s150 = sphi %s2, %s172
          %s151 = sphi [#allocation5], %s173
          %v152 = vphi %v149, %v174
          %s153 = ssub.s32 %s148, 64
          %p154 = scmp.gt.s32.totalorder %s150, %s153
        $region56: #{custom-call.11} parent=52 // loop_header_branch
          %156 = sbr.rel (%p154) target = $region60
        $region57: #{custom-call.11} parent=52 // loop_body
          %157 = vst [vmem:[%s151] sm:$0xff] %v152
          %v158 = vld [vmem:[%s150 + $0x8] sm:$0xff]
          %159 = vst [vmem:[%s151 + $0x8] sm:$0xff] %v158
          %v160 = vld [vmem:[%s150 + $0x10] sm:$0xff]
          %161 = vst [vmem:[%s151 + $0x10] sm:$0xff] %v160
          %v162 = vld [vmem:[%s150 + $0x18] sm:$0xff]
          %163 = vst [vmem:[%s151 + $0x18] sm:$0xff] %v162
          %v164 = vld [vmem:[%s150 + $0x20] sm:$0xff]
          %165 = vst [vmem:[%s151 + $0x20] sm:$0xff] %v164
          %v166 = vld [vmem:[%s150 + $0x28] sm:$0xff]
          %167 = vst [vmem:[%s151 + $0x28] sm:$0xff] %v166
          %v168 = vld [vmem:[%s150 + $0x30] sm:$0xff]
          %169 = vst [vmem:[%s151 + $0x30] sm:$0xff] %v168
          %v170 = vld [vmem:[%s150 + $0x38] sm:$0xff]
          %171 = vst [vmem:[%s151 + $0x38] sm:$0xff] %v170
        $region58: #{custom-call.11} parent=52 // loop_footer
          %s172 = scalar_lea.vmem %s150, 64
          %s173 = scalar_lea.vmem %s151, 64
          %v174 = vld [vmem:[%s150 + $0x40] sm:$0xff]
        $region59: #{custom-call.11} parent=52 // loop_footer_branch
          %175 = sbr.rel target = $region55
        $region60: #{custom-call.11} parent=52 // loop_exit
          _
        // While loop
        $region61: #{custom-call.11} parent=52 // loop_pre_header
          _
        $region62: #{custom-call.11} parent=52 // loop_header
          %s176 = sphi %s150, %s184
          %s177 = sphi %s151, %s185
          %v178 = vphi %v152, %v178
          %p179 = scmp.gt.s32.totalorder %s176, %s148
        $region63: #{custom-call.11} parent=52 // loop_header_branch
          %181 = sbr.rel (%p179) target = $region67
        $region64: #{custom-call.11} parent=52 // loop_body
          %v182 = vld [vmem:[%s176] sm:$0xff]
          %183 = vst [vmem:[%s177] sm:$0xff] %v182
        $region65: #{custom-call.11} parent=52 // loop_footer
          %s184 = scalar_lea.vmem %s176, 8
          %s185 = scalar_lea.vmem %s177, 8
        $region66: #{custom-call.11} parent=52 // loop_footer_branch
          %186 = sbr.rel target = $region62
        $region67: #{custom-call.11} parent=52 // loop_exit
          _
      $region53: #{custom-call.11} parent=48 // pred_fallthru
        _
      %s187 = sand.u32 4, 7
      %s188 = sshllo.u32 0, %s187
      %s189 = smul.u32 %s140, 128
      %s190 = sshra.s32 %s189, 4
      %s191 = scalar_lea.vmem [#allocation5], %s190
      %s192 = smul.u32 %s140, 128
      %s193 = sshra.s32 %s192, 4
      %s194 = scalar_lea.vmem %s2, %s193
      %v195 = vld [vmem:[%s194] sm:%s188]
      %196 = vst [vmem:[%s191] sm:%s188] %v195
    $region49: #{custom-call.11} parent=1 // pred_fallthru
      _
    %p198 = scmp.gt.s32.totalorder 4, 0
    // Predicated region
    $region68: #{custom-call.11} parent=1 // pred_check
      %p199 = pneg %p198
    $region69: #{custom-call.11} parent=1 // pred_check_branch
      %201 = sbr.rel (%p199) target = $region71
    $region70: #{custom-call.11} parent=1 // pred_region
      %s202 = sshra.s32 4, 3
      %p203 = scmp.gt.s32.totalorder %s202, 0
      // Predicated region
      $region72: #{custom-call.11} parent=70 // pred_check
        %p204 = pneg %p203
      $region73: #{custom-call.11} parent=70 // pred_check_branch
        %206 = sbr.rel (%p204) target = $region75
      $region74: #{custom-call.11} parent=70 // pred_region
        %s207 = ssub.s32 %s202, 1
        %s208 = smul.u32 %s207, 128
        %s209 = sshra.s32 %s208, 4
        %s210 = scalar_lea.vmem %s3, %s209
        %v211 = vld [vmem:[%s3] sm:$0xff]
        // While loop
        $region76: #{custom-call.11} parent=74 // loop_pre_header
          _
        $region77: #{custom-call.11} parent=74 // loop_header
          %s212 = sphi %s3, %s234
          %s213 = sphi [#allocation7], %s235
          %v214 = vphi %v211, %v236
          %s215 = ssub.s32 %s210, 64
          %p216 = scmp.gt.s32.totalorder %s212, %s215
        $region78: #{custom-call.11} parent=74 // loop_header_branch
          %218 = sbr.rel (%p216) target = $region82
        $region79: #{custom-call.11} parent=74 // loop_body
          %219 = vst [vmem:[%s213] sm:$0xff] %v214
          %v220 = vld [vmem:[%s212 + $0x8] sm:$0xff]
          %221 = vst [vmem:[%s213 + $0x8] sm:$0xff] %v220
          %v222 = vld [vmem:[%s212 + $0x10] sm:$0xff]
          %223 = vst [vmem:[%s213 + $0x10] sm:$0xff] %v222
          %v224 = vld [vmem:[%s212 + $0x18] sm:$0xff]
          %225 = vst [vmem:[%s213 + $0x18] sm:$0xff] %v224
          %v226 = vld [vmem:[%s212 + $0x20] sm:$0xff]
          %227 = vst [vmem:[%s213 + $0x20] sm:$0xff] %v226
          %v228 = vld [vmem:[%s212 + $0x28] sm:$0xff]
          %229 = vst [vmem:[%s213 + $0x28] sm:$0xff] %v228
          %v230 = vld [vmem:[%s212 + $0x30] sm:$0xff]
          %231 = vst [vmem:[%s213 + $0x30] sm:$0xff] %v230
          %v232 = vld [vmem:[%s212 + $0x38] sm:$0xff]
          %233 = vst [vmem:[%s213 + $0x38] sm:$0xff] %v232
        $region80: #{custom-call.11} parent=74 // loop_footer
          %s234 = scalar_lea.vmem %s212, 64
          %s235 = scalar_lea.vmem %s213, 64
          %v236 = vld [vmem:[%s212 + $0x40] sm:$0xff]
        $region81: #{custom-call.11} parent=74 // loop_footer_branch
          %237 = sbr.rel target = $region77
        $region82: #{custom-call.11} parent=74 // loop_exit
          _
        // While loop
        $region83: #{custom-call.11} parent=74 // loop_pre_header
          _
        $region84: #{custom-call.11} parent=74 // loop_header
          %s238 = sphi %s212, %s246
          %s239 = sphi %s213, %s247
          %v240 = vphi %v214, %v240
          %p241 = scmp.gt.s32.totalorder %s238, %s210
        $region85: #{custom-call.11} parent=74 // loop_header_branch
          %243 = sbr.rel (%p241) target = $region89
        $region86: #{custom-call.11} parent=74 // loop_body
          %v244 = vld [vmem:[%s238] sm:$0xff]
          %245 = vst [vmem:[%s239] sm:$0xff] %v244
        $region87: #{custom-call.11} parent=74 // loop_footer
          %s246 = scalar_lea.vmem %s238, 8
          %s247 = scalar_lea.vmem %s239, 8
        $region88: #{custom-call.11} parent=74 // loop_footer_branch
          %248 = sbr.rel target = $region84
        $region89: #{custom-call.11} parent=74 // loop_exit
          _
      $region75: #{custom-call.11} parent=70 // pred_fallthru
        _
      %s249 = sand.u32 4, 7
      %s250 = sshllo.u32 0, %s249
      %s251 = smul.u32 %s202, 128
      %s252 = sshra.s32 %s251, 4
      %s253 = scalar_lea.vmem [#allocation7], %s252
      %s254 = smul.u32 %s202, 128
      %s255 = sshra.s32 %s254, 4
      %s256 = scalar_lea.vmem %s3, %s255
      %v257 = vld [vmem:[%s256] sm:%s250]
      %258 = vst [vmem:[%s253] sm:%s250] %v257
    $region71: #{custom-call.11} parent=1 // pred_fallthru
      _
    %s260 = sshllo.u32 0, 4
    %v261 = vld [vmem:[#allocation1] sm:%s260]
    %262 = vst [vmem:[#allocation0] sm:%s260] %v261
    %s264 = sshllo.u32 0, 4
    %v265 = vld [vmem:[#allocation3] sm:%s264]
    %266 = vst [vmem:[#allocation2] sm:%s264] %v265
    %s268 = sshllo.u32 0, 4
    %v269 = vld [vmem:[#allocation5] sm:%s268]
    %270 = vst [vmem:[#allocation4] sm:%s268] %v269
    %s272 = sshllo.u32 0, 4
    %v273 = vld [vmem:[#allocation7] sm:%s272]
    %274 = vst [vmem:[#allocation6] sm:%s272] %v273
    %s275 = smov [#allocation20]
    %v276 = vld [vmem:[#allocation0] sm:$0xff]
    %277 = vst [vmem:[%s275] sm:$0xff] %v276
    %s278 = smov [#allocation21]
    %v279 = vld [vmem:[#allocation2] sm:$0xff]
    %280 = vst [vmem:[%s278] sm:$0xff] %v279
    %s281 = smov [#allocation22]
    %v282 = vld [vmem:[#allocation4] sm:$0xff]
    %283 = vst [vmem:[%s281] sm:$0xff] %v282
    %s284 = smov [#allocation23]
    %v285 = vld [vmem:[#allocation6] sm:$0xff]
    %286 = vst [vmem:[%s284] sm:$0xff] %v285
    %287 = vst [vmem:[#allocation12] sm:$0xff] 0.0
    %288 = vst [vmem:[#allocation14] sm:$0xff] 0.0
    %289 = vst [vmem:[#allocation16] sm:$0xff] 0.0
    %290 = vst [vmem:[#allocation18] sm:$0xff] 0.0
    %s291 = smov [#allocation12]
    %v292 = vlaneseq
    %v293 = vand.u32 %v292, 127
    %v294 = vmov %v293
    %v295 = vlaneseq
    %v296 = vshrl.u32 %v295, 7
    %v297 = vmov %v296
    %v298 = vld [vmem:[%s291] sm:$0xf]
    %vm301 = vcmp.eq.s32.totalorder %v297, %v294
    %v302 = vsel %vm301, 1.0, %v298
    %303 = vst [vmem:[%s291] sm:$0xf] %v302
    %s304 = smov [#allocation18]
    %v305 = vlaneseq
    %v306 = vand.u32 %v305, 127
    %v307 = vmov %v306
    %v308 = vlaneseq
    %v309 = vshrl.u32 %v308, 7
    %v310 = vmov %v309
    %v311 = vld [vmem:[%s304] sm:$0xf]
    %vm314 = vcmp.eq.s32.totalorder %v310, %v307
    %v315 = vsel %vm314, 1.0, %v311
    %316 = vst [vmem:[%s304] sm:$0xf] %v315
    // While loop
    $region90: #{custom-call.11} parent=1 // loop_pre_header
      _
    $region91: #{custom-call.11} parent=1 // loop_header
      %s318 = sphi 0, %s860
      %v319 = vlaneseq
      %v320 = vand.u32 %v319, 127
      %v321 = vmov %v320
      %v322 = vlaneseq
      %v323 = vshrl.u32 %v322, 7
      %v324 = vmov %v323
      %s325 = smov [#allocation20]
      %v326 = vlaneseq
      %v327 = vand.u32 %v326, 127
      %vm328 = vcmp.ge.s32.totalorder %v327, 0
      %vm329 = vcmp.lt.s32.totalorder %v327, 4
      %vm330 = vmand %vm328, %vm329
      %v331 = vld [vmem:[%s325] sm:$0xf]
      %v332 = vsel %vm330, %v331, 0.0
      %v333 = vmul.f32 %v332, %v332
      %vm336 = vcmp.eq.s32.totalorder %v324, %v321
      %v337 = vsel %vm336, 0.0, %v333
      %v338 = vlaneseq
      %v339 = vand.u32 %v338, 127
      %v340 = vmov %v339
      %v341 = vlaneseq
      %v342 = vshrl.u32 %v341, 7
      %v343 = vmov %v342
      %s344 = smov [#allocation21]
      %v345 = vlaneseq
      %v346 = vand.u32 %v345, 127
      %vm347 = vcmp.ge.s32.totalorder %v346, 0
      %vm348 = vcmp.lt.s32.totalorder %v346, 4
      %vm349 = vmand %vm347, %vm348
      %v350 = vld [vmem:[%s344] sm:$0xf]
      %v351 = vsel %vm349, %v350, 0.0
      %v352 = vmul.f32 %v351, %v351
      %v353 = vadd.f32 %v337, %v352
      %v354 = vadd.f32 %v333, %v352
      %v355 = vlaneseq
      %v356 = vand.u32 %v355, 127
      %v357 = vmov %v356
      %v358 = vlaneseq
      %v359 = vshrl.u32 %v358, 7
      %v360 = vmov %v359
      %s361 = smov [#allocation22]
      %v362 = vlaneseq
      %v363 = vand.u32 %v362, 127
      %vm364 = vcmp.ge.s32.totalorder %v363, 0
      %vm365 = vcmp.lt.s32.totalorder %v363, 4
      %vm366 = vmand %vm364, %vm365
      %v367 = vld [vmem:[%s361] sm:$0xf]
      %v368 = vsel %vm366, %v367, 0.0
      %v369 = vmul.f32 %v368, %v368
      %v370 = vadd.f32 %v353, %v369
      %v371 = vadd.f32 %v354, %v369
      %v372 = vlaneseq
      %v373 = vand.u32 %v372, 127
      %v374 = vmov %v373
      %v375 = vlaneseq
      %v376 = vshrl.u32 %v375, 7
      %v377 = vmov %v376
      %s378 = smov [#allocation23]
      %v379 = vlaneseq
      %v380 = vand.u32 %v379, 127
      %vm381 = vcmp.ge.s32.totalorder %v380, 0
      %vm382 = vcmp.lt.s32.totalorder %v380, 4
      %vm383 = vmand %vm381, %vm382
      %v384 = vld [vmem:[%s378] sm:$0xf]
      %v385 = vsel %vm383, %v384, 0.0
      %v386 = vmul.f32 %v385, %v385
      %vm389 = vcmp.eq.s32.totalorder %v377, %v374
      %v390 = vsel %vm389, 0.0, %v386
      %v391 = vadd.f32 %v370, %v390
      %v392 = vadd.f32 %v371, %v386
      %393 = vadd.xlane.f32.xlu0 %v392
      %v394 = vpop.xlane.xlu0 %393
      %v395 = vrot.slane %v394, 4
      %v396 = vadd.f32 %v394, %v395
      %v397 = vrot.slane %v396, 2
      %v398 = vadd.f32 %v396, %v397
      %v399 = vrot.slane %v398, 1
      %v400 = vadd.f32 %v398, %v399
      %401 = vadd.xlane.f32.xlu0 %v391
      %v402 = vpop.xlane.xlu0 %401
      %v403 = vrot.slane %v402, 4
      %v404 = vadd.f32 %v402, %v403
      %v405 = vrot.slane %v404, 2
      %v406 = vadd.f32 %v404, %v405
      %v407 = vrot.slane %v406, 1
      %v408 = vadd.f32 %v406, %v407
      %s409 = vtos %v408
      %s410 = vtos %v400
      %s411 = smul.f32 1e-10, %s410
      %p412 = scmp.le.f32.partialorder %s409, %s411
      %p413 = scmp.ge.s32.totalorder %s318, 15
      %p414 = por %p412, %p413
    $region92: #{custom-call.11} parent=1 // loop_header_branch
      %862 = sbr.rel (%p414) target = $region96
    $region93: #{custom-call.11} parent=1 // loop_body
      loop: start=0, step=1, limit=7
      $region97: #{custom-call.11} parent=93 // loop_pre_header
        _
      $region98: #{custom-call.11} parent=93 // loop_header
        %s416 = sphi 0, %s420
        %p417 = scmp.ge.s32.totalorder %s416, 7
      $region99: #{custom-call.11} parent=93 // loop_header_branch
        %419 = sbr.rel (%p417) target = $region103
      $region100: #{custom-call.11} parent=93 // loop_body
        #allocation24 [shape = 'f32[1024]{0}', space=vmem, size = 0x1000, scoped, tag = 'a_tl_diag vmem']
        #allocation25 [shape = 'f32[1024]{0}', space=vmem, size = 0x1000, scoped, tag = 'a_tr_diag vmem']
        #allocation26 [shape = 'f32[1024]{0}', space=vmem, size = 0x1000, scoped, tag = 'a_br_diag vmem']
        #allocation27 [shape = 'f32[1024]{0}', space=vmem, size = 0x1000, scoped, tag = 'rt1 vmem']
        #allocation28 [shape = 'f32[1024]{0}', space=vmem, size = 0x1000, scoped, tag = 'rt2 vmem']
        #allocation29 [shape = 'f32[1024]{0}', space=vmem, size = 0x1000, scoped, tag = 'c vmem']
        #allocation30 [shape = 'f32[1024]{0}', space=vmem, size = 0x1000, scoped, tag = 's vmem']
        #allocation31 [shape = 'f32[4096]{0}', space=vmem, size = 0x4000, scoped, tag = 'c broadcast']
        #allocation32 [shape = 'f32[4096]{0}', space=vmem, size = 0x4000, scoped, tag = 's broadcast']
        %s421 = smov [#allocation20]
        %s422 = smov [#allocation24]
        %v423 = vlaneseq
        %v424 = vand.u32 %v423, 127
        %v425 = vmov %v424
        %v426 = vlaneseq
        %v427 = vshrl.u32 %v426, 7
        %v428 = vmov %v427
        %v429 = vld [vmem:[%s421] sm:$0xf]
        %vm432 = vcmp.eq.s32.totalorder %v428, %v425
        %v433 = vsel %vm432, %v429, 0.0
        %v434 = vrot.slane %v433, 4
        %v435 = vadd.f32 %v433, %v434
        %v436 = vrot.slane %v435, 2
        %v437 = vadd.f32 %v435, %v436
        %v438 = vrot.slane %v437, 1
        %v439 = vadd.f32 %v437, %v438
        %440 = vst [vmem:[%s422] sm:$0x1] %v439
        %s441 = smov [#allocation21]
        %s442 = smov [#allocation25]
        %v443 = vlaneseq
        %v444 = vand.u32 %v443, 127
        %v445 = vmov %v444
        %v446 = vlaneseq
        %v447 = vshrl.u32 %v446, 7
        %v448 = vmov %v447
        %v449 = vld [vmem:[%s441] sm:$0xf]
        %vm452 = vcmp.eq.s32.totalorder %v448, %v445
        %v453 = vsel %vm452, %v449, 0.0
        %v454 = vrot.slane %v453, 4
        %v455 = vadd.f32 %v453, %v454
        %v456 = vrot.slane %v455, 2
        %v457 = vadd.f32 %v455, %v456
        %v458 = vrot.slane %v457, 1
        %v459 = vadd.f32 %v457, %v458
        %460 = vst [vmem:[%s442] sm:$0x1] %v459
        %s461 = smov [#allocation23]
        %s462 = smov [#allocation26]
        %v463 = vlaneseq
        %v464 = vand.u32 %v463, 127
        %v465 = vmov %v464
        %v466 = vlaneseq
        %v467 = vshrl.u32 %v466, 7
        %v468 = vmov %v467
        %v469 = vld [vmem:[%s461] sm:$0xf]
        %vm472 = vcmp.eq.s32.totalorder %v468, %v465
        %v473 = vsel %vm472, %v469, 0.0
        %v474 = vrot.slane %v473, 4
        %v475 = vadd.f32 %v473, %v474
        %v476 = vrot.slane %v475, 2
        %v477 = vadd.f32 %v475, %v476
        %v478 = vrot.slane %v477, 1
        %v479 = vadd.f32 %v477, %v478
        %480 = vst [vmem:[%s462] sm:$0x1] %v479
        %s481 = smov [#allocation29]
        %s482 = smov [#allocation30]
        %s483 = smov [#allocation24]
        %v484 = vld [vmem:[%s483] sm:$0xff]
        %s485 = smov [#allocation25]
        %v486 = vld [vmem:[%s485] sm:$0xff]
        %s487 = smov [#allocation26]
        %v488 = vld [vmem:[%s487] sm:$0xff]
        %v489 = vsub.f32 %v488, %v484
        %v490 = vmul.f32 2.0, %v486
        %v491 = vrcp.pop %v490
        %v492 = vmul.f32 %v489, %v491
        %vm493 = vcmp.ge.f32.partialorder %v492, 0.0
        %v494 = vmul.f32 %v492, %v492
        %v495 = vadd.f32 1.0, %v494
        %v496 = vrsqrt.pop %v495
        %v497 = vmul.f32 %v495, %v496
        %vm498 = vcmp.eq.f32.partialorder %v495, inf
        %v499 = vsel %vm498, %v495, %v497
        %vm500 = vcmp.eq.f32.partialorder %v495, 0.0
        %v501 = vand.u32 %v495, 2147483648
        %v502 = vsel %vm500, %v501, %v499
        %v503 = vxor.u32 %v502, 2147483648
        %v504 = vsel %vm493, %v502, %v503
        %v505 = vadd.f32 %v492, %v504
        %v506 = vrcp.pop %v505
        %v507 = vand.u32 2147483647, %v484
        %v508 = vand.u32 2147483647, %v486
        %v509 = vand.u32 2147483647, %v488
        %v510 = vmin.f32 %v507, %v509
        %v511 = vmul.f32 1.1920929e-08, %v510
        %vm512 = vcmp.le.f32.partialorder %v508, %v511
        %v513 = vsel %vm512, 0.0, %v506
        %v514 = vmul.f32 %v513, %v513
        %v515 = vadd.f32 1.0, %v514
        %v516 = vrsqrt.pop %v515
        %v517 = vmul.f32 %v513, %v516
        %v518 = vmul.f32 %v513, %v486
        %v519 = vsub.f32 %v484, %v518
        %v520 = vmul.f32 %v513, %v486
        %v521 = vadd.f32 %v488, %v520
        %s522 = smov [#allocation27]
        %523 = vst [vmem:[%s522] sm:$0xff] %v519
        %s524 = smov [#allocation28]
        %525 = vst [vmem:[%s524] sm:$0xff] %v521
        %s526 = smov %s481
        %527 = vst [vmem:[%s526] sm:$0xff] %v516
        %s528 = smov %s482
        %529 = vst [vmem:[%s528] sm:$0xff] %v517
        %s530 = smov [#allocation29]
        %v531 = vld [vmem:[%s530] ss:$0 sm:$0xff]
        %v532 = vlaneseq
        %v533 = vand.u32 %v532, 127
        %v534 = vmov %v533
        %v535 = vlaneseq
        %v536 = vshrl.u32 %v535, 7
        %v537 = vmov %v536
        %vm539 = vcmp.eq.s32.totalorder %v537, %v534
        %v540 = vsel %vm539, %v531, 0.0
        %541 = vadd.xlane.f32.xlu0 %v540
        %v542 = vpop.xlane.xlu0 %541
        %s543 = smov [#allocation31]
        %544 = vst [vmem:[%s543] sm:$0xff] %v542
        %s545 = smov [#allocation30]
        %v546 = vld [vmem:[%s545] ss:$0 sm:$0xff]
        %v547 = vlaneseq
        %v548 = vand.u32 %v547, 127
        %v549 = vmov %v548
        %v550 = vlaneseq
        %v551 = vshrl.u32 %v550, 7
        %v552 = vmov %v551
        %vm554 = vcmp.eq.s32.totalorder %v552, %v549
        %v555 = vsel %vm554, %v546, 0.0
        %556 = vadd.xlane.f32.xlu0 %v555
        %v557 = vpop.xlane.xlu0 %556
        %s558 = smov [#allocation32]
        %559 = vst [vmem:[%s558] sm:$0xff] %v557
        %s560 = smov [#allocation31]
        %v561 = vld [vmem:[%s560] sm:$0xff]
        %s562 = smov [#allocation32]
        %v563 = vld [vmem:[%s562] sm:$0xff]
        %s564 = smov [#allocation20]
        %s565 = smov [#allocation21]
        %s566 = smov [#allocation22]
        %s567 = smov [#allocation23]
        %v568 = vld [vmem:[%s564] sm:$0xf]
        %v569 = vld [vmem:[%s565] sm:$0xf]
        %v570 = vld [vmem:[%s566] sm:$0xf]
        %v571 = vld [vmem:[%s567] sm:$0xf]
        %v572 = vmul.f32 %v561, %v568
        %v573 = vmul.f32 %v563, %v570
        %v574 = vsub.f32 %v572, %v573
        %v575 = vmul.f32 %v561, %v569
        %v576 = vmul.f32 %v563, %v571
        %v577 = vsub.f32 %v575, %v576
        %v578 = vmul.f32 %v563, %v568
        %v579 = vmul.f32 %v561, %v570
        %v580 = vadd.f32 %v578, %v579
        %v581 = vmul.f32 %v563, %v569
        %v582 = vmul.f32 %v561, %v571
        %v583 = vadd.f32 %v581, %v582
        %584 = vst [vmem:[%s564] sm:$0xf] %v574
        %585 = vst [vmem:[%s565] sm:$0xf] %v577
        %586 = vst [vmem:[%s566] sm:$0xf] %v580
        %587 = vst [vmem:[%s567] sm:$0xf] %v583
        %s588 = smov [#allocation29]
        %v589 = vld [vmem:[%s588] ss:$0 sm:$0xff]
        %s590 = smov [#allocation30]
        %v591 = vld [vmem:[%s590] ss:$0 sm:$0xff]
        %s592 = smov [#allocation20]
        %s593 = smov [#allocation21]
        %s594 = smov [#allocation22]
        %s595 = smov [#allocation23]
        %v596 = vld [vmem:[%s592] sm:$0xf]
        %v597 = vld [vmem:[%s593] sm:$0xf]
        %v598 = vld [vmem:[%s594] sm:$0xf]
        %v599 = vld [vmem:[%s595] sm:$0xf]
        %v600 = vmul.f32 %v589, %v596
        %v601 = vmul.f32 %v591, %v597
        %v602 = vsub.f32 %v600, %v601
        %v603 = vmul.f32 %v591, %v596
        %v604 = vmul.f32 %v589, %v597
        %v605 = vadd.f32 %v603, %v604
        %v606 = vmul.f32 %v589, %v598
        %v607 = vmul.f32 %v591, %v599
        %v608 = vsub.f32 %v606, %v607
        %v609 = vmul.f32 %v591, %v598
        %v610 = vmul.f32 %v589, %v599
        %v611 = vadd.f32 %v609, %v610
        %612 = vst [vmem:[%s592] sm:$0xf] %v602
        %613 = vst [vmem:[%s593] sm:$0xf] %v605
        %614 = vst [vmem:[%s594] sm:$0xf] %v608
        %615 = vst [vmem:[%s595] sm:$0xf] %v611
        %s616 = smov [#allocation20]
        %s617 = smov [#allocation27]
        %v618 = vlaneseq
        %v619 = vand.u32 %v618, 127
        %v620 = vmov %v619
        %v621 = vlaneseq
        %v622 = vshrl.u32 %v621, 7
        %v623 = vmov %v622
        %v624 = vld [vmem:[%s617] ss:$0 sm:$0xff]
        %v625 = vld [vmem:[%s616] sm:$0xf]
        %vm628 = vcmp.eq.s32.totalorder %v623, %v620
        %v629 = vsel %vm628, %v624, %v625
        %630 = vst [vmem:[%s616] sm:$0xf] %v629
        %s631 = smov [#allocation21]
        %v632 = vlaneseq
        %v633 = vand.u32 %v632, 127
        %v634 = vmov %v633
        %v635 = vlaneseq
        %v636 = vshrl.u32 %v635, 7
        %v637 = vmov %v636
        %v638 = vld [vmem:[%s631] sm:$0xf]
        %vm641 = vcmp.eq.s32.totalorder %v637, %v634
        %v642 = vsel %vm641, 0.0, %v638
        %643 = vst [vmem:[%s631] sm:$0xf] %v642
        %s644 = smov [#allocation22]
        %v645 = vlaneseq
        %v646 = vand.u32 %v645, 127
        %v647 = vmov %v646
        %v648 = vlaneseq
        %v649 = vshrl.u32 %v648, 7
        %v650 = vmov %v649
        %v651 = vld [vmem:[%s644] sm:$0xf]
        %vm654 = vcmp.eq.s32.totalorder %v650, %v647
        %v655 = vsel %vm654, 0.0, %v651
        %656 = vst [vmem:[%s644] sm:$0xf] %v655
        %s657 = smov [#allocation23]
        %s658 = smov [#allocation28]
        %v659 = vlaneseq
        %v660 = vand.u32 %v659, 127
        %v661 = vmov %v660
        %v662 = vlaneseq
        %v663 = vshrl.u32 %v662, 7
        %v664 = vmov %v663
        %v665 = vld [vmem:[%s658] ss:$0 sm:$0xff]
        %v666 = vld [vmem:[%s657] sm:$0xf]
        %vm669 = vcmp.eq.s32.totalorder %v664, %v661
        %v670 = vsel %vm669, %v665, %v666
        %671 = vst [vmem:[%s657] sm:$0xf] %v670
        %s672 = smov [#allocation20]
        %s673 = smov [#allocation21]
        %v674 = vld [vmem:[%s673] sm:$0xf]
        %675 = vrot.lane.b32.xlu0 %v674, 1
        %v676 = vpop.permute.xlu0 %675
        %v677 = vld [vmem:[%s672] sm:$0xf]
        %v678 = vld [vmem:[%s672] sm:$0xf]
        %679 = vrot.lane.b32.xlu0 %v678, 1
        %v680 = vpop.permute.xlu0 %679
        %v681 = vlaneseq
        %v682 = vand.u32 %v681, 127
        %vm683 = vcmp.eq.s32.totalorder %v682, 0
        %v684 = vsel %vm683, %v678, %v680
        %v685 = vlaneseq
        %v686 = vand.u32 %v685, 127
        %vm687 = vcmp.eq.s32.totalorder %v686, 1
        %v688 = vsel %vm687, %v676, %v684
        %v689 = vlaneseq
        %v690 = vand.u32 %v689, 127
        %vm691 = vcmp.ge.s32.totalorder %v690, 0
        %vm692 = vcmp.lt.s32.totalorder %v690, 4
        %vm693 = vmand %vm691, %vm692
        %v694 = vsel %vm693, %v688, 0.0
        %v695 = vld [vmem:[%s673] sm:$0xf]
        %696 = vrot.lane.b32.xlu0 %v695, 127
        %v697 = vpop.permute.xlu0 %696
        %v698 = vlaneseq
        %v699 = vand.u32 %v698, 127
        %vm700 = vcmp.eq.s32.totalorder %v699, 3
        %v701 = vsel %vm700, %v677, %v697
        %702 = vst [vmem:[%s672] sm:$0xf] %v694
        %703 = vst [vmem:[%s673] sm:$0xf] %v701
        %s704 = smov [#allocation22]
        %s705 = smov [#allocation23]
        %v706 = vld [vmem:[%s705] sm:$0xf]
        %707 = vrot.lane.b32.xlu0 %v706, 1
        %v708 = vpop.permute.xlu0 %707
        %v709 = vld [vmem:[%s704] sm:$0xf]
        %v710 = vld [vmem:[%s704] sm:$0xf]
        %711 = vrot.lane.b32.xlu0 %v710, 1
        %v712 = vpop.permute.xlu0 %711
        %v713 = vlaneseq
        %v714 = vand.u32 %v713, 127
        %vm715 = vcmp.eq.s32.totalorder %v714, 0
        %v716 = vsel %vm715, %v710, %v712
        %v717 = vlaneseq
        %v718 = vand.u32 %v717, 127
        %vm719 = vcmp.eq.s32.totalorder %v718, 1
        %v720 = vsel %vm719, %v708, %v716
        %v721 = vlaneseq
        %v722 = vand.u32 %v721, 127
        %vm723 = vcmp.ge.s32.totalorder %v722, 0
        %vm724 = vcmp.lt.s32.totalorder %v722, 4
        %vm725 = vmand %vm723, %vm724
        %v726 = vsel %vm725, %v720, 0.0
        %v727 = vld [vmem:[%s705] sm:$0xf]
        %728 = vrot.lane.b32.xlu0 %v727, 127
        %v729 = vpop.permute.xlu0 %728
        %v730 = vlaneseq
        %v731 = vand.u32 %v730, 127
        %vm732 = vcmp.eq.s32.totalorder %v731, 3
        %v733 = vsel %vm732, %v709, %v729
        %734 = vst [vmem:[%s704] sm:$0xf] %v726
        %735 = vst [vmem:[%s705] sm:$0xf] %v733
        %s736 = smov [#allocation20]
        %s737 = smov [#allocation22]
        %v738 = vld [vmem:[%s736] ss:$0 sm:$0xff]
        %s740 = scalar_lea.vmem %s736, 4294967295
        %v741 = vld [vmem:[%s740] sm:$0xe]
        %v742 = vlaneseq
        %v743 = vshrl.u32 %v742, 7
        %vm744 = vcmp.eq.s32.totalorder %v743, 0
        %v745 = vsel %vm744, %v738, %v741
        %s746 = scalar_lea.vmem %s736, 3
        %v747 = vld [vmem:[%s746] ss:$0 sm:$0xff]
        %748 = vst [vmem:[%s736] sm:$0xf] %v745
        %v749 = vld [vmem:[%s737] ss:$0 sm:$0xff]
        %s750 = scalar_lea.vmem %s736, 1
        %751 = vst [vmem:[%s750] sm:$0x1] %v749
        %s752 = scalar_lea.vmem %s737, 1
        %v753 = vld [vmem:[%s752] sm:$0x7]
        %v754 = vlaneseq
        %v755 = vshrl.u32 %v754, 7
        %vm756 = vcmp.eq.s32.totalorder %v755, 3
        %v757 = vsel %vm756, %v747, %v753
        %v758 = vld [vmem:[%s737] ss:$0 sm:$0xff]
        %759 = vst [vmem:[%s737] sm:$0xf] %v757
        %s760 = smov [#allocation21]
        %s761 = smov [#allocation23]
        %v762 = vld [vmem:[%s760] ss:$0 sm:$0xff]
        %s764 = scalar_lea.vmem %s760, 4294967295
        %v765 = vld [vmem:[%s764] sm:$0xe]
        %v766 = vlaneseq
        %v767 = vshrl.u32 %v766, 7
        %vm768 = vcmp.eq.s32.totalorder %v767, 0
        %v769 = vsel %vm768, %v762, %v765
        %s770 = scalar_lea.vmem %s760, 3
        %v771 = vld [vmem:[%s770] ss:$0 sm:$0xff]
        %772 = vst [vmem:[%s760] sm:$0xf] %v769
        %v773 = vld [vmem:[%s761] ss:$0 sm:$0xff]
        %s774 = scalar_lea.vmem %s760, 1
        %775 = vst [vmem:[%s774] sm:$0x1] %v773
        %s776 = scalar_lea.vmem %s761, 1
        %v777 = vld [vmem:[%s776] sm:$0x7]
        %v778 = vlaneseq
        %v779 = vshrl.u32 %v778, 7
        %vm780 = vcmp.eq.s32.totalorder %v779, 3
        %v781 = vsel %vm780, %v771, %v777
        %v782 = vld [vmem:[%s761] ss:$0 sm:$0xff]
        %783 = vst [vmem:[%s761] sm:$0xf] %v781
        %s784 = smov [#allocation31]
        %v785 = vld [vmem:[%s784] sm:$0xff]
        %s786 = smov [#allocation32]
        %v787 = vld [vmem:[%s786] sm:$0xff]
        %s788 = smov [#allocation12]
        %s789 = smov [#allocation14]
        %s790 = smov [#allocation16]
        %s791 = smov [#allocation18]
        %v792 = vld [vmem:[%s788] sm:$0xf]
        %v793 = vld [vmem:[%s789] sm:$0xf]
        %v794 = vld [vmem:[%s790] sm:$0xf]
        %v795 = vld [vmem:[%s791] sm:$0xf]
        %v796 = vmul.f32 %v785, %v792
        %v797 = vmul.f32 %v787, %v794
        %v798 = vsub.f32 %v796, %v797
        %v799 = vmul.f32 %v785, %v793
        %v800 = vmul.f32 %v787, %v795
        %v801 = vsub.f32 %v799, %v800
        %v802 = vmul.f32 %v787, %v792
        %v803 = vmul.f32 %v785, %v794
        %v804 = vadd.f32 %v802, %v803
        %v805 = vmul.f32 %v787, %v793
        %v806 = vmul.f32 %v785, %v795
        %v807 = vadd.f32 %v805, %v806
        %808 = vst [vmem:[%s788] sm:$0xf] %v798
        %809 = vst [vmem:[%s789] sm:$0xf] %v801
        %810 = vst [vmem:[%s790] sm:$0xf] %v804
        %811 = vst [vmem:[%s791] sm:$0xf] %v807
        %s812 = smov [#allocation12]
        %s813 = smov [#allocation16]
        %v814 = vld [vmem:[%s812] ss:$0 sm:$0xff]
        %s816 = scalar_lea.vmem %s812, 4294967295
        %v817 = vld [vmem:[%s816] sm:$0xe]
        %v818 = vlaneseq
        %v819 = vshrl.u32 %v818, 7
        %vm820 = vcmp.eq.s32.totalorder %v819, 0
        %v821 = vsel %vm820, %v814, %v817
        %s822 = scalar_lea.vmem %s812, 3
        %v823 = vld [vmem:[%s822] ss:$0 sm:$0xff]
        %824 = vst [vmem:[%s812] sm:$0xf] %v821
        %v825 = vld [vmem:[%s813] ss:$0 sm:$0xff]
        %s826 = scalar_lea.vmem %s812, 1
        %827 = vst [vmem:[%s826] sm:$0x1] %v825
        %s828 = scalar_lea.vmem %s813, 1
        %v829 = vld [vmem:[%s828] sm:$0x7]
        %v830 = vlaneseq
        %v831 = vshrl.u32 %v830, 7
        %vm832 = vcmp.eq.s32.totalorder %v831, 3
        %v833 = vsel %vm832, %v823, %v829
        %v834 = vld [vmem:[%s813] ss:$0 sm:$0xff]
        %835 = vst [vmem:[%s813] sm:$0xf] %v833
        %s836 = smov [#allocation14]
        %s837 = smov [#allocation18]
        %v838 = vld [vmem:[%s836] ss:$0 sm:$0xff]
        %s840 = scalar_lea.vmem %s836, 4294967295
        %v841 = vld [vmem:[%s840] sm:$0xe]
        %v842 = vlaneseq
        %v843 = vshrl.u32 %v842, 7
        %vm844 = vcmp.eq.s32.totalorder %v843, 0
        %v845 = vsel %vm844, %v838, %v841
        %s846 = scalar_lea.vmem %s836, 3
        %v847 = vld [vmem:[%s846] ss:$0 sm:$0xff]
        %848 = vst [vmem:[%s836] sm:$0xf] %v845
        %v849 = vld [vmem:[%s837] ss:$0 sm:$0xff]
        %s850 = scalar_lea.vmem %s836, 1
        %851 = vst [vmem:[%s850] sm:$0x1] %v849
        %s852 = scalar_lea.vmem %s837, 1
        %v853 = vld [vmem:[%s852] sm:$0x7]
        %v854 = vlaneseq
        %v855 = vshrl.u32 %v854, 7
        %vm856 = vcmp.eq.s32.totalorder %v855, 3
        %v857 = vsel %vm856, %v847, %v853
        %v858 = vld [vmem:[%s837] ss:$0 sm:$0xff]
        %859 = vst [vmem:[%s837] sm:$0xf] %v857
      $region101: #{custom-call.11} parent=93 // loop_footer
        %s420 = sadd.s32 1, %s416
      $region102: #{custom-call.11} parent=93 // loop_footer_branch
        %415 = sbr.rel target = $region98
      $region103: #{custom-call.11} parent=93 // loop_exit
        _
      %s860 = sadd.s32 %s318, 1
    $region94: #{custom-call.11} parent=1 // loop_footer
      _
    $region95: #{custom-call.11} parent=1 // loop_footer_branch
      %317 = sbr.rel target = $region91
    $region96: #{custom-call.11} parent=1 // loop_exit
      _
    %s863 = smov [#allocation20]
    %s864 = smov [#allocation8]
    %v865 = vlaneseq
    %v866 = vand.u32 %v865, 127
    %v867 = vmov %v866
    %v868 = vlaneseq
    %v869 = vshrl.u32 %v868, 7
    %v870 = vmov %v869
    %v871 = vld [vmem:[%s863] sm:$0xf]
    %vm874 = vcmp.eq.s32.totalorder %v870, %v867
    %v875 = vsel %vm874, %v871, 0.0
    %v876 = vrot.slane %v875, 4
    %v877 = vadd.f32 %v875, %v876
    %v878 = vrot.slane %v877, 2
    %v879 = vadd.f32 %v877, %v878
    %v880 = vrot.slane %v879, 1
    %v881 = vadd.f32 %v879, %v880
    %882 = vst [vmem:[%s864] sm:$0x1] %v881
    %s883 = smov [#allocation23]
    %s884 = smov [#allocation10]
    %v885 = vlaneseq
    %v886 = vand.u32 %v885, 127
    %v887 = vmov %v886
    %v888 = vlaneseq
    %v889 = vshrl.u32 %v888, 7
    %v890 = vmov %v889
    %v891 = vld [vmem:[%s883] sm:$0xf]
    %vm894 = vcmp.eq.s32.totalorder %v890, %v887
    %v895 = vsel %vm894, %v891, 0.0
    %v896 = vrot.slane %v895, 4
    %v897 = vadd.f32 %v895, %v896
    %v898 = vrot.slane %v897, 2
    %v899 = vadd.f32 %v897, %v898
    %v900 = vrot.slane %v899, 1
    %v901 = vadd.f32 %v899, %v900
    %902 = vst [vmem:[%s884] sm:$0x1] %v901
    %s904 = sshllo.u32 0, 1
    %v906 = vld [vmem:[#allocation8] sm:%s904]
    %s907 = sshllo.u32 0, 1
    %908 = vst [vmem:[#allocation9] sm:%s907] %v906
    %s910 = sshllo.u32 0, 1
    %v912 = vld [vmem:[#allocation10] sm:%s910]
    %s913 = sshllo.u32 0, 1
    %914 = vst [vmem:[#allocation11] sm:%s913] %v912
    %s916 = sshllo.u32 0, 4
    %v918 = vld [vmem:[#allocation12] sm:%s916]
    %s919 = sshllo.u32 0, 4
    %920 = vst [vmem:[#allocation13] sm:%s919] %v918
    %s922 = sshllo.u32 0, 4
    %v924 = vld [vmem:[#allocation14] sm:%s922]
    %s925 = sshllo.u32 0, 4
    %926 = vst [vmem:[#allocation15] sm:%s925] %v924
    %s928 = sshllo.u32 0, 4
    %v930 = vld [vmem:[#allocation16] sm:%s928]
    %s931 = sshllo.u32 0, 4
    %932 = vst [vmem:[#allocation17] sm:%s931] %v930
    %s934 = sshllo.u32 0, 4
    %v936 = vld [vmem:[#allocation18] sm:%s934]
    %s937 = sshllo.u32 0, 4
    %938 = vst [vmem:[#allocation19] sm:%s937] %v936
    // Predicated region
    $region104: #{custom-call.11} parent=1 // pred_check
      _
    $region105: #{custom-call.11} parent=1 // pred_check_branch
      %940 = sbr.rel (0) target = $region107
    $region106: #{custom-call.11} parent=1 // pred_region
      %p942 = scmp.gt.s32.totalorder 1, 0
      // Predicated region
      $region108: #{custom-call.11} parent=106 // pred_check
        %p943 = pneg %p942
      $region109: #{custom-call.11} parent=106 // pred_check_branch
        %945 = sbr.rel (%p943) target = $region111
      $region110: #{custom-call.11} parent=106 // pred_region
        %s946 = sshra.s32 1, 3
        %p947 = scmp.gt.s32.totalorder %s946, 0
        // Predicated region
        $region112: #{custom-call.11} parent=110 // pred_check
          %p948 = pneg %p947
        $region113: #{custom-call.11} parent=110 // pred_check_branch
          %950 = sbr.rel (%p948) target = $region115
        $region114: #{custom-call.11} parent=110 // pred_region
          %s951 = ssub.s32 %s946, 1
          %s952 = smul.u32 %s951, 128
          %s953 = sshra.s32 %s952, 4
          %s954 = scalar_lea.vmem [#allocation9], %s953
          %v955 = vld [vmem:[#allocation9] sm:$0xff]
          // While loop
          $region116: #{custom-call.11} parent=114 // loop_pre_header
            _
          $region117: #{custom-call.11} parent=114 // loop_header
            %s956 = sphi [#allocation9], %s978
            %s957 = sphi %s4, %s979
            %v958 = vphi %v955, %v980
            %s959 = ssub.s32 %s954, 64
            %p960 = scmp.gt.s32.totalorder %s956, %s959
          $region118: #{custom-call.11} parent=114 // loop_header_branch
            %962 = sbr.rel (%p960) target = $region122
          $region119: #{custom-call.11} parent=114 // loop_body
            %963 = vst [vmem:[%s957] sm:$0xff] %v958
            %v964 = vld [vmem:[%s956 + $0x8] sm:$0xff]
            %965 = vst [vmem:[%s957 + $0x8] sm:$0xff] %v964
            %v966 = vld [vmem:[%s956 + $0x10] sm:$0xff]
            %967 = vst [vmem:[%s957 + $0x10] sm:$0xff] %v966
            %v968 = vld [vmem:[%s956 + $0x18] sm:$0xff]
            %969 = vst [vmem:[%s957 + $0x18] sm:$0xff] %v968
            %v970 = vld [vmem:[%s956 + $0x20] sm:$0xff]
            %971 = vst [vmem:[%s957 + $0x20] sm:$0xff] %v970
            %v972 = vld [vmem:[%s956 + $0x28] sm:$0xff]
            %973 = vst [vmem:[%s957 + $0x28] sm:$0xff] %v972
            %v974 = vld [vmem:[%s956 + $0x30] sm:$0xff]
            %975 = vst [vmem:[%s957 + $0x30] sm:$0xff] %v974
            %v976 = vld [vmem:[%s956 + $0x38] sm:$0xff]
            %977 = vst [vmem:[%s957 + $0x38] sm:$0xff] %v976
          $region120: #{custom-call.11} parent=114 // loop_footer
            %s978 = scalar_lea.vmem %s956, 64
            %s979 = scalar_lea.vmem %s957, 64
            %v980 = vld [vmem:[%s956 + $0x40] sm:$0xff]
          $region121: #{custom-call.11} parent=114 // loop_footer_branch
            %981 = sbr.rel target = $region117
          $region122: #{custom-call.11} parent=114 // loop_exit
            _
          // While loop
          $region123: #{custom-call.11} parent=114 // loop_pre_header
            _
          $region124: #{custom-call.11} parent=114 // loop_header
            %s982 = sphi %s956, %s990
            %s983 = sphi %s957, %s991
            %v984 = vphi %v958, %v984
            %p985 = scmp.gt.s32.totalorder %s982, %s954
          $region125: #{custom-call.11} parent=114 // loop_header_branch
            %987 = sbr.rel (%p985) target = $region129
          $region126: #{custom-call.11} parent=114 // loop_body
            %v988 = vld [vmem:[%s982] sm:$0xff]
            %989 = vst [vmem:[%s983] sm:$0xff] %v988
          $region127: #{custom-call.11} parent=114 // loop_footer
            %s990 = scalar_lea.vmem %s982, 8
            %s991 = scalar_lea.vmem %s983, 8
          $region128: #{custom-call.11} parent=114 // loop_footer_branch
            %992 = sbr.rel target = $region124
          $region129: #{custom-call.11} parent=114 // loop_exit
            _
        $region115: #{custom-call.11} parent=110 // pred_fallthru
          _
        %s993 = sand.u32 1, 7
        %s994 = sshllo.u32 0, %s993
        %s995 = smul.u32 %s946, 128
        %s996 = sshra.s32 %s995, 4
        %s997 = scalar_lea.vmem %s4, %s996
        %s998 = smul.u32 %s946, 128
        %s999 = sshra.s32 %s998, 4
        %s1000 = scalar_lea.vmem [#allocation9], %s999
        %v1001 = vld [vmem:[%s1000] sm:%s994]
        %1002 = vst [vmem:[%s997] sm:%s994] %v1001
      $region111: #{custom-call.11} parent=106 // pred_fallthru
        _
    $region107: #{custom-call.11} parent=1 // pred_fallthru
      _
    // Predicated region
    $region130: #{custom-call.11} parent=1 // pred_check
      _
    $region131: #{custom-call.11} parent=1 // pred_check_branch
      %1004 = sbr.rel (0) target = $region133
    $region132: #{custom-call.11} parent=1 // pred_region
      %p1006 = scmp.gt.s32.totalorder 1, 0
      // Predicated region
      $region134: #{custom-call.11} parent=132 // pred_check
        %p1007 = pneg %p1006
      $region135: #{custom-call.11} parent=132 // pred_check_branch
        %1009 = sbr.rel (%p1007) target = $region137
      $region136: #{custom-call.11} parent=132 // pred_region
        %s1010 = sshra.s32 1, 3
        %p1011 = scmp.gt.s32.totalorder %s1010, 0
        // Predicated region
        $region138: #{custom-call.11} parent=136 // pred_check
          %p1012 = pneg %p1011
        $region139: #{custom-call.11} parent=136 // pred_check_branch
          %1014 = sbr.rel (%p1012) target = $region141
        $region140: #{custom-call.11} parent=136 // pred_region
          %s1015 = ssub.s32 %s1010, 1
          %s1016 = smul.u32 %s1015, 128
          %s1017 = sshra.s32 %s1016, 4
          %s1018 = scalar_lea.vmem [#allocation11], %s1017
          %v1019 = vld [vmem:[#allocation11] sm:$0xff]
          // While loop
          $region142: #{custom-call.11} parent=140 // loop_pre_header
            _
          $region143: #{custom-call.11} parent=140 // loop_header
            %s1020 = sphi [#allocation11], %s1042
            %s1021 = sphi %s5, %s1043
            %v1022 = vphi %v1019, %v1044
            %s1023 = ssub.s32 %s1018, 64
            %p1024 = scmp.gt.s32.totalorder %s1020, %s1023
          $region144: #{custom-call.11} parent=140 // loop_header_branch
            %1026 = sbr.rel (%p1024) target = $region148
          $region145: #{custom-call.11} parent=140 // loop_body
            %1027 = vst [vmem:[%s1021] sm:$0xff] %v1022
            %v1028 = vld [vmem:[%s1020 + $0x8] sm:$0xff]
            %1029 = vst [vmem:[%s1021 + $0x8] sm:$0xff] %v1028
            %v1030 = vld [vmem:[%s1020 + $0x10] sm:$0xff]
            %1031 = vst [vmem:[%s1021 + $0x10] sm:$0xff] %v1030
            %v1032 = vld [vmem:[%s1020 + $0x18] sm:$0xff]
            %1033 = vst [vmem:[%s1021 + $0x18] sm:$0xff] %v1032
            %v1034 = vld [vmem:[%s1020 + $0x20] sm:$0xff]
            %1035 = vst [vmem:[%s1021 + $0x20] sm:$0xff] %v1034
            %v1036 = vld [vmem:[%s1020 + $0x28] sm:$0xff]
            %1037 = vst [vmem:[%s1021 + $0x28] sm:$0xff] %v1036
            %v1038 = vld [vmem:[%s1020 + $0x30] sm:$0xff]
            %1039 = vst [vmem:[%s1021 + $0x30] sm:$0xff] %v1038
            %v1040 = vld [vmem:[%s1020 + $0x38] sm:$0xff]
            %1041 = vst [vmem:[%s1021 + $0x38] sm:$0xff] %v1040
          $region146: #{custom-call.11} parent=140 // loop_footer
            %s1042 = scalar_lea.vmem %s1020, 64
            %s1043 = scalar_lea.vmem %s1021, 64
            %v1044 = vld [vmem:[%s1020 + $0x40] sm:$0xff]
          $region147: #{custom-call.11} parent=140 // loop_footer_branch
            %1045 = sbr.rel target = $region143
          $region148: #{custom-call.11} parent=140 // loop_exit
            _
          // While loop
          $region149: #{custom-call.11} parent=140 // loop_pre_header
            _
          $region150: #{custom-call.11} parent=140 // loop_header
            %s1046 = sphi %s1020, %s1054
            %s1047 = sphi %s1021, %s1055
            %v1048 = vphi %v1022, %v1048
            %p1049 = scmp.gt.s32.totalorder %s1046, %s1018
          $region151: #{custom-call.11} parent=140 // loop_header_branch
            %1051 = sbr.rel (%p1049) target = $region155
          $region152: #{custom-call.11} parent=140 // loop_body
            %v1052 = vld [vmem:[%s1046] sm:$0xff]
            %1053 = vst [vmem:[%s1047] sm:$0xff] %v1052
          $region153: #{custom-call.11} parent=140 // loop_footer
            %s1054 = scalar_lea.vmem %s1046, 8
            %s1055 = scalar_lea.vmem %s1047, 8
          $region154: #{custom-call.11} parent=140 // loop_footer_branch
            %1056 = sbr.rel target = $region150
          $region155: #{custom-call.11} parent=140 // loop_exit
            _
        $region141: #{custom-call.11} parent=136 // pred_fallthru
          _
        %s1057 = sand.u32 1, 7
        %s1058 = sshllo.u32 0, %s1057
        %s1059 = smul.u32 %s1010, 128
        %s1060 = sshra.s32 %s1059, 4
        %s1061 = scalar_lea.vmem %s5, %s1060
        %s1062 = smul.u32 %s1010, 128
        %s1063 = sshra.s32 %s1062, 4
        %s1064 = scalar_lea.vmem [#allocation11], %s1063
        %v1065 = vld [vmem:[%s1064] sm:%s1058]
        %1066 = vst [vmem:[%s1061] sm:%s1058] %v1065
      $region137: #{custom-call.11} parent=132 // pred_fallthru
        _
    $region133: #{custom-call.11} parent=1 // pred_fallthru
      _
    %p1068 = scmp.gt.s32.totalorder 4, 0
    // Predicated region
    $region156: #{custom-call.11} parent=1 // pred_check
      %p1069 = pneg %p1068
    $region157: #{custom-call.11} parent=1 // pred_check_branch
      %1071 = sbr.rel (%p1069) target = $region159
    $region158: #{custom-call.11} parent=1 // pred_region
      %s1072 = sshra.s32 4, 3
      %p1073 = scmp.gt.s32.totalorder %s1072, 0
      // Predicated region
      $region160: #{custom-call.11} parent=158 // pred_check
        %p1074 = pneg %p1073
      $region161: #{custom-call.11} parent=158 // pred_check_branch
        %1076 = sbr.rel (%p1074) target = $region163
      $region162: #{custom-call.11} parent=158 // pred_region
        %s1077 = ssub.s32 %s1072, 1
        %s1078 = smul.u32 %s1077, 128
        %s1079 = sshra.s32 %s1078, 4
        %s1080 = scalar_lea.vmem [#allocation13], %s1079
        %v1081 = vld [vmem:[#allocation13] sm:$0xff]
        // While loop
        $region164: #{custom-call.11} parent=162 // loop_pre_header
          _
        $region165: #{custom-call.11} parent=162 // loop_header
          %s1082 = sphi [#allocation13], %s1104
          %s1083 = sphi %s6, %s1105
          %v1084 = vphi %v1081, %v1106
          %s1085 = ssub.s32 %s1080, 64
          %p1086 = scmp.gt.s32.totalorder %s1082, %s1085
        $region166: #{custom-call.11} parent=162 // loop_header_branch
          %1088 = sbr.rel (%p1086) target = $region170
        $region167: #{custom-call.11} parent=162 // loop_body
          %1089 = vst [vmem:[%s1083] sm:$0xff] %v1084
          %v1090 = vld [vmem:[%s1082 + $0x8] sm:$0xff]
          %1091 = vst [vmem:[%s1083 + $0x8] sm:$0xff] %v1090
          %v1092 = vld [vmem:[%s1082 + $0x10] sm:$0xff]
          %1093 = vst [vmem:[%s1083 + $0x10] sm:$0xff] %v1092
          %v1094 = vld [vmem:[%s1082 + $0x18] sm:$0xff]
          %1095 = vst [vmem:[%s1083 + $0x18] sm:$0xff] %v1094
          %v1096 = vld [vmem:[%s1082 + $0x20] sm:$0xff]
          %1097 = vst [vmem:[%s1083 + $0x20] sm:$0xff] %v1096
          %v1098 = vld [vmem:[%s1082 + $0x28] sm:$0xff]
          %1099 = vst [vmem:[%s1083 + $0x28] sm:$0xff] %v1098
          %v1100 = vld [vmem:[%s1082 + $0x30] sm:$0xff]
          %1101 = vst [vmem:[%s1083 + $0x30] sm:$0xff] %v1100
          %v1102 = vld [vmem:[%s1082 + $0x38] sm:$0xff]
          %1103 = vst [vmem:[%s1083 + $0x38] sm:$0xff] %v1102
        $region168: #{custom-call.11} parent=162 // loop_footer
          %s1104 = scalar_lea.vmem %s1082, 64
          %s1105 = scalar_lea.vmem %s1083, 64
          %v1106 = vld [vmem:[%s1082 + $0x40] sm:$0xff]
        $region169: #{custom-call.11} parent=162 // loop_footer_branch
          %1107 = sbr.rel target = $region165
        $region170: #{custom-call.11} parent=162 // loop_exit
          _
        // While loop
        $region171: #{custom-call.11} parent=162 // loop_pre_header
          _
        $region172: #{custom-call.11} parent=162 // loop_header
          %s1108 = sphi %s1082, %s1116
          %s1109 = sphi %s1083, %s1117
          %v1110 = vphi %v1084, %v1110
          %p1111 = scmp.gt.s32.totalorder %s1108, %s1080
        $region173: #{custom-call.11} parent=162 // loop_header_branch
          %1113 = sbr.rel (%p1111) target = $region177
        $region174: #{custom-call.11} parent=162 // loop_body
          %v1114 = vld [vmem:[%s1108] sm:$0xff]
          %1115 = vst [vmem:[%s1109] sm:$0xff] %v1114
        $region175: #{custom-call.11} parent=162 // loop_footer
          %s1116 = scalar_lea.vmem %s1108, 8
          %s1117 = scalar_lea.vmem %s1109, 8
        $region176: #{custom-call.11} parent=162 // loop_footer_branch
          %1118 = sbr.rel target = $region172
        $region177: #{custom-call.11} parent=162 // loop_exit
          _
      $region163: #{custom-call.11} parent=158 // pred_fallthru
        _
      %s1119 = sand.u32 4, 7
      %s1120 = sshllo.u32 0, %s1119
      %s1121 = smul.u32 %s1072, 128
      %s1122 = sshra.s32 %s1121, 4
      %s1123 = scalar_lea.vmem %s6, %s1122
      %s1124 = smul.u32 %s1072, 128
      %s1125 = sshra.s32 %s1124, 4
      %s1126 = scalar_lea.vmem [#allocation13], %s1125
      %v1127 = vld [vmem:[%s1126] sm:%s1120]
      %1128 = vst [vmem:[%s1123] sm:%s1120] %v1127
    $region159: #{custom-call.11} parent=1 // pred_fallthru
      _
    %p1130 = scmp.gt.s32.totalorder 4, 0
    // Predicated region
    $region178: #{custom-call.11} parent=1 // pred_check
      %p1131 = pneg %p1130
    $region179: #{custom-call.11} parent=1 // pred_check_branch
      %1133 = sbr.rel (%p1131) target = $region181
    $region180: #{custom-call.11} parent=1 // pred_region
      %s1134 = sshra.s32 4, 3
      %p1135 = scmp.gt.s32.totalorder %s1134, 0
      // Predicated region
      $region182: #{custom-call.11} parent=180 // pred_check
        %p1136 = pneg %p1135
      $region183: #{custom-call.11} parent=180 // pred_check_branch
        %1138 = sbr.rel (%p1136) target = $region185
      $region184: #{custom-call.11} parent=180 // pred_region
        %s1139 = ssub.s32 %s1134, 1
        %s1140 = smul.u32 %s1139, 128
        %s1141 = sshra.s32 %s1140, 4
        %s1142 = scalar_lea.vmem [#allocation15], %s1141
        %v1143 = vld [vmem:[#allocation15] sm:$0xff]
        // While loop
        $region186: #{custom-call.11} parent=184 // loop_pre_header
          _
        $region187: #{custom-call.11} parent=184 // loop_header
          %s1144 = sphi [#allocation15], %s1166
          %s1145 = sphi %s7, %s1167
          %v1146 = vphi %v1143, %v1168
          %s1147 = ssub.s32 %s1142, 64
          %p1148 = scmp.gt.s32.totalorder %s1144, %s1147
        $region188: #{custom-call.11} parent=184 // loop_header_branch
          %1150 = sbr.rel (%p1148) target = $region192
        $region189: #{custom-call.11} parent=184 // loop_body
          %1151 = vst [vmem:[%s1145] sm:$0xff] %v1146
          %v1152 = vld [vmem:[%s1144 + $0x8] sm:$0xff]
          %1153 = vst [vmem:[%s1145 + $0x8] sm:$0xff] %v1152
          %v1154 = vld [vmem:[%s1144 + $0x10] sm:$0xff]
          %1155 = vst [vmem:[%s1145 + $0x10] sm:$0xff] %v1154
          %v1156 = vld [vmem:[%s1144 + $0x18] sm:$0xff]
          %1157 = vst [vmem:[%s1145 + $0x18] sm:$0xff] %v1156
          %v1158 = vld [vmem:[%s1144 + $0x20] sm:$0xff]
          %1159 = vst [vmem:[%s1145 + $0x20] sm:$0xff] %v1158
          %v1160 = vld [vmem:[%s1144 + $0x28] sm:$0xff]
          %1161 = vst [vmem:[%s1145 + $0x28] sm:$0xff] %v1160
          %v1162 = vld [vmem:[%s1144 + $0x30] sm:$0xff]
          %1163 = vst [vmem:[%s1145 + $0x30] sm:$0xff] %v1162
          %v1164 = vld [vmem:[%s1144 + $0x38] sm:$0xff]
          %1165 = vst [vmem:[%s1145 + $0x38] sm:$0xff] %v1164
        $region190: #{custom-call.11} parent=184 // loop_footer
          %s1166 = scalar_lea.vmem %s1144, 64
          %s1167 = scalar_lea.vmem %s1145, 64
          %v1168 = vld [vmem:[%s1144 + $0x40] sm:$0xff]
        $region191: #{custom-call.11} parent=184 // loop_footer_branch
          %1169 = sbr.rel target = $region187
        $region192: #{custom-call.11} parent=184 // loop_exit
          _
        // While loop
        $region193: #{custom-call.11} parent=184 // loop_pre_header
          _
        $region194: #{custom-call.11} parent=184 // loop_header
          %s1170 = sphi %s1144, %s1178
          %s1171 = sphi %s1145, %s1179
          %v1172 = vphi %v1146, %v1172
          %p1173 = scmp.gt.s32.totalorder %s1170, %s1142
        $region195: #{custom-call.11} parent=184 // loop_header_branch
          %1175 = sbr.rel (%p1173) target = $region199
        $region196: #{custom-call.11} parent=184 // loop_body
          %v1176 = vld [vmem:[%s1170] sm:$0xff]
          %1177 = vst [vmem:[%s1171] sm:$0xff] %v1176
        $region197: #{custom-call.11} parent=184 // loop_footer
          %s1178 = scalar_lea.vmem %s1170, 8
          %s1179 = scalar_lea.vmem %s1171, 8
        $region198: #{custom-call.11} parent=184 // loop_footer_branch
          %1180 = sbr.rel target = $region194
        $region199: #{custom-call.11} parent=184 // loop_exit
          _
      $region185: #{custom-call.11} parent=180 // pred_fallthru
        _
      %s1181 = sand.u32 4, 7
      %s1182 = sshllo.u32 0, %s1181
      %s1183 = smul.u32 %s1134, 128
      %s1184 = sshra.s32 %s1183, 4
      %s1185 = scalar_lea.vmem %s7, %s1184
      %s1186 = smul.u32 %s1134, 128
      %s1187 = sshra.s32 %s1186, 4
      %s1188 = scalar_lea.vmem [#allocation15], %s1187
      %v1189 = vld [vmem:[%s1188] sm:%s1182]
      %1190 = vst [vmem:[%s1185] sm:%s1182] %v1189
    $region181: #{custom-call.11} parent=1 // pred_fallthru
      _
    %p1192 = scmp.gt.s32.totalorder 4, 0
    // Predicated region
    $region200: #{custom-call.11} parent=1 // pred_check
      %p1193 = pneg %p1192
    $region201: #{custom-call.11} parent=1 // pred_check_branch
      %1195 = sbr.rel (%p1193) target = $region203
    $region202: #{custom-call.11} parent=1 // pred_region
      %s1196 = sshra.s32 4, 3
      %p1197 = scmp.gt.s32.totalorder %s1196, 0
      // Predicated region
      $region204: #{custom-call.11} parent=202 // pred_check
        %p1198 = pneg %p1197
      $region205: #{custom-call.11} parent=202 // pred_check_branch
        %1200 = sbr.rel (%p1198) target = $region207
      $region206: #{custom-call.11} parent=202 // pred_region
        %s1201 = ssub.s32 %s1196, 1
        %s1202 = smul.u32 %s1201, 128
        %s1203 = sshra.s32 %s1202, 4
        %s1204 = scalar_lea.vmem [#allocation17], %s1203
        %v1205 = vld [vmem:[#allocation17] sm:$0xff]
        // While loop
        $region208: #{custom-call.11} parent=206 // loop_pre_header
          _
        $region209: #{custom-call.11} parent=206 // loop_header
          %s1206 = sphi [#allocation17], %s1228
          %s1207 = sphi %s8, %s1229
          %v1208 = vphi %v1205, %v1230
          %s1209 = ssub.s32 %s1204, 64
          %p1210 = scmp.gt.s32.totalorder %s1206, %s1209
        $region210: #{custom-call.11} parent=206 // loop_header_branch
          %1212 = sbr.rel (%p1210) target = $region214
        $region211: #{custom-call.11} parent=206 // loop_body
          %1213 = vst [vmem:[%s1207] sm:$0xff] %v1208
          %v1214 = vld [vmem:[%s1206 + $0x8] sm:$0xff]
          %1215 = vst [vmem:[%s1207 + $0x8] sm:$0xff] %v1214
          %v1216 = vld [vmem:[%s1206 + $0x10] sm:$0xff]
          %1217 = vst [vmem:[%s1207 + $0x10] sm:$0xff] %v1216
          %v1218 = vld [vmem:[%s1206 + $0x18] sm:$0xff]
          %1219 = vst [vmem:[%s1207 + $0x18] sm:$0xff] %v1218
          %v1220 = vld [vmem:[%s1206 + $0x20] sm:$0xff]
          %1221 = vst [vmem:[%s1207 + $0x20] sm:$0xff] %v1220
          %v1222 = vld [vmem:[%s1206 + $0x28] sm:$0xff]
          %1223 = vst [vmem:[%s1207 + $0x28] sm:$0xff] %v1222
          %v1224 = vld [vmem:[%s1206 + $0x30] sm:$0xff]
          %1225 = vst [vmem:[%s1207 + $0x30] sm:$0xff] %v1224
          %v1226 = vld [vmem:[%s1206 + $0x38] sm:$0xff]
          %1227 = vst [vmem:[%s1207 + $0x38] sm:$0xff] %v1226
        $region212: #{custom-call.11} parent=206 // loop_footer
          %s1228 = scalar_lea.vmem %s1206, 64
          %s1229 = scalar_lea.vmem %s1207, 64
          %v1230 = vld [vmem:[%s1206 + $0x40] sm:$0xff]
        $region213: #{custom-call.11} parent=206 // loop_footer_branch
          %1231 = sbr.rel target = $region209
        $region214: #{custom-call.11} parent=206 // loop_exit
          _
        // While loop
        $region215: #{custom-call.11} parent=206 // loop_pre_header
          _
        $region216: #{custom-call.11} parent=206 // loop_header
          %s1232 = sphi %s1206, %s1240
          %s1233 = sphi %s1207, %s1241
          %v1234 = vphi %v1208, %v1234
          %p1235 = scmp.gt.s32.totalorder %s1232, %s1204
        $region217: #{custom-call.11} parent=206 // loop_header_branch
          %1237 = sbr.rel (%p1235) target = $region221
        $region218: #{custom-call.11} parent=206 // loop_body
          %v1238 = vld [vmem:[%s1232] sm:$0xff]
          %1239 = vst [vmem:[%s1233] sm:$0xff] %v1238
        $region219: #{custom-call.11} parent=206 // loop_footer
          %s1240 = scalar_lea.vmem %s1232, 8
          %s1241 = scalar_lea.vmem %s1233, 8
        $region220: #{custom-call.11} parent=206 // loop_footer_branch
          %1242 = sbr.rel target = $region216
        $region221: #{custom-call.11} parent=206 // loop_exit
          _
      $region207: #{custom-call.11} parent=202 // pred_fallthru
        _
      %s1243 = sand.u32 4, 7
      %s1244 = sshllo.u32 0, %s1243
      %s1245 = smul.u32 %s1196, 128
      %s1246 = sshra.s32 %s1245, 4
      %s1247 = scalar_lea.vmem %s8, %s1246
      %s1248 = smul.u32 %s1196, 128
      %s1249 = sshra.s32 %s1248, 4
      %s1250 = scalar_lea.vmem [#allocation17], %s1249
      %v1251 = vld [vmem:[%s1250] sm:%s1244]
      %1252 = vst [vmem:[%s1247] sm:%s1244] %v1251
    $region203: #{custom-call.11} parent=1 // pred_fallthru
      _
    %p1254 = scmp.gt.s32.totalorder 4, 0
    // Predicated region
    $region222: #{custom-call.11} parent=1 // pred_check
      %p1255 = pneg %p1254
    $region223: #{custom-call.11} parent=1 // pred_check_branch
      %1257 = sbr.rel (%p1255) target = $region225
    $region224: #{custom-call.11} parent=1 // pred_region
      %s1258 = sshra.s32 4, 3
      %p1259 = scmp.gt.s32.totalorder %s1258, 0
      // Predicated region
      $region226: #{custom-call.11} parent=224 // pred_check
        %p1260 = pneg %p1259
      $region227: #{custom-call.11} parent=224 // pred_check_branch
        %1262 = sbr.rel (%p1260) target = $region229
      $region228: #{custom-call.11} parent=224 // pred_region
        %s1263 = ssub.s32 %s1258, 1
        %s1264 = smul.u32 %s1263, 128
        %s1265 = sshra.s32 %s1264, 4
        %s1266 = scalar_lea.vmem [#allocation19], %s1265
        %v1267 = vld [vmem:[#allocation19] sm:$0xff]
        // While loop
        $region230: #{custom-call.11} parent=228 // loop_pre_header
          _
        $region231: #{custom-call.11} parent=228 // loop_header
          %s1268 = sphi [#allocation19], %s1290
          %s1269 = sphi %s9, %s1291
          %v1270 = vphi %v1267, %v1292
          %s1271 = ssub.s32 %s1266, 64
          %p1272 = scmp.gt.s32.totalorder %s1268, %s1271
        $region232: #{custom-call.11} parent=228 // loop_header_branch
          %1274 = sbr.rel (%p1272) target = $region236
        $region233: #{custom-call.11} parent=228 // loop_body
          %1275 = vst [vmem:[%s1269] sm:$0xff] %v1270
          %v1276 = vld [vmem:[%s1268 + $0x8] sm:$0xff]
          %1277 = vst [vmem:[%s1269 + $0x8] sm:$0xff] %v1276
          %v1278 = vld [vmem:[%s1268 + $0x10] sm:$0xff]
          %1279 = vst [vmem:[%s1269 + $0x10] sm:$0xff] %v1278
          %v1280 = vld [vmem:[%s1268 + $0x18] sm:$0xff]
          %1281 = vst [vmem:[%s1269 + $0x18] sm:$0xff] %v1280
          %v1282 = vld [vmem:[%s1268 + $0x20] sm:$0xff]
          %1283 = vst [vmem:[%s1269 + $0x20] sm:$0xff] %v1282
          %v1284 = vld [vmem:[%s1268 + $0x28] sm:$0xff]
          %1285 = vst [vmem:[%s1269 + $0x28] sm:$0xff] %v1284
          %v1286 = vld [vmem:[%s1268 + $0x30] sm:$0xff]
          %1287 = vst [vmem:[%s1269 + $0x30] sm:$0xff] %v1286
          %v1288 = vld [vmem:[%s1268 + $0x38] sm:$0xff]
          %1289 = vst [vmem:[%s1269 + $0x38] sm:$0xff] %v1288
        $region234: #{custom-call.11} parent=228 // loop_footer
          %s1290 = scalar_lea.vmem %s1268, 64
          %s1291 = scalar_lea.vmem %s1269, 64
          %v1292 = vld [vmem:[%s1268 + $0x40] sm:$0xff]
        $region235: #{custom-call.11} parent=228 // loop_footer_branch
          %1293 = sbr.rel target = $region231
        $region236: #{custom-call.11} parent=228 // loop_exit
          _
        // While loop
        $region237: #{custom-call.11} parent=228 // loop_pre_header
          _
        $region238: #{custom-call.11} parent=228 // loop_header
          %s1294 = sphi %s1268, %s1302
          %s1295 = sphi %s1269, %s1303
          %v1296 = vphi %v1270, %v1296
          %p1297 = scmp.gt.s32.totalorder %s1294, %s1266
        $region239: #{custom-call.11} parent=228 // loop_header_branch
          %1299 = sbr.rel (%p1297) target = $region243
        $region240: #{custom-call.11} parent=228 // loop_body
          %v1300 = vld [vmem:[%s1294] sm:$0xff]
          %1301 = vst [vmem:[%s1295] sm:$0xff] %v1300
        $region241: #{custom-call.11} parent=228 // loop_footer
          %s1302 = scalar_lea.vmem %s1294, 8
          %s1303 = scalar_lea.vmem %s1295, 8
        $region242: #{custom-call.11} parent=228 // loop_footer_branch
          %1304 = sbr.rel target = $region238
        $region243: #{custom-call.11} parent=228 // loop_exit
          _
      $region229: #{custom-call.11} parent=224 // pred_fallthru
        _
      %s1305 = sand.u32 4, 7
      %s1306 = sshllo.u32 0, %s1305
      %s1307 = smul.u32 %s1258, 128
      %s1308 = sshra.s32 %s1307, 4
      %s1309 = scalar_lea.vmem %s9, %s1308
      %s1310 = smul.u32 %s1258, 128
      %s1311 = sshra.s32 %s1310, 4
      %s1312 = scalar_lea.vmem [#allocation19], %s1311
      %v1313 = vld [vmem:[%s1312] sm:%s1306]
      %1314 = vst [vmem:[%s1309] sm:%s1306] %v1313
    $region225: #{custom-call.11} parent=1 // pred_fallthru
      _
    // Predicated region
    $region244: #{custom-call.11} parent=1 // pred_check
      _
    $region245: #{custom-call.11} parent=1 // pred_check_branch
      %1316 = sbr.rel (0) target = $region247
    $region246: #{custom-call.11} parent=1 // pred_region
      _
    $region247: #{custom-call.11} parent=1 // pred_fallthru
      _
    // Predicated region
    $region248: #{custom-call.11} parent=1 // pred_check
      _
    $region249: #{custom-call.11} parent=1 // pred_check_branch
      %1318 = sbr.rel (0) target = $region251
    $region250: #{custom-call.11} parent=1 // pred_region
      _
    $region251: #{custom-call.11} parent=1 // pred_fallthru
      _

// kernel: fast_hyde_forward.2
$region0: #{fast_hyde_forward.2}
  #allocation0 [shape = 'u32[]', space=smem, size = 0x4, offset = 0x4, fixed_abs, tag = 'smem constant byte address 0x4 - core index']
  #allocation1 [shape = 'u32[144,128]{1,0:T(1,128)}', space=vmem, size = 0x12000, scoped, tag = 'internal scratch']
  %s0 = inlined_call_operand.vmem [shape: f32[256,8], index: 0, kind: input, shape index: {}]
  %s1 = inlined_call_operand.vmem [shape: f32[1,1,8], index: 1, kind: output, shape index: {0}]
  %s2 = inlined_call_operand.vmem [shape: f32[1,1,8], index: 2, kind: output, shape index: {1}]
  %s3 = inlined_call_operand.vmem [shape: f32[1,1,8], index: 3, kind: output, shape index: {2}]
  %s4 = inlined_call_operand.vmem [shape: f32[1,8,8], index: 4, kind: output, shape index: {3}]
  %5 = xla_tuple %s1, %s2, %s3, %s4
  %s6 = sld [smem:[#allocation0]]
  $region42: #{fast_hyde_forward.2} parent=0
    _
  %s8 = ssub.s32 1, %s6
  %s9 = scalar_select 0, %s8, %s6
  // Predicated region
  $region2: #{fast_hyde_forward.2} parent=0 // pred_check
    _
  $region3: #{fast_hyde_forward.2} parent=0 // pred_check_branch
    %11 = sbr.rel (0) target = $region5
  $region4: #{fast_hyde_forward.2} parent=0 // pred_region
    %s12 = sadd.s32 0, 0
    %p13 = scmp.lt.s32.totalorder %s12, 0
    %s14 = scalar_select %p13, %s12, 0
    %s15 = smul.u32 32, %s14
    %p16 = scmp.lt.s32.totalorder %s15, 31
    %s17 = scalar_select %p16, %s15, 31
    %s18 = smul.addr %s17, 8
    %s19 = scalar_lea.vmem %s0, %s18
    %s20 = sadd.s32 0, 0
    %p21 = scmp.lt.s32.totalorder %s20, 0
    %s22 = scalar_select %p21, %s20, 0
    %s23 = smul.u32 32, %s22
  $region5: #{fast_hyde_forward.2} parent=0 // pred_fallthru
    _
  %s24 = sadd.s32 0, 0
  %p25 = scmp.lt.s32.totalorder %s24, 0
  %s26 = scalar_select %p25, %s24, 0
  %s27 = smul.u32 32, %s26
  %p28 = scmp.lt.s32.totalorder %s27, 31
  %s29 = scalar_select %p28, %s27, 31
  %s30 = smul.addr %s29, 8
  %s31 = scalar_lea.vmem %s0, %s30
  %s32 = sadd.s32 0, 0
  %p33 = scmp.lt.s32.totalorder %s32, 0
  %s34 = scalar_select %p33, %s32, 0
  %s35 = smul.u32 32, %s34
  %p36 = scmp.lt.s32.totalorder %s35, 31
  %s37 = scalar_select %p36, %s35, 31
  %s38 = smul.addr %s37, 8
  %s39 = scalar_lea.vmem %s0, %s38
  %s40 = sadd.s32 0, 0
  %p41 = scmp.lt.s32.totalorder %s40, 0
  %s42 = scalar_select %p41, %s40, 0
  %s43 = smul.u32 32, %s42
  %p44 = scmp.eq.s32.totalorder 0, 0
  // Predicated region
  $region6: #{fast_hyde_forward.2} parent=0 // pred_check
    %p45 = pneg %p44
  $region7: #{fast_hyde_forward.2} parent=0 // pred_check_branch
    %47 = sbr.rel (%p45) target = $region9
  $region8: #{fast_hyde_forward.2} parent=0 // pred_region
    %vm48 = vcmask 57344
    %49 = vst.msk [vmem:[%s1] sm:$0x1] %vm48, inf
    %50 = vst.msk [vmem:[%s2] sm:$0x1] %vm48, -inf
    %51 = vst.msk [vmem:[%s3] sm:$0x1] %vm48, 0.0
    %vm52 = vcmask 64512
    %53 = vst.msk [vmem:[%s4] sm:$0xff] %vm52, 0.0
  $region9: #{fast_hyde_forward.2} parent=0 // pred_fallthru
    _
  %v54 = vld [vmem:[%s39] sm:$0xff]
  %v55 = vld [vmem:[%s39 + $0x8] sm:$0xff]
  %v56 = vld [vmem:[%s39 + $0x10] sm:$0xff]
  %v57 = vld [vmem:[%s39 + $0x18] sm:$0xff]
  %v58 = vld [vmem:[%s39 + $0x20] sm:$0xff]
  %v59 = vld [vmem:[%s39 + $0x28] sm:$0xff]
  %v60 = vld [vmem:[%s39 + $0x30] sm:$0xff]
  %v61 = vld [vmem:[%s39 + $0x38] sm:$0xff]
  %v62 = vld [vmem:[%s39 + $0x40] sm:$0xff]
  %v63 = vld [vmem:[%s39 + $0x48] sm:$0xff]
  %v64 = vld [vmem:[%s39 + $0x50] sm:$0xff]
  %v65 = vld [vmem:[%s39 + $0x58] sm:$0xff]
  %v66 = vld [vmem:[%s39 + $0x60] sm:$0xff]
  %v67 = vld [vmem:[%s39 + $0x68] sm:$0xff]
  %v68 = vld [vmem:[%s39 + $0x70] sm:$0xff]
  %v69 = vld [vmem:[%s39 + $0x78] sm:$0xff]
  %v70 = vld [vmem:[%s39 + $0x80] sm:$0xff]
  %v71 = vld [vmem:[%s39 + $0x88] sm:$0xff]
  %v72 = vld [vmem:[%s39 + $0x90] sm:$0xff]
  %v73 = vld [vmem:[%s39 + $0x98] sm:$0xff]
  %v74 = vld [vmem:[%s39 + $0xa0] sm:$0xff]
  %v75 = vld [vmem:[%s39 + $0xa8] sm:$0xff]
  %v76 = vld [vmem:[%s39 + $0xb0] sm:$0xff]
  %v77 = vld [vmem:[%s39 + $0xb8] sm:$0xff]
  %v78 = vld [vmem:[%s39 + $0xc0] sm:$0xff]
  %v79 = vld [vmem:[%s39 + $0xc8] sm:$0xff]
  %v80 = vld [vmem:[%s39 + $0xd0] sm:$0xff]
  %v81 = vld [vmem:[%s39 + $0xd8] sm:$0xff]
  %v82 = vld [vmem:[%s39 + $0xe0] sm:$0xff]
  %v83 = vld [vmem:[%s39 + $0xe8] sm:$0xff]
  %v84 = vld [vmem:[%s39 + $0xf0] sm:$0xff]
  %v85 = vld [vmem:[%s39 + $0xf8] sm:$0xff]
  %v86 = vld [vmem:[%s1] sm:$0x1]
  %vm87 = vcmask 64512
  %v88 = vsel %vm87, %v54, inf
  %v89 = vsel %vm87, %v55, inf
  %v90 = vsel %vm87, %v56, inf
  %v91 = vsel %vm87, %v57, inf
  %v92 = vsel %vm87, %v58, inf
  %v93 = vmin.f32 %v88, %v92
  %v94 = vsel %vm87, %v59, inf
  %v95 = vmin.f32 %v89, %v94
  %v96 = vsel %vm87, %v60, inf
  %v97 = vmin.f32 %v90, %v96
  %v98 = vsel %vm87, %v61, inf
  %v99 = vmin.f32 %v91, %v98
  %v100 = vsel %vm87, %v62, inf
  %v101 = vmin.f32 %v93, %v100
  %v102 = vsel %vm87, %v63, inf
  %v103 = vmin.f32 %v95, %v102
  %v104 = vsel %vm87, %v64, inf
  %v105 = vmin.f32 %v97, %v104
  %v106 = vsel %vm87, %v65, inf
  %v107 = vmin.f32 %v99, %v106
  %v108 = vsel %vm87, %v66, inf
  %v109 = vmin.f32 %v101, %v108
  %v110 = vsel %vm87, %v67, inf
  %v111 = vmin.f32 %v103, %v110
  %v112 = vsel %vm87, %v68, inf
  %v113 = vmin.f32 %v105, %v112
  %v114 = vsel %vm87, %v69, inf
  %v115 = vmin.f32 %v107, %v114
  %v116 = vsel %vm87, %v70, inf
  %v117 = vmin.f32 %v109, %v116
  %v118 = vsel %vm87, %v71, inf
  %v119 = vmin.f32 %v111, %v118
  %v120 = vsel %vm87, %v72, inf
  %v121 = vmin.f32 %v113, %v120
  %v122 = vsel %vm87, %v73, inf
  %v123 = vmin.f32 %v115, %v122
  %v124 = vsel %vm87, %v74, inf
  %v125 = vmin.f32 %v117, %v124
  %v126 = vsel %vm87, %v75, inf
  %v127 = vmin.f32 %v119, %v126
  %v128 = vsel %vm87, %v76, inf
  %v129 = vmin.f32 %v121, %v128
  %v130 = vsel %vm87, %v77, inf
  %v131 = vmin.f32 %v123, %v130
  %v132 = vsel %vm87, %v78, inf
  %v133 = vmin.f32 %v125, %v132
  %v134 = vsel %vm87, %v79, inf
  %v135 = vmin.f32 %v127, %v134
  %v136 = vsel %vm87, %v80, inf
  %v137 = vmin.f32 %v129, %v136
  %v138 = vsel %vm87, %v81, inf
  %v139 = vmin.f32 %v131, %v138
  %v140 = vsel %vm87, %v82, inf
  %v141 = vmin.f32 %v133, %v140
  %v142 = vsel %vm87, %v83, inf
  %v143 = vmin.f32 %v135, %v142
  %v144 = vsel %vm87, %v84, inf
  %v145 = vmin.f32 %v137, %v144
  %v146 = vsel %vm87, %v85, inf
  %v147 = vmin.f32 %v139, %v146
  %v148 = vmin.f32 %v141, %v143
  %v149 = vmin.f32 %v145, %v147
  %v150 = vmin.f32 %v148, %v149
  %v151 = vrot.slane %v150, 4
  %v152 = vmin.f32 %v150, %v151
  %v153 = vrot.slane %v152, 2
  %v154 = vmin.f32 %v152, %v153
  %v155 = vrot.slane %v154, 1
  %v156 = vmin.f32 %v154, %v155
  %v157 = vmin.f32 %v86, %v156
  %vm158 = vcmask 57344
  %159 = vst.msk [vmem:[%s1] sm:$0x1] %vm158, %v157
  %v160 = vld [vmem:[%s2] sm:$0x1]
  %v161 = vsel %vm87, %v54, -inf
  %v162 = vsel %vm87, %v55, -inf
  %v163 = vsel %vm87, %v56, -inf
  %v164 = vsel %vm87, %v57, -inf
  %v165 = vsel %vm87, %v58, -inf
  %v166 = vmax.f32 %v161, %v165
  %v167 = vsel %vm87, %v59, -inf
  %v168 = vmax.f32 %v162, %v167
  %v169 = vsel %vm87, %v60, -inf
  %v170 = vmax.f32 %v163, %v169
  %v171 = vsel %vm87, %v61, -inf
  %v172 = vmax.f32 %v164, %v171
  %v173 = vsel %vm87, %v62, -inf
  %v174 = vmax.f32 %v166, %v173
  %v175 = vsel %vm87, %v63, -inf
  %v176 = vmax.f32 %v168, %v175
  %v177 = vsel %vm87, %v64, -inf
  %v178 = vmax.f32 %v170, %v177
  %v179 = vsel %vm87, %v65, -inf
  %v180 = vmax.f32 %v172, %v179
  %v181 = vsel %vm87, %v66, -inf
  %v182 = vmax.f32 %v174, %v181
  %v183 = vsel %vm87, %v67, -inf
  %v184 = vmax.f32 %v176, %v183
  %v185 = vsel %vm87, %v68, -inf
  %v186 = vmax.f32 %v178, %v185
  %v187 = vsel %vm87, %v69, -inf
  %v188 = vmax.f32 %v180, %v187
  %v189 = vsel %vm87, %v70, -inf
  %v190 = vmax.f32 %v182, %v189
  %v191 = vsel %vm87, %v71, -inf
  %v192 = vmax.f32 %v184, %v191
  %v193 = vsel %vm87, %v72, -inf
  %v194 = vmax.f32 %v186, %v193
  %v195 = vsel %vm87, %v73, -inf
  %v196 = vmax.f32 %v188, %v195
  %v197 = vsel %vm87, %v74, -inf
  %v198 = vmax.f32 %v190, %v197
  %v199 = vsel %vm87, %v75, -inf
  %v200 = vmax.f32 %v192, %v199
  %v201 = vsel %vm87, %v76, -inf
  %v202 = vmax.f32 %v194, %v201
  %v203 = vsel %vm87, %v77, -inf
  %v204 = vmax.f32 %v196, %v203
  %v205 = vsel %vm87, %v78, -inf
  %v206 = vmax.f32 %v198, %v205
  %v207 = vsel %vm87, %v79, -inf
  %v208 = vmax.f32 %v200, %v207
  %v209 = vsel %vm87, %v80, -inf
  %v210 = vmax.f32 %v202, %v209
  %v211 = vsel %vm87, %v81, -inf
  %v212 = vmax.f32 %v204, %v211
  %v213 = vsel %vm87, %v82, -inf
  %v214 = vmax.f32 %v206, %v213
  %v215 = vsel %vm87, %v83, -inf
  %v216 = vmax.f32 %v208, %v215
  %v217 = vsel %vm87, %v84, -inf
  %v218 = vmax.f32 %v210, %v217
  %v219 = vsel %vm87, %v85, -inf
  %v220 = vmax.f32 %v212, %v219
  %v221 = vmax.f32 %v214, %v216
  %v222 = vmax.f32 %v218, %v220
  %v223 = vmax.f32 %v221, %v222
  %v224 = vrot.slane %v223, 4
  %v225 = vmax.f32 %v223, %v224
  %v226 = vrot.slane %v225, 2
  %v227 = vmax.f32 %v225, %v226
  %v228 = vrot.slane %v227, 1
  %v229 = vmax.f32 %v227, %v228
  %v230 = vmax.f32 %v160, %v229
  %231 = vst.msk [vmem:[%s2] sm:$0x1] %vm158, %v230
  %v232 = vld [vmem:[%s3] sm:$0x1]
  %v233 = vsel %vm87, %v54, 0.0
  %v234 = vsel %vm87, %v55, 0.0
  %v235 = vadd.f32 %v233, %v234
  %v236 = vsel %vm87, %v56, 0.0
  %v237 = vadd.f32 %v235, %v236
  %v238 = vsel %vm87, %v57, 0.0
  %v239 = vadd.f32 %v237, %v238
  %v240 = vsel %vm87, %v58, 0.0
  %v241 = vadd.f32 %v239, %v240
  %v242 = vsel %vm87, %v59, 0.0
  %v243 = vadd.f32 %v241, %v242
  %v244 = vsel %vm87, %v60, 0.0
  %v245 = vadd.f32 %v243, %v244
  %v246 = vsel %vm87, %v61, 0.0
  %v247 = vadd.f32 %v245, %v246
  %v248 = vsel %vm87, %v62, 0.0
  %v249 = vadd.f32 %v247, %v248
  %v250 = vsel %vm87, %v63, 0.0
  %v251 = vadd.f32 %v249, %v250
  %v252 = vsel %vm87, %v64, 0.0
  %v253 = vadd.f32 %v251, %v252
  %v254 = vsel %vm87, %v65, 0.0
  %v255 = vadd.f32 %v253, %v254
  %v256 = vsel %vm87, %v66, 0.0
  %v257 = vadd.f32 %v255, %v256
  %v258 = vsel %vm87, %v67, 0.0
  %v259 = vadd.f32 %v257, %v258
  %v260 = vsel %vm87, %v68, 0.0
  %v261 = vadd.f32 %v259, %v260
  %v262 = vsel %vm87, %v69, 0.0
  %v263 = vadd.f32 %v261, %v262
  %v264 = vsel %vm87, %v70, 0.0
  %v265 = vadd.f32 %v263, %v264
  %v266 = vsel %vm87, %v71, 0.0
  %v267 = vadd.f32 %v265, %v266
  %v268 = vsel %vm87, %v72, 0.0
  %v269 = vadd.f32 %v267, %v268
  %v270 = vsel %vm87, %v73, 0.0
  %v271 = vadd.f32 %v269, %v270
  %v272 = vsel %vm87, %v74, 0.0
  %v273 = vadd.f32 %v271, %v272
  %v274 = vsel %vm87, %v75, 0.0
  %v275 = vadd.f32 %v273, %v274
  %v276 = vsel %vm87, %v76, 0.0
  %v277 = vadd.f32 %v275, %v276
  %v278 = vsel %vm87, %v77, 0.0
  %v279 = vadd.f32 %v277, %v278
  %v280 = vsel %vm87, %v78, 0.0
  %v281 = vadd.f32 %v279, %v280
  %v282 = vsel %vm87, %v79, 0.0
  %v283 = vadd.f32 %v281, %v282
  %v284 = vsel %vm87, %v80, 0.0
  %v285 = vadd.f32 %v283, %v284
  %v286 = vsel %vm87, %v81, 0.0
  %v287 = vadd.f32 %v285, %v286
  %v288 = vsel %vm87, %v82, 0.0
  %v289 = vadd.f32 %v287, %v288
  %v290 = vsel %vm87, %v83, 0.0
  %v291 = vadd.f32 %v289, %v290
  %v292 = vsel %vm87, %v84, 0.0
  %v293 = vadd.f32 %v291, %v292
  %v294 = vsel %vm87, %v85, 0.0
  %v295 = vadd.f32 %v293, %v294
  %v296 = vrot.slane %v295, 4
  %v297 = vadd.f32 %v295, %v296
  %v298 = vrot.slane %v297, 2
  %v299 = vadd.f32 %v297, %v298
  %v300 = vrot.slane %v299, 1
  %v301 = vadd.f32 %v299, %v300
  %v302 = vadd.f32 %v232, %v301
  %303 = vst.msk [vmem:[%s3] sm:$0x1] %vm158, %v302
  %v304 = vld [vmem:[%s4] sm:$0xff]
  %305 = vxpose.xlu0.b32.start [1/16] %v54, 128
  %306 = vxpose.xlu0.b32.cont [2/16] %v55, 128
  %307 = vxpose.xlu0.b32.cont [3/16] %v56, 128
  %308 = vxpose.xlu0.b32.cont [4/16] %v57, 128
  %309 = vxpose.xlu0.b32.cont [5/16] %v58, 128
  %310 = vxpose.xlu0.b32.cont [6/16] %v59, 128
  %311 = vxpose.xlu0.b32.cont [7/16] %v60, 128
  %312 = vxpose.xlu0.b32.cont [8/16] %v61, 128
  %313 = vxpose.xlu0.b32.cont [9/16] %v62, 128
  %314 = vxpose.xlu0.b32.cont [10/16] %v63, 128
  %315 = vxpose.xlu0.b32.cont [11/16] %v64, 128
  %316 = vxpose.xlu0.b32.cont [12/16] %v65, 128
  %317 = vxpose.xlu0.b32.cont [13/16] %v66, 128
  %318 = vxpose.xlu0.b32.cont [14/16] %v67, 128
  %319 = vxpose.xlu0.b32.cont [15/16] %v68, 128
  %320 = vxpose.xlu0.b32.end [16/16] %v69, 128
  %v321 = vpop.trf.xlu0
  %v322 = vpop.trf.xlu0
  %v323 = vpop.trf.xlu0
  %v324 = vpop.trf.xlu0
  %v325 = vpop.trf.xlu0
  %v326 = vpop.trf.xlu0
  %v327 = vpop.trf.xlu0
  %v328 = vpop.trf.xlu0
  %v329 = vpop.trf.xlu0
  %v330 = vpop.trf.xlu0
  %v331 = vpop.trf.xlu0
  %v332 = vpop.trf.xlu0
  %v333 = vpop.trf.xlu0
  %v334 = vpop.trf.xlu0
  %v335 = vpop.trf.xlu0
  %v336 = vpop.trf.xlu0
  %337 = vxpose.xlu0.b32.start [1/16] %v70, 128
  %338 = vxpose.xlu0.b32.cont [2/16] %v71, 128
  %339 = vxpose.xlu0.b32.cont [3/16] %v72, 128
  %340 = vxpose.xlu0.b32.cont [4/16] %v73, 128
  %341 = vxpose.xlu0.b32.cont [5/16] %v74, 128
  %342 = vxpose.xlu0.b32.cont [6/16] %v75, 128
  %343 = vxpose.xlu0.b32.cont [7/16] %v76, 128
  %344 = vxpose.xlu0.b32.cont [8/16] %v77, 128
  %345 = vxpose.xlu0.b32.cont [9/16] %v78, 128
  %346 = vxpose.xlu0.b32.cont [10/16] %v79, 128
  %347 = vxpose.xlu0.b32.cont [11/16] %v80, 128
  %348 = vxpose.xlu0.b32.cont [12/16] %v81, 128
  %349 = vxpose.xlu0.b32.cont [13/16] %v82, 128
  %350 = vxpose.xlu0.b32.cont [14/16] %v83, 128
  %351 = vxpose.xlu0.b32.cont [15/16] %v84, 128
  %352 = vxpose.xlu0.b32.end [16/16] %v85, 128
  %v353 = vpop.trf.xlu0
  %v354 = vpop.trf.xlu0
  %v355 = vpop.trf.xlu0
  %v356 = vpop.trf.xlu0
  %v357 = vpop.trf.xlu0
  %v358 = vpop.trf.xlu0
  %v359 = vpop.trf.xlu0
  %v360 = vpop.trf.xlu0
  %v361 = vpop.trf.xlu0
  %v362 = vpop.trf.xlu0
  %v363 = vpop.trf.xlu0
  %v364 = vpop.trf.xlu0
  %v365 = vpop.trf.xlu0
  %v366 = vpop.trf.xlu0
  %v367 = vpop.trf.xlu0
  %v368 = vpop.trf.xlu0
  %369 = vmatprep.subr.mxu0 0.0
  %370 = vmatpush1.msra.mxu0 %v54
  %371 = vmatprep.subr.mxu0 0.0
  %372 = vmatpush1.msra.mxu0 %v55
  %373 = vmatprep.subr.mxu0 0.0
  %374 = vmatpush1.msra.mxu0 %v56
  %375 = vmatprep.subr.mxu0 0.0
  %376 = vmatpush1.msra.mxu0 %v57
  %377 = vmatprep.subr.mxu0 0.0
  %378 = vmatpush1.msra.mxu0 %v58
  %379 = vmatprep.subr.mxu0 0.0
  %380 = vmatpush1.msra.mxu0 %v59
  %381 = vmatprep.subr.mxu0 0.0
  %382 = vmatpush1.msra.mxu0 %v60
  %383 = vmatprep.subr.mxu0 0.0
  %384 = vmatpush1.msra.mxu0 %v61
  %385 = vmatprep.subr.mxu0 0.0
  %386 = vmatpush1.msra.mxu0 %v62
  %387 = vmatprep.subr.mxu0 0.0
  %388 = vmatpush1.msra.mxu0 %v63
  %389 = vmatprep.subr.mxu0 0.0
  %390 = vmatpush1.msra.mxu0 %v64
  %391 = vmatprep.subr.mxu0 0.0
  %392 = vmatpush1.msra.mxu0 %v65
  %393 = vmatprep.subr.mxu0 0.0
  %394 = vmatpush1.msra.mxu0 %v66
  %395 = vmatprep.subr.mxu0 0.0
  %396 = vmatpush1.msra.mxu0 %v67
  %397 = vmatprep.subr.mxu0 0.0
  %398 = vmatpush1.msra.mxu0 %v68
  %399 = vmatprep.subr.mxu0 0.0
  %400 = vmatpush1.msra.mxu0 %v69
  %401 = vmatprep.subr.mxu0 0.0
  %402 = vmatpush1.msra.mxu0 %v70
  %403 = vmatprep.subr.mxu0 0.0
  %404 = vmatpush1.msra.mxu0 %v71
  %405 = vmatprep.subr.mxu0 0.0
  %406 = vmatpush1.msra.mxu0 %v72
  %407 = vmatprep.subr.mxu0 0.0
  %408 = vmatpush1.msra.mxu0 %v73
  %409 = vmatprep.subr.mxu0 0.0
  %410 = vmatpush1.msra.mxu0 %v74
  %411 = vmatprep.subr.mxu0 0.0
  %412 = vmatpush1.msra.mxu0 %v75
  %413 = vmatprep.subr.mxu0 0.0
  %414 = vmatpush1.msra.mxu0 %v76
  %415 = vmatprep.subr.mxu0 0.0
  %416 = vmatpush1.msra.mxu0 %v77
  %417 = vmatprep.subr.mxu0 0.0
  %418 = vmatpush1.msra.mxu0 %v78
  %419 = vmatprep.subr.mxu0 0.0
  %420 = vmatpush1.msra.mxu0 %v79
  %421 = vmatprep.subr.mxu0 0.0
  %422 = vmatpush1.msra.mxu0 %v80
  %423 = vmatprep.subr.mxu0 0.0
  %424 = vmatpush1.msra.mxu0 %v81
  %425 = vmatprep.subr.mxu0 0.0
  %426 = vmatpush1.msra.mxu0 %v82
  %427 = vmatprep.subr.mxu0 0.0
  %428 = vmatpush1.msra.mxu0 %v83
  %429 = vmatprep.subr.mxu0 0.0
  %430 = vmatpush1.msra.mxu0 %v84
  %431 = vmatprep.subr.mxu0 0.0
  %432 = vmatpush1.msra.mxu0 %v85
  %433 = vmatprep.mubr.f32.mxu0 %v353
  %434 = vmatmul.mubr.f32.gmra.mrb[0].mxu0 %v321
  %v435 = vpop.f32.mrb[0].mxu0
  %v436 = vadd.f32 0.0, %v435
  %v437 = vpop.f32.mrb[0].mxu0
  %438 = vdwg.mxu0
  %v439 = vadd.f32 %v304, %v436
  %440 = vst.msk [vmem:[%s4] sm:$0xff] %vm87, %v439
  // Predicated region
  $region10: #{fast_hyde_forward.2} parent=0 // pred_check
    _
  $region11: #{fast_hyde_forward.2} parent=0 // pred_check_branch
    %442 = sbr.rel (0) target = $region13
  $region12: #{fast_hyde_forward.2} parent=0 // pred_region
    _
  $region13: #{fast_hyde_forward.2} parent=0 // pred_fallthru
    _
  // Predicated region
  $region14: #{fast_hyde_forward.2} parent=0 // pred_check
    _
  $region15: #{fast_hyde_forward.2} parent=0 // pred_check_branch
    %444 = sbr.rel (0) target = $region17
  $region16: #{fast_hyde_forward.2} parent=0 // pred_region
    _
  $region17: #{fast_hyde_forward.2} parent=0 // pred_fallthru
    _
  // Predicated region
  $region18: #{fast_hyde_forward.2} parent=0 // pred_check
    _
  $region19: #{fast_hyde_forward.2} parent=0 // pred_check_branch
    %446 = sbr.rel (0) target = $region21
  $region20: #{fast_hyde_forward.2} parent=0 // pred_region
    _
  $region21: #{fast_hyde_forward.2} parent=0 // pred_fallthru
    _
  // Predicated region
  $region22: #{fast_hyde_forward.2} parent=0 // pred_check
    _
  $region23: #{fast_hyde_forward.2} parent=0 // pred_check_branch
    %448 = sbr.rel (0) target = $region25
  $region24: #{fast_hyde_forward.2} parent=0 // pred_region
    _
  $region25: #{fast_hyde_forward.2} parent=0 // pred_fallthru
    _
  // Predicated region
  $region26: #{fast_hyde_forward.2} parent=0 // pred_check
    _
  $region27: #{fast_hyde_forward.2} parent=0 // pred_check_branch
    %450 = sbr.rel (0) target = $region29
  $region28: #{fast_hyde_forward.2} parent=0 // pred_region
    _
  $region29: #{fast_hyde_forward.2} parent=0 // pred_fallthru
    _
  // Predicated region
  $region30: #{fast_hyde_forward.2} parent=0 // pred_check
    _
  $region31: #{fast_hyde_forward.2} parent=0 // pred_check_branch
    %452 = sbr.rel (0) target = $region33
  $region32: #{fast_hyde_forward.2} parent=0 // pred_region
    _
  $region33: #{fast_hyde_forward.2} parent=0 // pred_fallthru
    _
  // Predicated region
  $region34: #{fast_hyde_forward.2} parent=0 // pred_check
    _
  $region35: #{fast_hyde_forward.2} parent=0 // pred_check_branch
    %454 = sbr.rel (0) target = $region37
  $region36: #{fast_hyde_forward.2} parent=0 // pred_region
    _
  $region37: #{fast_hyde_forward.2} parent=0 // pred_fallthru
    _
  // Predicated region
  $region38: #{fast_hyde_forward.2} parent=0 // pred_check
    _
  $region39: #{fast_hyde_forward.2} parent=0 // pred_check_branch
    %456 = sbr.rel (0) target = $region41
  $region40: #{fast_hyde_forward.2} parent=0 // pred_region
    _
  $region41: #{fast_hyde_forward.2} parent=0 // pred_fallthru
    _

// kernel: fast_hyde_forward.3
$region0: #{fast_hyde_forward.3}
  #allocation0 [shape = 'u32[]', space=smem, size = 0x4, offset = 0x4, fixed_abs, tag = 'smem constant byte address 0x4 - core index']
  #allocation1 [shape = 'u32[144,128]{1,0:T(1,128)}', space=vmem, size = 0x12000, scoped, tag = 'internal scratch']
  %s0 = inlined_call_operand.vmem [shape: f32[8,8], index: 0, kind: input, shape index: {}]
  %s1 = inlined_call_operand.vmem [shape: f32[1,8], index: 1, kind: input, shape index: {}]
  %s2 = inlined_call_operand.vmem [shape: f32[256,8], index: 2, kind: input, shape index: {}]
  %s3 = inlined_call_operand.vmem [shape: f32[256,8], index: 3, kind: output, shape index: {}]
  %s4 = sld [smem:[#allocation0]]
  $region22: #{fast_hyde_forward.3} parent=0
    _
  %s6 = ssub.s32 1, %s4
  %s7 = scalar_select 0, %s6, %s4
  // Predicated region
  $region2: #{fast_hyde_forward.3} parent=0 // pred_check
    _
  $region3: #{fast_hyde_forward.3} parent=0 // pred_check_branch
    %9 = sbr.rel (0) target = $region5
  $region4: #{fast_hyde_forward.3} parent=0 // pred_region
    _
  $region5: #{fast_hyde_forward.3} parent=0 // pred_fallthru
    _
  // Predicated region
  $region6: #{fast_hyde_forward.3} parent=0 // pred_check
    _
  $region7: #{fast_hyde_forward.3} parent=0 // pred_check_branch
    %11 = sbr.rel (0) target = $region9
  $region8: #{fast_hyde_forward.3} parent=0 // pred_region
    _
  $region9: #{fast_hyde_forward.3} parent=0 // pred_fallthru
    _
  // Predicated region
  $region10: #{fast_hyde_forward.3} parent=0 // pred_check
    _
  $region11: #{fast_hyde_forward.3} parent=0 // pred_check_branch
    %13 = sbr.rel (0) target = $region13
  $region12: #{fast_hyde_forward.3} parent=0 // pred_region
    _
  $region13: #{fast_hyde_forward.3} parent=0 // pred_fallthru
    _
  %v14 = vld [vmem:[%s2] sm:$0xff]
  %v15 = vld [vmem:[%s2 + $0x8] sm:$0xff]
  %v16 = vld [vmem:[%s2 + $0x10] sm:$0xff]
  %v17 = vld [vmem:[%s2 + $0x18] sm:$0xff]
  %v18 = vld [vmem:[%s2 + $0x20] sm:$0xff]
  %v19 = vld [vmem:[%s2 + $0x28] sm:$0xff]
  %v20 = vld [vmem:[%s2 + $0x30] sm:$0xff]
  %v21 = vld [vmem:[%s2 + $0x38] sm:$0xff]
  %v22 = vld [vmem:[%s2 + $0x40] sm:$0xff]
  %v23 = vld [vmem:[%s2 + $0x48] sm:$0xff]
  %v24 = vld [vmem:[%s2 + $0x50] sm:$0xff]
  %v25 = vld [vmem:[%s2 + $0x58] sm:$0xff]
  %v26 = vld [vmem:[%s2 + $0x60] sm:$0xff]
  %v27 = vld [vmem:[%s2 + $0x68] sm:$0xff]
  %v28 = vld [vmem:[%s2 + $0x70] sm:$0xff]
  %v29 = vld [vmem:[%s2 + $0x78] sm:$0xff]
  %v30 = vld [vmem:[%s2 + $0x80] sm:$0xff]
  %v31 = vld [vmem:[%s2 + $0x88] sm:$0xff]
  %v32 = vld [vmem:[%s2 + $0x90] sm:$0xff]
  %v33 = vld [vmem:[%s2 + $0x98] sm:$0xff]
  %v34 = vld [vmem:[%s2 + $0xa0] sm:$0xff]
  %v35 = vld [vmem:[%s2 + $0xa8] sm:$0xff]
  %v36 = vld [vmem:[%s2 + $0xb0] sm:$0xff]
  %v37 = vld [vmem:[%s2 + $0xb8] sm:$0xff]
  %v38 = vld [vmem:[%s2 + $0xc0] sm:$0xff]
  %v39 = vld [vmem:[%s2 + $0xc8] sm:$0xff]
  %v40 = vld [vmem:[%s2 + $0xd0] sm:$0xff]
  %v41 = vld [vmem:[%s2 + $0xd8] sm:$0xff]
  %v42 = vld [vmem:[%s2 + $0xe0] sm:$0xff]
  %v43 = vld [vmem:[%s2 + $0xe8] sm:$0xff]
  %v44 = vld [vmem:[%s2 + $0xf0] sm:$0xff]
  %v45 = vld [vmem:[%s2 + $0xf8] sm:$0xff]
  %v46 = vld [vmem:[%s0] sm:$0xff]
  %v47 = vld [vmem:[%s1] sm:$0x1]
  %v49 = vlaneseq
  %v50 = vshrl.u32 %v49, 7
  %v51 = vsub.s32 0, %v50
  %v52 = vrot.slane %v47, %v51
  %vm54 = vcmask 64512
  %v56 = vsel %vm54, %v14, 0
  %v59 = vsel %vm54, %v15, 0
  %v62 = vsel %vm54, %v16, 0
  %v65 = vsel %vm54, %v17, 0
  %v68 = vsel %vm54, %v18, 0
  %v71 = vsel %vm54, %v19, 0
  %v74 = vsel %vm54, %v20, 0
  %v77 = vsel %vm54, %v21, 0
  %v80 = vsel %vm54, %v22, 0
  %v83 = vsel %vm54, %v23, 0
  %v86 = vsel %vm54, %v24, 0
  %v89 = vsel %vm54, %v25, 0
  %v92 = vsel %vm54, %v26, 0
  %v95 = vsel %vm54, %v27, 0
  %v98 = vsel %vm54, %v28, 0
  %v101 = vsel %vm54, %v29, 0
  %v104 = vsel %vm54, %v30, 0
  %v107 = vsel %vm54, %v31, 0
  %v110 = vsel %vm54, %v32, 0
  %v113 = vsel %vm54, %v33, 0
  %v116 = vsel %vm54, %v34, 0
  %v119 = vsel %vm54, %v35, 0
  %v122 = vsel %vm54, %v36, 0
  %v125 = vsel %vm54, %v37, 0
  %v128 = vsel %vm54, %v38, 0
  %v131 = vsel %vm54, %v39, 0
  %v134 = vsel %vm54, %v40, 0
  %v137 = vsel %vm54, %v41, 0
  %v140 = vsel %vm54, %v42, 0
  %v143 = vsel %vm54, %v43, 0
  %v146 = vsel %vm54, %v44, 0
  %v149 = vsel %vm54, %v45, 0
  %151 = vmatprep.subr.mxu0 0.0
  %152 = vmatpush1.msra.mxu0 %v46
  %153 = vmatprep.subr.mxu0 0.0
  %154 = vmatpush1.msra.mxu0 0.0
  %155 = vmatprep.subr.mxu0 0.0
  %156 = vmatpush1.msra.mxu0 0.0
  %157 = vmatprep.subr.mxu0 0.0
  %158 = vmatpush1.msra.mxu0 0.0
  %159 = vmatprep.subr.mxu0 0.0
  %160 = vmatpush1.msra.mxu0 0.0
  %161 = vmatprep.subr.mxu0 0.0
  %162 = vmatpush1.msra.mxu0 0.0
  %163 = vmatprep.subr.mxu0 0.0
  %164 = vmatpush1.msra.mxu0 0.0
  %165 = vmatprep.subr.mxu0 0.0
  %166 = vmatpush1.msra.mxu0 0.0
  %167 = vmatprep.subr.mxu0 0.0
  %168 = vmatpush1.msra.mxu0 0.0
  %169 = vmatprep.subr.mxu0 0.0
  %170 = vmatpush1.msra.mxu0 0.0
  %171 = vmatprep.subr.mxu0 0.0
  %172 = vmatpush1.msra.mxu0 0.0
  %173 = vmatprep.subr.mxu0 0.0
  %174 = vmatpush1.msra.mxu0 0.0
  %175 = vmatprep.subr.mxu0 0.0
  %176 = vmatpush1.msra.mxu0 0.0
  %177 = vmatprep.subr.mxu0 0.0
  %178 = vmatpush1.msra.mxu0 0.0
  %179 = vmatprep.subr.mxu0 0.0
  %180 = vmatpush1.msra.mxu0 0.0
  %181 = vmatprep.subr.mxu0 0.0
  %182 = vmatpush1.msra.mxu0 0.0
  %183 = vmatprep.subr.mxu0 0.0
  %184 = vmatpush1.msra.mxu0 0.0
  %185 = vmatprep.subr.mxu0 0.0
  %186 = vmatpush1.msra.mxu0 0.0
  %187 = vmatprep.subr.mxu0 0.0
  %188 = vmatpush1.msra.mxu0 0.0
  %189 = vmatprep.subr.mxu0 0.0
  %190 = vmatpush1.msra.mxu0 0.0
  %191 = vmatprep.subr.mxu0 0.0
  %192 = vmatpush1.msra.mxu0 0.0
  %193 = vmatprep.subr.mxu0 0.0
  %194 = vmatpush1.msra.mxu0 0.0
  %195 = vmatprep.subr.mxu0 0.0
  %196 = vmatpush1.msra.mxu0 0.0
  %197 = vmatprep.subr.mxu0 0.0
  %198 = vmatpush1.msra.mxu0 0.0
  %199 = vmatprep.subr.mxu0 0.0
  %200 = vmatpush1.msra.mxu0 0.0
  %201 = vmatprep.subr.mxu0 0.0
  %202 = vmatpush1.msra.mxu0 0.0
  %203 = vmatprep.subr.mxu0 0.0
  %204 = vmatpush1.msra.mxu0 0.0
  %205 = vmatprep.subr.mxu0 0.0
  %206 = vmatpush1.msra.mxu0 0.0
  %207 = vmatprep.subr.mxu0 0.0
  %208 = vmatpush1.msra.mxu0 0.0
  %209 = vmatprep.subr.mxu0 0.0
  %210 = vmatpush1.msra.mxu0 0.0
  %211 = vmatprep.subr.mxu0 0.0
  %212 = vmatpush1.msra.mxu0 0.0
  %213 = vmatprep.subr.mxu0 0.0
  %214 = vmatpush1.msra.mxu0 0.0
  %215 = vmatprep.mubr.f32.mxu0 0.0
  %216 = vmatmul.mubr.f32.gmra.mrb[0].mxu0 %v56
  %v217 = vpop.f32.mrb[0].mxu0
  %v218 = vadd.f32 %v52, %v217
  %v219 = vpop.f32.mrb[0].mxu0
  %220 = vmatprep.mubr.f32.mxu0 0.0
  %221 = vmatmul.mubr.f32.gmra.mrb[0].mxu0 %v59
  %v222 = vpop.f32.mrb[0].mxu0
  %v223 = vadd.f32 %v52, %v222
  %v224 = vpop.f32.mrb[0].mxu0
  %225 = vmatprep.mubr.f32.mxu0 0.0
  %226 = vmatmul.mubr.f32.gmra.mrb[0].mxu0 %v62
  %v227 = vpop.f32.mrb[0].mxu0
  %v228 = vadd.f32 %v52, %v227
  %v229 = vpop.f32.mrb[0].mxu0
  %230 = vmatprep.mubr.f32.mxu0 0.0
  %231 = vmatmul.mubr.f32.gmra.mrb[0].mxu0 %v65
  %v232 = vpop.f32.mrb[0].mxu0
  %v233 = vadd.f32 %v52, %v232
  %v234 = vpop.f32.mrb[0].mxu0
  %235 = vmatprep.mubr.f32.mxu0 0.0
  %236 = vmatmul.mubr.f32.gmra.mrb[0].mxu0 %v68
  %v237 = vpop.f32.mrb[0].mxu0
  %v238 = vadd.f32 %v52, %v237
  %v239 = vpop.f32.mrb[0].mxu0
  %240 = vmatprep.mubr.f32.mxu0 0.0
  %241 = vmatmul.mubr.f32.gmra.mrb[0].mxu0 %v71
  %v242 = vpop.f32.mrb[0].mxu0
  %v243 = vadd.f32 %v52, %v242
  %v244 = vpop.f32.mrb[0].mxu0
  %245 = vmatprep.mubr.f32.mxu0 0.0
  %246 = vmatmul.mubr.f32.gmra.mrb[0].mxu0 %v74
  %v247 = vpop.f32.mrb[0].mxu0
  %v248 = vadd.f32 %v52, %v247
  %v249 = vpop.f32.mrb[0].mxu0
  %250 = vmatprep.mubr.f32.mxu0 0.0
  %251 = vmatmul.mubr.f32.gmra.mrb[0].mxu0 %v77
  %v252 = vpop.f32.mrb[0].mxu0
  %v253 = vadd.f32 %v52, %v252
  %v254 = vpop.f32.mrb[0].mxu0
  %255 = vmatprep.mubr.f32.mxu0 0.0
  %256 = vmatmul.mubr.f32.gmra.mrb[0].mxu0 %v80
  %v257 = vpop.f32.mrb[0].mxu0
  %v258 = vadd.f32 %v52, %v257
  %v259 = vpop.f32.mrb[0].mxu0
  %260 = vmatprep.mubr.f32.mxu0 0.0
  %261 = vmatmul.mubr.f32.gmra.mrb[0].mxu0 %v83
  %v262 = vpop.f32.mrb[0].mxu0
  %v263 = vadd.f32 %v52, %v262
  %v264 = vpop.f32.mrb[0].mxu0
  %265 = vmatprep.mubr.f32.mxu0 0.0
  %266 = vmatmul.mubr.f32.gmra.mrb[0].mxu0 %v86
  %v267 = vpop.f32.mrb[0].mxu0
  %v268 = vadd.f32 %v52, %v267
  %v269 = vpop.f32.mrb[0].mxu0
  %270 = vmatprep.mubr.f32.mxu0 0.0
  %271 = vmatmul.mubr.f32.gmra.mrb[0].mxu0 %v89
  %v272 = vpop.f32.mrb[0].mxu0
  %v273 = vadd.f32 %v52, %v272
  %v274 = vpop.f32.mrb[0].mxu0
  %275 = vmatprep.mubr.f32.mxu0 0.0
  %276 = vmatmul.mubr.f32.gmra.mrb[0].mxu0 %v92
  %v277 = vpop.f32.mrb[0].mxu0
  %v278 = vadd.f32 %v52, %v277
  %v279 = vpop.f32.mrb[0].mxu0
  %280 = vmatprep.mubr.f32.mxu0 0.0
  %281 = vmatmul.mubr.f32.gmra.mrb[0].mxu0 %v95
  %v282 = vpop.f32.mrb[0].mxu0
  %v283 = vadd.f32 %v52, %v282
  %v284 = vpop.f32.mrb[0].mxu0
  %285 = vmatprep.mubr.f32.mxu0 0.0
  %286 = vmatmul.mubr.f32.gmra.mrb[0].mxu0 %v98
  %v287 = vpop.f32.mrb[0].mxu0
  %v288 = vadd.f32 %v52, %v287
  %v289 = vpop.f32.mrb[0].mxu0
  %290 = vmatprep.mubr.f32.mxu0 0.0
  %291 = vmatmul.mubr.f32.gmra.mrb[0].mxu0 %v101
  %v292 = vpop.f32.mrb[0].mxu0
  %v293 = vadd.f32 %v52, %v292
  %v294 = vpop.f32.mrb[0].mxu0
  %295 = vmatprep.mubr.f32.mxu0 0.0
  %296 = vmatmul.mubr.f32.gmra.mrb[0].mxu0 %v104
  %v297 = vpop.f32.mrb[0].mxu0
  %v298 = vadd.f32 %v52, %v297
  %v299 = vpop.f32.mrb[0].mxu0
  %300 = vmatprep.mubr.f32.mxu0 0.0
  %301 = vmatmul.mubr.f32.gmra.mrb[0].mxu0 %v107
  %v302 = vpop.f32.mrb[0].mxu0
  %v303 = vadd.f32 %v52, %v302
  %v304 = vpop.f32.mrb[0].mxu0
  %305 = vmatprep.mubr.f32.mxu0 0.0
  %306 = vmatmul.mubr.f32.gmra.mrb[0].mxu0 %v110
  %v307 = vpop.f32.mrb[0].mxu0
  %v308 = vadd.f32 %v52, %v307
  %v309 = vpop.f32.mrb[0].mxu0
  %310 = vmatprep.mubr.f32.mxu0 0.0
  %311 = vmatmul.mubr.f32.gmra.mrb[0].mxu0 %v113
  %v312 = vpop.f32.mrb[0].mxu0
  %v313 = vadd.f32 %v52, %v312
  %v314 = vpop.f32.mrb[0].mxu0
  %315 = vmatprep.mubr.f32.mxu0 0.0
  %316 = vmatmul.mubr.f32.gmra.mrb[0].mxu0 %v116
  %v317 = vpop.f32.mrb[0].mxu0
  %v318 = vadd.f32 %v52, %v317
  %v319 = vpop.f32.mrb[0].mxu0
  %320 = vmatprep.mubr.f32.mxu0 0.0
  %321 = vmatmul.mubr.f32.gmra.mrb[0].mxu0 %v119
  %v322 = vpop.f32.mrb[0].mxu0
  %v323 = vadd.f32 %v52, %v322
  %v324 = vpop.f32.mrb[0].mxu0
  %325 = vmatprep.mubr.f32.mxu0 0.0
  %326 = vmatmul.mubr.f32.gmra.mrb[0].mxu0 %v122
  %v327 = vpop.f32.mrb[0].mxu0
  %v328 = vadd.f32 %v52, %v327
  %v329 = vpop.f32.mrb[0].mxu0
  %330 = vmatprep.mubr.f32.mxu0 0.0
  %331 = vmatmul.mubr.f32.gmra.mrb[0].mxu0 %v125
  %v332 = vpop.f32.mrb[0].mxu0
  %v333 = vadd.f32 %v52, %v332
  %v334 = vpop.f32.mrb[0].mxu0
  %335 = vmatprep.mubr.f32.mxu0 0.0
  %336 = vmatmul.mubr.f32.gmra.mrb[0].mxu0 %v128
  %v337 = vpop.f32.mrb[0].mxu0
  %v338 = vadd.f32 %v52, %v337
  %v339 = vpop.f32.mrb[0].mxu0
  %340 = vmatprep.mubr.f32.mxu0 0.0
  %341 = vmatmul.mubr.f32.gmra.mrb[0].mxu0 %v131
  %v342 = vpop.f32.mrb[0].mxu0
  %v343 = vadd.f32 %v52, %v342
  %v344 = vpop.f32.mrb[0].mxu0
  %345 = vmatprep.mubr.f32.mxu0 0.0
  %346 = vmatmul.mubr.f32.gmra.mrb[0].mxu0 %v134
  %v347 = vpop.f32.mrb[0].mxu0
  %v348 = vadd.f32 %v52, %v347
  %v349 = vpop.f32.mrb[0].mxu0
  %350 = vmatprep.mubr.f32.mxu0 0.0
  %351 = vmatmul.mubr.f32.gmra.mrb[0].mxu0 %v137
  %v352 = vpop.f32.mrb[0].mxu0
  %v353 = vadd.f32 %v52, %v352
  %v354 = vpop.f32.mrb[0].mxu0
  %355 = vmatprep.mubr.f32.mxu0 0.0
  %356 = vmatmul.mubr.f32.gmra.mrb[0].mxu0 %v140
  %v357 = vpop.f32.mrb[0].mxu0
  %v358 = vadd.f32 %v52, %v357
  %v359 = vpop.f32.mrb[0].mxu0
  %360 = vmatprep.mubr.f32.mxu0 0.0
  %361 = vmatmul.mubr.f32.gmra.mrb[0].mxu0 %v143
  %v362 = vpop.f32.mrb[0].mxu0
  %v363 = vadd.f32 %v52, %v362
  %v364 = vpop.f32.mrb[0].mxu0
  %365 = vmatprep.mubr.f32.mxu0 0.0
  %366 = vmatmul.mubr.f32.gmra.mrb[0].mxu0 %v146
  %v367 = vpop.f32.mrb[0].mxu0
  %v368 = vadd.f32 %v52, %v367
  %v369 = vpop.f32.mrb[0].mxu0
  %370 = vmatprep.mubr.f32.mxu0 0.0
  %371 = vmatmul.mubr.f32.gmra.mrb[0].mxu0 %v149
  %v372 = vpop.f32.mrb[0].mxu0
  %v373 = vadd.f32 %v52, %v372
  %v374 = vpop.f32.mrb[0].mxu0
  %375 = vdwg.mxu0
  %376 = vst.msk [vmem:[%s3] sm:$0xff] %vm54, %v218
  %377 = vst.msk [vmem:[%s3 + $0x8] sm:$0xff] %vm54, %v223
  %378 = vst.msk [vmem:[%s3 + $0x10] sm:$0xff] %vm54, %v228
  %379 = vst.msk [vmem:[%s3 + $0x18] sm:$0xff] %vm54, %v233
  %380 = vst.msk [vmem:[%s3 + $0x20] sm:$0xff] %vm54, %v238
  %381 = vst.msk [vmem:[%s3 + $0x28] sm:$0xff] %vm54, %v243
  %382 = vst.msk [vmem:[%s3 + $0x30] sm:$0xff] %vm54, %v248
  %383 = vst.msk [vmem:[%s3 + $0x38] sm:$0xff] %vm54, %v253
  %384 = vst.msk [vmem:[%s3 + $0x40] sm:$0xff] %vm54, %v258
  %385 = vst.msk [vmem:[%s3 + $0x48] sm:$0xff] %vm54, %v263
  %386 = vst.msk [vmem:[%s3 + $0x50] sm:$0xff] %vm54, %v268
  %387 = vst.msk [vmem:[%s3 + $0x58] sm:$0xff] %vm54, %v273
  %388 = vst.msk [vmem:[%s3 + $0x60] sm:$0xff] %vm54, %v278
  %389 = vst.msk [vmem:[%s3 + $0x68] sm:$0xff] %vm54, %v283
  %390 = vst.msk [vmem:[%s3 + $0x70] sm:$0xff] %vm54, %v288
  %391 = vst.msk [vmem:[%s3 + $0x78] sm:$0xff] %vm54, %v293
  %392 = vst.msk [vmem:[%s3 + $0x80] sm:$0xff] %vm54, %v298
  %393 = vst.msk [vmem:[%s3 + $0x88] sm:$0xff] %vm54, %v303
  %394 = vst.msk [vmem:[%s3 + $0x90] sm:$0xff] %vm54, %v308
  %395 = vst.msk [vmem:[%s3 + $0x98] sm:$0xff] %vm54, %v313
  %396 = vst.msk [vmem:[%s3 + $0xa0] sm:$0xff] %vm54, %v318
  %397 = vst.msk [vmem:[%s3 + $0xa8] sm:$0xff] %vm54, %v323
  %398 = vst.msk [vmem:[%s3 + $0xb0] sm:$0xff] %vm54, %v328
  %399 = vst.msk [vmem:[%s3 + $0xb8] sm:$0xff] %vm54, %v333
  %400 = vst.msk [vmem:[%s3 + $0xc0] sm:$0xff] %vm54, %v338
  %401 = vst.msk [vmem:[%s3 + $0xc8] sm:$0xff] %vm54, %v343
  %402 = vst.msk [vmem:[%s3 + $0xd0] sm:$0xff] %vm54, %v348
  %403 = vst.msk [vmem:[%s3 + $0xd8] sm:$0xff] %vm54, %v353
  %404 = vst.msk [vmem:[%s3 + $0xe0] sm:$0xff] %vm54, %v358
  %405 = vst.msk [vmem:[%s3 + $0xe8] sm:$0xff] %vm54, %v363
  %406 = vst.msk [vmem:[%s3 + $0xf0] sm:$0xff] %vm54, %v368
  %407 = vst.msk [vmem:[%s3 + $0xf8] sm:$0xff] %vm54, %v373
  // Predicated region
  $region14: #{fast_hyde_forward.3} parent=0 // pred_check
    _
  $region15: #{fast_hyde_forward.3} parent=0 // pred_check_branch
    %409 = sbr.rel (0) target = $region17
  $region16: #{fast_hyde_forward.3} parent=0 // pred_region
    _
  $region17: #{fast_hyde_forward.3} parent=0 // pred_fallthru
    _
  // Predicated region
  $region18: #{fast_hyde_forward.3} parent=0 // pred_check
    _
  $region19: #{fast_hyde_forward.3} parent=0 // pred_check_branch
    %411 = sbr.rel (0) target = $region21
  $region20: #{fast_hyde_forward.3} parent=0 // pred_region
    _
  $region21: #{fast_hyde_forward.3} parent=0 // pred_fallthru
    _

</llo_original>
